<compile_context>
chip_gen: v6e
topology: v6e:2x2x1
jax: 0.10.0
libtpu: 0.0.40
codegen_flags: <defaults>
</compile_context>

<pallas_src>
import functools
import math

import jax
import jax.numpy as jnp
from jax.experimental import pallas as pl
from jax.experimental.pallas import tpu as pltpu


# ----------------------------- in-kernel helpers -----------------------------

def _layer_norm(x, w, b, eps):
    # x: (M, E) f32; w, b: (1, E) f32
    mu = jnp.mean(x, axis=-1, keepdims=True)
    xc = x - mu
    var = jnp.mean(xc * xc, axis=-1, keepdims=True)
    return xc * jax.lax.rsqrt(var + eps) * w + b


def _mha(q_src, q_base, kv_src, k_base, v_base, out_wt_h, out_b, mask,
         *, nhead, dh, bblk, tq, sk):
    """Multi-head attention on a batch block.

    q_src : (bblk*tq, >=E) f32 slab holding q columns at offset q_base
    kv_src: (bblk*sk, >=E) f32 slab holding k/v columns at offsets k_base / v_base
    out_wt_h: (H, dh, E) bf16 output-projection weight (head merge folded into MXU)
    out_b : (1, E) f32
    mask  : optional (tq, sk) f32 additive mask (broadcast over batch & heads)
    Softmax scale is already folded into the q projection weights (host-side).
    """
    e = nhead * dh
    m = bblk * tq
    acc = jnp.zeros((m, e), jnp.float32)
    for h in range(nhead):       # static python loop over heads; no concatenates
        q0 = q_base + h * dh
        k0 = k_base + h * dh
        v0 = v_base + h * dh
        qh = q_src[:, q0:q0 + dh].reshape(bblk, tq, dh).astype(jnp.bfloat16)
        kh = kv_src[:, k0:k0 + dh].reshape(bblk, sk, dh).astype(jnp.bfloat16)
        vh = kv_src[:, v0:v0 + dh].reshape(bblk, sk, dh).astype(jnp.bfloat16)
        # batched-over-batch MXU contractions, f32 scores
        s = jnp.einsum('btd,bsd->bts', qh, kh, preferred_element_type=jnp.float32)
        if mask is not None:
            s = s + mask
        s = s - jnp.max(s, axis=-1, keepdims=True)
        p = jnp.exp(s)
        p = p * pl.reciprocal(jnp.sum(p, axis=-1, keepdims=True), approx=True)
        ctx = jnp.einsum('bts,bsd->btd', p.astype(jnp.bfloat16), vh,
                         preferred_element_type=jnp.float32)
        # head merge folded into the output projection (per-head MXU accumulation)
        acc = acc + jnp.dot(ctx.reshape(m, dh).astype(jnp.bfloat16), out_wt_h[h],
                            preferred_element_type=jnp.float32)
    return acc + out_b


# ------------------------------- encoder kernel -------------------------------

def _encoder_kernel(*refs, nhead, dh, eps, has_mask, bblk, seq):
    if has_mask:
        mask_ref, refs = refs[0], refs[1:]
    else:
        mask_ref = None
    (x_ref,
     in_wt_ref, in_b_ref, out_wt_ref, out_b_ref,
     lin1_wt_ref, lin1_b_ref, lin2_wt_ref, lin2_b_ref,
     ln1_w_ref, ln1_b_ref, ln2_w_ref, ln2_b_ref,
     fn_w_ref, fn_b_ref,
     o_ref, x_scr) = refs

    l = pl.program_id(1)
    e = nhead * dh
    m = bblk * seq

    @pl.when(l == 0)
    def _():
        x_scr[...] = x_ref[...].reshape(m, e).astype(jnp.float32)

    x = x_scr[...]                               # (M, E) f32, resident across layers
    mask = mask_ref[...] if has_mask else None

    # ---- self-attention (pre-norm): x += SA(LN1(x)) ----
    hn = _layer_norm(x, ln1_w_ref[0], ln1_b_ref[0], eps).astype(jnp.bfloat16)
    qkv = jnp.dot(hn, in_wt_ref[0], preferred_element_type=jnp.float32) + in_b_ref[0]
    x = x + _mha(qkv, 0, qkv, e, 2 * e, out_wt_ref[0], out_b_ref[0], mask,
                 nhead=nhead, dh=dh, bblk=bblk, tq=seq, sk=seq)

    # ---- feed-forward (pre-norm): x += FF(LN2(x)) ----
    hn = _layer_norm(x, ln2_w_ref[0], ln2_b_ref[0], eps).astype(jnp.bfloat16)
    h1 = jnp.maximum(
        jnp.dot(hn, lin1_wt_ref[0], preferred_element_type=jnp.float32) + lin1_b_ref[0],
        0.0).astype(jnp.bfloat16)
    x = x + jnp.dot(h1, lin2_wt_ref[0], preferred_element_type=jnp.float32) + lin2_b_ref[0]

    x_scr[...] = x

    @pl.when(l == pl.num_programs(1) - 1)
    def _():
        o = _layer_norm(x, fn_w_ref[...], fn_b_ref[...], eps)
        o_ref[...] = o.reshape(bblk, seq, e).astype(o_ref.dtype)


# ------------------------------- decoder kernel -------------------------------

def _decoder_kernel(*refs, nhead, dh, eps, has_tmask, has_mmask, bblk, tlen, slen):
    tmask_ref = mmask_ref = None
    if has_tmask:
        tmask_ref, refs = refs[0], refs[1:]
    if has_mmask:
        mmask_ref, refs = refs[0], refs[1:]
    (tgt_ref, mem_ref,
     sa_in_wt_ref, sa_in_b_ref, sa_out_wt_ref, sa_out_b_ref,
     ca_q_wt_ref, ca_q_b_ref, ca_kv_wt_ref, ca_kv_b_ref, ca_out_wt_ref, ca_out_b_ref,
     lin1_wt_ref, lin1_b_ref, lin2_wt_ref, lin2_b_ref,
     ln1_w_ref, ln1_b_ref, ln2_w_ref, ln2_b_ref, ln3_w_ref, ln3_b_ref,
     fn_w_ref, fn_b_ref,
     o_ref, x_scr, mem_scr) = refs

    l = pl.program_id(1)
    e = nhead * dh
    mt = bblk * tlen
    ms = bblk * slen

    @pl.when(l == 0)
    def _():
        x_scr[...] = tgt_ref[...].reshape(mt, e).astype(jnp.float32)
        mem_scr[...] = mem_ref[...].reshape(ms, e).astype(jnp.bfloat16)

    x = x_scr[...]                               # (Mt, E) f32, resident across layers
    mem_b = mem_scr[...]                         # (Ms, E) bf16, cast once at l == 0
    tmask = tmask_ref[...] if has_tmask else None
    mmask = mmask_ref[...] if has_mmask else None

    # ---- self-attention: x += SA(LN1(x), tgt_mask) ----
    hn = _layer_norm(x, ln1_w_ref[0], ln1_b_ref[0], eps).astype(jnp.bfloat16)
    qkv = jnp.dot(hn, sa_in_wt_ref[0], preferred_element_type=jnp.float32) + sa_in_b_ref[0]
    x = x + _mha(qkv, 0, qkv, e, 2 * e, sa_out_wt_ref[0], sa_out_b_ref[0], tmask,
                 nhead=nhead, dh=dh, bblk=bblk, tq=tlen, sk=tlen)

    # ---- cross-attention: x += MHA(LN2(x), memory, memory_mask) ----
    hn = _layer_norm(x, ln2_w_ref[0], ln2_b_ref[0], eps).astype(jnp.bfloat16)
    q = jnp.dot(hn, ca_q_wt_ref[0], preferred_element_type=jnp.float32) + ca_q_b_ref[0]
    kv = jnp.dot(mem_b, ca_kv_wt_ref[0], preferred_element_type=jnp.float32) + ca_kv_b_ref[0]
    x = x + _mha(q, 0, kv, 0, e, ca_out_wt_ref[0], ca_out_b_ref[0], mmask,
                 nhead=nhead, dh=dh, bblk=bblk, tq=tlen, sk=slen)

    # ---- feed-forward: x += FF(LN3(x)) ----
    hn = _layer_norm(x, ln3_w_ref[0], ln3_b_ref[0], eps).astype(jnp.bfloat16)
    h1 = jnp.maximum(
        jnp.dot(hn, lin1_wt_ref[0], preferred_element_type=jnp.float32) + lin1_b_ref[0],
        0.0).astype(jnp.bfloat16)
    x = x + jnp.dot(h1, lin2_wt_ref[0], preferred_element_type=jnp.float32) + lin2_b_ref[0]

    x_scr[...] = x

    @pl.when(l == pl.num_programs(1) - 1)
    def _():
        o = _layer_norm(x, fn_w_ref[...], fn_b_ref[...], eps)
        o_ref[...] = o.reshape(bblk, tlen, e).astype(o_ref.dtype)


# -------------------- host-side parameter preparation (once) ------------------

def prepare_encoder_params(p, nhead):
    """Transpose / reshape / bf16-cast encoder weights once (not per forward)."""
    L, _, E = p['in_w'].shape
    F = p['lin1_w'].shape[1]
    dh = E // nhead
    scale = 1.0 / math.sqrt(dh)
    # fold 1/sqrt(dh) softmax scale into the q projection rows (zero in-kernel cost)
    in_w = p['in_w'].astype(jnp.float32).at[:, :E, :].multiply(scale)
    in_b = p['in_b'].astype(jnp.float32).at[:, :E].multiply(scale)
    bf = jnp.bfloat16
    f32 = jnp.float32
    return dict(
        in_wt=jnp.transpose(in_w, (0, 2, 1)).astype(bf),                     # (L, E, 3E)
        in_b=in_b.reshape(L, 1, 3 * E),
        out_wt_h=jnp.transpose(p['out_w'], (0, 2, 1))
                 .reshape(L, nhead, dh, E).astype(bf),                       # (L, H, dh, E)
        out_b=p['out_b'].reshape(L, 1, E).astype(f32),
        lin1_wt=jnp.transpose(p['lin1_w'], (0, 2, 1)).astype(bf),            # (L, E, F)
        lin1_b=p['lin1_b'].reshape(L, 1, F).astype(f32),
        lin2_wt=jnp.transpose(p['lin2_w'], (0, 2, 1)).astype(bf),            # (L, F, E)
        lin2_b=p['lin2_b'].reshape(L, 1, E).astype(f32),
        ln1_w=p['ln1_w'].reshape(L, 1, E).astype(f32),
        ln1_b=p['ln1_b'].reshape(L, 1, E).astype(f32),
        ln2_w=p['ln2_w'].reshape(L, 1, E).astype(f32),
        ln2_b=p['ln2_b'].reshape(L, 1, E).astype(f32),
        norm_w=p['norm_w'].reshape(1, E).astype(f32),
        norm_b=p['norm_b'].reshape(1, E).astype(f32),
    )


def prepare_decoder_params(p, nhead):
    """Transpose / reshape / bf16-cast decoder weights once (not per forward)."""
    L, _, E = p['sa_in_w'].shape
    F = p['lin1_w'].shape[1]
    dh = E // nhead
    scale = 1.0 / math.sqrt(dh)
    sa_in_w = p['sa_in_w'].astype(jnp.float32).at[:, :E, :].multiply(scale)
    sa_in_b = p['sa_in_b'].astype(jnp.float32).at[:, :E].multiply(scale)
    ca_q_w = p['ca_in_w'][:, :E, :].astype(jnp.float32) * scale
    ca_q_b = p['ca_in_b'][:, :E].astype(jnp.float32) * scale
    bf = jnp.bfloat16
    f32 = jnp.float32
    return dict(
        sa_in_wt=jnp.transpose(sa_in_w, (0, 2, 1)).astype(bf),               # (L, E, 3E)
        sa_in_b=sa_in_b.reshape(L, 1, 3 * E),
        sa_out_wt_h=jnp.transpose(p['sa_out_w'], (0, 2, 1))
                    .reshape(L, nhead, dh, E).astype(bf),
        sa_out_b=p['sa_out_b'].reshape(L, 1, E).astype(f32),
        ca_q_wt=jnp.transpose(ca_q_w, (0, 2, 1)).astype(bf),                 # (L, E, E)
        ca_q_b=ca_q_b.reshape(L, 1, E),
        ca_kv_wt=jnp.transpose(p['ca_in_w'][:, E:, :], (0, 2, 1)).astype(bf),  # (L, E, 2E)
        ca_kv_b=p['ca_in_b'][:, E:].reshape(L, 1, 2 * E).astype(f32),
        ca_out_wt_h=jnp.transpose(p['ca_out_w'], (0, 2, 1))
                    .reshape(L, nhead, dh, E).astype(bf),
        ca_out_b=p['ca_out_b'].reshape(L, 1, E).astype(f32),
        lin1_wt=jnp.transpose(p['lin1_w'], (0, 2, 1)).astype(bf),
        lin1_b=p['lin1_b'].reshape(L, 1, F).astype(f32),
        lin2_wt=jnp.transpose(p['lin2_w'], (0, 2, 1)).astype(bf),
        lin2_b=p['lin2_b'].reshape(L, 1, E).astype(f32),
        ln1_w=p['ln1_w'].reshape(L, 1, E).astype(f32),
        ln1_b=p['ln1_b'].reshape(L, 1, E).astype(f32),
        ln2_w=p['ln2_w'].reshape(L, 1, E).astype(f32),
        ln2_b=p['ln2_b'].reshape(L, 1, E).astype(f32),
        ln3_w=p['ln3_w'].reshape(L, 1, E).astype(f32),
        ln3_b=p['ln3_b'].reshape(L, 1, E).astype(f32),
        norm_w=p['norm_w'].reshape(1, E).astype(f32),
        norm_b=p['norm_b'].reshape(1, E).astype(f32),
    )


# --------------------------------- wrappers -----------------------------------

def _vmem_limit(items, out_block_bytes, scratch_bytes):
    blk_bytes = sum(math.prod(bs) * a.dtype.itemsize for a, bs, _ in items)
    need = 2 * blk_bytes + 2 * out_block_bytes + scratch_bytes + (8 << 20)
    # clamp with headroom below v7x's 64 MiB per-TC VMEM (v5e/v6e have 128 MiB)
    return int(min(max(need, 16 << 20), 48 << 20))


def _encoder_stack(src, ep, *, nhead, eps, src_mask, b_block=None):
    B, S, E = src.shape
    L = ep['in_wt'].shape[0]
    dh = E // nhead
    if b_block is None:
        b_block = B
    assert B % b_block == 0, "b_block must divide batch size"
    nb = B // b_block

    has_mask = src_mask is not None
    batch_map = lambda b, l: (b, 0, 0)
    layer3_map = lambda b, l: (l, 0, 0)
    layer4_map = lambda b, l: (l, 0, 0, 0)
    const2_map = lambda b, l: (0, 0)

    items = []
    if has_mask:
        m = src_mask.astype(jnp.float32)
        items.append((m, m.shape, const2_map))
    items.append((src, (b_block, S, E), batch_map))
    layer_names = ('in_wt', 'in_b', 'out_wt_h', 'out_b',
                   'lin1_wt', 'lin1_b', 'lin2_wt', 'lin2_b',
                   'ln1_w', 'ln1_b', 'ln2_w', 'ln2_b')
    for name in layer_names:
        a = ep[name]
        imap = layer4_map if a.ndim == 4 else layer3_map
        items.append((a, (1,) + a.shape[1:], imap))
    for name in ('norm_w', 'norm_b'):
        items.append((ep[name], ep[name].shape, const2_map))

    arrays = [a for a, _, _ in items]
    in_specs = [pl.BlockSpec(bs, im) for _, bs, im in items]
    out_bytes = b_block * S * E * src.dtype.itemsize
    scratch_bytes = b_block * S * E * 4

    kernel = functools.partial(_encoder_kernel, nhead=nhead, dh=dh, eps=eps,
                               has_mask=has_mask, bblk=b_block, seq=S)
    return pl.pallas_call(
        kernel,
        out_shape=jax.ShapeDtypeStruct((B, S, E), src.dtype),
        grid=(nb, L),
        in_specs=in_specs,
        out_specs=pl.BlockSpec((b_block, S, E), batch_map),
        scratch_shapes=[pltpu.VMEM((b_block * S, E), jnp.float32)],
        compiler_params=pltpu.CompilerParams(
            dimension_semantics=("parallel", "arbitrary"),
            vmem_limit_bytes=_vmem_limit(items, out_bytes, scratch_bytes)),
    )(*arrays)


def _decoder_stack(tgt, memory, dp, *, nhead, eps, tgt_mask, memory_mask, b_block=None):
    B, T, E = tgt.shape
    S = memory.shape[1]
    L = dp['sa_in_wt'].shape[0]
    dh = E // nhead
    if b_block is None:
        b_block = B
    assert B % b_block == 0, "b_block must divide batch size"
    nb = B // b_block

    has_tmask = tgt_mask is not None
    has_mmask = memory_mask is not None
    batch_map = lambda b, l: (b, 0, 0)
    layer3_map = lambda b, l: (l, 0, 0)
    layer4_map = lambda b, l: (l, 0, 0, 0)
    const2_map = lambda b, l: (0, 0)

    items = []
    if has_tmask:
        m = tgt_mask.astype(jnp.float32)
        items.append((m, m.shape, const2_map))
    if has_mmask:
        m = memory_mask.astype(jnp.float32)
        items.append((m, m.shape, const2_map))
    items.append((tgt, (b_block, T, E), batch_map))
    items.append((memory, (b_block, S, E), batch_map))
    layer_names = ('sa_in_wt', 'sa_in_b', 'sa_out_wt_h', 'sa_out_b',
                   'ca_q_wt', 'ca_q_b', 'ca_kv_wt', 'ca_kv_b', 'ca_out_wt_h', 'ca_out_b',
                   'lin1_wt', 'lin1_b', 'lin2_wt', 'lin2_b',
                   'ln1_w', 'ln1_b', 'ln2_w', 'ln2_b', 'ln3_w', 'ln3_b')
    for name in layer_names:
        a = dp[name]
        imap = layer4_map if a.ndim == 4 else layer3_map
        items.append((a, (1,) + a.shape[1:], imap))
    for name in ('norm_w', 'norm_b'):
        items.append((dp[name], dp[name].shape, const2_map))

    arrays = [a for a, _, _ in items]
    in_specs = [pl.BlockSpec(bs, im) for _, bs, im in items]
    out_bytes = b_block * T * E * tgt.dtype.itemsize
    scratch_bytes = b_block * T * E * 4 + b_block * S * E * 2

    kernel = functools.partial(_decoder_kernel, nhead=nhead, dh=dh, eps=eps,
                               has_tmask=has_tmask, has_mmask=has_mmask,
                               bblk=b_block, tlen=T, slen=S)
    return pl.pallas_call(
        kernel,
        out_shape=jax.ShapeDtypeStruct((B, T, E), tgt.dtype),
        grid=(nb, L),
        in_specs=in_specs,
        out_specs=pl.BlockSpec((b_block, T, E), batch_map),
        scratch_shapes=[pltpu.VMEM((b_block * T, E), jnp.float32),
                        pltpu.VMEM((b_block * S, E), jnp.bfloat16)],
        compiler_params=pltpu.CompilerParams(
            dimension_semantics=("parallel", "arbitrary"),
            vmem_limit_bytes=_vmem_limit(items, out_bytes, scratch_bytes)),
    )(*arrays)


def transformer_forward(src, tgt, enc_prep, dec_prep, *, nhead, eps=1e-5,
                        src_mask=None, tgt_mask=None, memory_mask=None, b_block=None):
    memory = _encoder_stack(src, enc_prep, nhead=nhead, eps=eps,
                            src_mask=src_mask, b_block=b_block)
    return _decoder_stack(tgt, memory, dec_prep, nhead=nhead, eps=eps,
                          tgt_mask=tgt_mask, memory_mask=memory_mask, b_block=b_block)


# -------------------------------- JAX reference --------------------------------

def transformer_reference(src, tgt, enc_p, dec_p, *, nhead, eps=1e-5,
                          src_mask=None, tgt_mask=None, memory_mask=None):
    def ln(x, w, b):
        mu = x.mean(-1, keepdims=True)
        var = ((x - mu) ** 2).mean(-1, keepdims=True)
        return (x - mu) * jax.lax.rsqrt(var + eps) * w + b

    def mha(q_in, kv_in, in_w, in_b, out_w, out_b, mask):
        B, Tq, E = q_in.shape
        Sk = kv_in.shape[1]
        dh = E // nhead
        wq, wk, wv = in_w[:E], in_w[E:2 * E], in_w[2 * E:]
        bq, bk, bv = in_b[:E], in_b[E:2 * E], in_b[2 * E:]
        q = q_in @ wq.T + bq
        k = kv_in @ wk.T + bk
        v = kv_in @ wv.T + bv
        qh = q.reshape(B, Tq, nhead, dh).transpose(0, 2, 1, 3)
        kh = k.reshape(B, Sk, nhead, dh).transpose(0, 2, 1, 3)
        vh = v.reshape(B, Sk, nhead, dh).transpose(0, 2, 1, 3)
        s = qh @ kh.transpose(0, 1, 3, 2) / math.sqrt(dh)
        if mask is not None:
            s = s + mask
        p = jax.nn.softmax(s, axis=-1)
        ctx = (p @ vh).transpose(0, 2, 1, 3).reshape(B, Tq, E)
        return ctx @ out_w.T + out_b

    x = src
    for l in range(enc_p['in_w'].shape[0]):
        h = ln(x, enc_p['ln1_w'][l], enc_p['ln1_b'][l])
        x = x + mha(h, h, enc_p['in_w'][l], enc_p['in_b'][l],
                    enc_p['out_w'][l], enc_p['out_b'][l], src_mask)
        h = ln(x, enc_p['ln2_w'][l], enc_p['ln2_b'][l])
        x = x + jax.nn.relu(h @ enc_p['lin1_w'][l].T + enc_p['lin1_b'][l]) \
            @ enc_p['lin2_w'][l].T + enc_p['lin2_b'][l]
    memory = ln(x, enc_p['norm_w'], enc_p['norm_b'])

    x = tgt
    for l in range(dec_p['sa_in_w'].shape[0]):
        h = ln(x, dec_p['ln1_w'][l], dec_p['ln1_b'][l])
        x = x + mha(h, h, dec_p['sa_in_w'][l], dec_p['sa_in_b'][l],
                    dec_p['sa_out_w'][l], dec_p['sa_out_b'][l], tgt_mask)
        h = ln(x, dec_p['ln2_w'][l], dec_p['ln2_b'][l])
        x = x + mha(h, memory, dec_p['ca_in_w'][l], dec_p['ca_in_b'][l],
                    dec_p['ca_out_w'][l], dec_p['ca_out_b'][l], memory_mask)
        h = ln(x, dec_p['ln3_w'][l], dec_p['ln3_b'][l])
        x = x + jax.nn.relu(h @ dec_p['lin1_w'][l].T + dec_p['lin1_b'][l]) \
            @ dec_p['lin2_w'][l].T + dec_p['lin2_b'][l]
    return ln(x, dec_p['norm_w'], dec_p['norm_b'])


# ----------------------------------- params ------------------------------------

def make_encoder_params(key, L, E, F):
    ks = jax.random.split(key, 14)
    s = 0.05
    nrm = lambda k, shape: s * jax.random.normal(k, shape, jnp.float32)
    return dict(
        in_w=nrm(ks[0], (L, 3 * E, E)), in_b=nrm(ks[1], (L, 3 * E)),
        out_w=nrm(ks[2], (L, E, E)), out_b=nrm(ks[3], (L, E)),
        lin1_w=nrm(ks[4], (L, F, E)), lin1_b=nrm(ks[5], (L, F)),
        lin2_w=nrm(ks[6], (L, E, F)), lin2_b=nrm(ks[7], (L, E)),
        ln1_w=1.0 + nrm(ks[8], (L, E)), ln1_b=nrm(ks[9], (L, E)),
        ln2_w=1.0 + nrm(ks[10], (L, E)), ln2_b=nrm(ks[11], (L, E)),
        norm_w=1.0 + nrm(ks[12], (E,)), norm_b=nrm(ks[13], (E,)),
    )


def make_decoder_params(key, L, E, F):
    ks = jax.random.split(key, 20)
    s = 0.05
    nrm = lambda k, shape: s * jax.random.normal(k, shape, jnp.float32)
    return dict(
        sa_in_w=nrm(ks[0], (L, 3 * E, E)), sa_in_b=nrm(ks[1], (L, 3 * E)),
        sa_out_w=nrm(ks[2], (L, E, E)), sa_out_b=nrm(ks[3], (L, E)),
        ca_in_w=nrm(ks[4], (L, 3 * E, E)), ca_in_b=nrm(ks[5], (L, 3 * E)),
        ca_out_w=nrm(ks[6], (L, E, E)), ca_out_b=nrm(ks[7], (L, E)),
        lin1_w=nrm(ks[8], (L, F, E)), lin1_b=nrm(ks[9], (L, F)),
        lin2_w=nrm(ks[10], (L, E, F)), lin2_b=nrm(ks[11], (L, E)),
        ln1_w=1.0 + nrm(ks[12], (L, E)), ln1_b=nrm(ks[13], (L, E)),
        ln2_w=1.0 + nrm(ks[14], (L, E)), ln2_b=nrm(ks[15], (L, E)),
        ln3_w=1.0 + nrm(ks[16], (L, E)), ln3_b=nrm(ks[17], (L, E)),
        norm_w=1.0 + nrm(ks[18], (E,)), norm_b=nrm(ks[19], (E,)),
    )


# ------------------------------------ main --------------------------------------

if __name__ == "__main__":
    B = 2          # batch (N)
    S = 16         # source sequence length
    T = 8          # target sequence length
    E = 32         # d_model
    F = 64         # dim_feedforward
    nhead = 4
    num_encoder_layers = 2
    num_decoder_layers = 2

    key = jax.random.PRNGKey(0)
    k_src, k_tgt, k_enc, k_dec = jax.random.split(key, 4)
    src = jax.random.normal(k_src, (B, S, E), jnp.float32)
    tgt = jax.random.normal(k_tgt, (B, T, E), jnp.float32)
    enc_p = make_encoder_params(k_enc, num_encoder_layers, E, F)
    dec_p = make_decoder_params(k_dec, num_decoder_layers, E, F)

    # One-time host-side weight prep (transpose / per-head reshape / bf16 cast / scale fold)
    enc_prep = prepare_encoder_params(enc_p, nhead)
    dec_prep = prepare_decoder_params(dec_p, nhead)

    # causal mask for decoder self-attention; src / memory unmasked (None -> skipped).
    tgt_mask = jnp.where(jnp.tril(jnp.ones((T, T), bool)), 0.0, -1e9).astype(jnp.float32)

    out = transformer_forward(src, tgt, enc_prep, dec_prep, nhead=nhead,
                              src_mask=None, tgt_mask=tgt_mask, memory_mask=None)
    out = jax.block_until_ready(out)

    ref = transformer_reference(src, tgt, enc_p, dec_p, nhead=nhead,
                                src_mask=None, tgt_mask=tgt_mask, memory_mask=None)
    assert out.shape == (B, T, E)
    err = float(jnp.max(jnp.abs(out - ref)))
    # bf16 MXU operands -> relaxed tolerance vs. the f32 JAX reference.
    assert jnp.allclose(out, ref, atol=5e-2, rtol=5e-2), \
        f"mismatch vs JAX reference (max abs err {err:.3e})"
    print("KERNEL_OK")
</pallas_src>

<mosaic_0001>
module attributes {stable_mosaic.version = 11 : i64} {
  func.func @_encoder_kernel(%arg0: i32, %arg1: i32, %arg2: memref<2x16x32xf32, #tpu.memory_space<vmem>>, %arg3: memref<1x32x96xbf16, #tpu.memory_space<vmem>>, %arg4: memref<1x1x96xf32, #tpu.memory_space<vmem>>, %arg5: memref<1x4x8x32xbf16, #tpu.memory_space<vmem>>, %arg6: memref<1x1x32xf32, #tpu.memory_space<vmem>>, %arg7: memref<1x32x64xbf16, #tpu.memory_space<vmem>>, %arg8: memref<1x1x64xf32, #tpu.memory_space<vmem>>, %arg9: memref<1x64x32xbf16, #tpu.memory_space<vmem>>, %arg10: memref<1x1x32xf32, #tpu.memory_space<vmem>>, %arg11: memref<1x1x32xf32, #tpu.memory_space<vmem>>, %arg12: memref<1x1x32xf32, #tpu.memory_space<vmem>>, %arg13: memref<1x1x32xf32, #tpu.memory_space<vmem>>, %arg14: memref<1x1x32xf32, #tpu.memory_space<vmem>>, %arg15: memref<1x32xf32, #tpu.memory_space<vmem>>, %arg16: memref<1x32xf32, #tpu.memory_space<vmem>>, %arg17: memref<2x16x32xf32, #tpu.memory_space<vmem>>, %arg18: memref<32x32xf32, #tpu.memory_space<vmem>>) attributes {dimension_semantics = [#tpu.dimension_semantics<parallel>, #tpu.dimension_semantics<arbitrary>], iteration_bounds = array<i64: 1, 2>, scalar_prefetch = 0 : i64, scratch_operands = 1 : i64, tpu.core_type = #tpu.core_type<tc>, window_params = [{transform_indices = @transform_0, window_bounds = array<i64: 2, 16, 32>}, {transform_indices = @transform_1, window_bounds = array<i64: 1, 32, 96>}, {transform_indices = @transform_2, window_bounds = array<i64: 1, 1, 96>}, {transform_indices = @transform_3, window_bounds = array<i64: 1, 4, 8, 32>}, {transform_indices = @transform_4, window_bounds = array<i64: 1, 1, 32>}, {transform_indices = @transform_5, window_bounds = array<i64: 1, 32, 64>}, {transform_indices = @transform_6, window_bounds = array<i64: 1, 1, 64>}, {transform_indices = @transform_7, window_bounds = array<i64: 1, 64, 32>}, {transform_indices = @transform_8, window_bounds = array<i64: 1, 1, 32>}, {transform_indices = @transform_9, window_bounds = array<i64: 1, 1, 32>}, {transform_indices = @transform_10, window_bounds = array<i64: 1, 1, 32>}, {transform_indices = @transform_11, window_bounds = array<i64: 1, 1, 32>}, {transform_indices = @transform_12, window_bounds = array<i64: 1, 1, 32>}, {pipeline_mode = #tpu.pipeline_mode<synchronous>, transform_indices = @transform_13, window_bounds = array<i64: 1, 32>}, {pipeline_mode = #tpu.pipeline_mode<synchronous>, transform_indices = @transform_14, window_bounds = array<i64: 1, 32>}, {transform_indices = @transform_15, window_bounds = array<i64: 2, 16, 32>}]} {
    %c0_i32 = arith.constant 0 : i32
    %0 = arith.cmpi eq, %arg1, %c0_i32 : i32
    %1 = arith.extui %0 : i1 to i32
    %c0_i32_0 = arith.constant 0 : i32
    %2 = arith.cmpi ne, %1, %c0_i32_0 : i32
    scf.if %2 {
      %c0_76 = arith.constant 0 : index
      %c0_77 = arith.constant 0 : index
      %c0_78 = arith.constant 0 : index
      %203 = vector.load %arg2[%c0_76, %c0_77, %c0_78] : memref<2x16x32xf32, #tpu.memory_space<vmem>>, vector<2x16x32xf32>
      %204 = vector.shape_cast %203 : vector<2x16x32xf32> to vector<32x32xf32>
      %c0_79 = arith.constant 0 : index
      %c0_80 = arith.constant 0 : index
      %205 = vector.load %arg18[%c0_79, %c0_80] : memref<32x32xf32, #tpu.memory_space<vmem>>, vector<32x32xf32>
      tpu.vector_store %arg18[%c0_79, %c0_80], %204 {strides = array<i32>} : memref<32x32xf32, #tpu.memory_space<vmem>>, vector<32x32xf32>,
    } else {
    }
    %c0 = arith.constant 0 : index
    %c0_1 = arith.constant 0 : index
    %3 = vector.load %arg18[%c0, %c0_1] : memref<32x32xf32, #tpu.memory_space<vmem>>, vector<32x32xf32>
    %c0_2 = arith.constant 0 : index
    %c0_3 = arith.constant 0 : index
    %c0_4 = arith.constant 0 : index
    %4 = vector.load %arg11[%c0_2, %c0_3, %c0_4] : memref<1x1x32xf32, #tpu.memory_space<vmem>>, vector<1x1x32xf32>
    %5 = vector.shape_cast %4 : vector<1x1x32xf32> to vector<1x32xf32>
    %c0_5 = arith.constant 0 : index
    %c0_6 = arith.constant 0 : index
    %c0_7 = arith.constant 0 : index
    %6 = vector.load %arg12[%c0_5, %c0_6, %c0_7] : memref<1x1x32xf32, #tpu.memory_space<vmem>>, vector<1x1x32xf32>
    %7 = vector.shape_cast %6 : vector<1x1x32xf32> to vector<1x32xf32>
    %cst = arith.constant dense<0.000000e+00> : vector<32xf32>
    %8 = vector.multi_reduction <add>, %3, %cst [1] : vector<32x32xf32> to vector<32xf32>
    %9 = vector.shape_cast %8 : vector<32xf32> to vector<32x1xf32>
    %cst_8 = arith.constant 3.200000e+01 : f32
    %10 = vector.broadcast %cst_8 : f32 to vector<32x1xf32>
    %11 = arith.divf %9, %10 : vector<32x1xf32>
    %12 = vector.broadcast %11 : vector<32x1xf32> to vector<32x32xf32>
    %13 = arith.subf %3, %12 : vector<32x32xf32>
    %14 = arith.mulf %13, %13 : vector<32x32xf32>
    %cst_9 = arith.constant dense<0.000000e+00> : vector<32xf32>
    %15 = vector.multi_reduction <add>, %14, %cst_9 [1] : vector<32x32xf32> to vector<32xf32>
    %16 = vector.shape_cast %15 : vector<32xf32> to vector<32x1xf32>
    %cst_10 = arith.constant 3.200000e+01 : f32
    %17 = vector.broadcast %cst_10 : f32 to vector<32x1xf32>
    %18 = arith.divf %16, %17 : vector<32x1xf32>
    %cst_11 = arith.constant 9.99999974E-6 : f32
    %19 = vector.broadcast %cst_11 : f32 to vector<32x1xf32>
    %20 = arith.addf %18, %19 : vector<32x1xf32>
    %21 = math.rsqrt %20 : vector<32x1xf32>
    %22 = vector.broadcast %21 : vector<32x1xf32> to vector<32x32xf32>
    %23 = arith.mulf %13, %22 : vector<32x32xf32>
    %24 = vector.broadcast %5 : vector<1x32xf32> to vector<32x32xf32>
    %25 = arith.mulf %23, %24 : vector<32x32xf32>
    %26 = vector.broadcast %7 : vector<1x32xf32> to vector<32x32xf32>
    %27 = arith.addf %25, %26 : vector<32x32xf32>
    %28 = arith.truncf %27 : vector<32x32xf32> to vector<32x32xbf16>
    %c0_12 = arith.constant 0 : index
    %c0_13 = arith.constant 0 : index
    %c0_14 = arith.constant 0 : index
    %29 = vector.load %arg3[%c0_12, %c0_13, %c0_14] : memref<1x32x96xbf16, #tpu.memory_space<vmem>>, vector<1x32x96xbf16>
    %30 = vector.shape_cast %29 : vector<1x32x96xbf16> to vector<32x96xbf16>
    %cst_15 = arith.constant dense<0.000000e+00> : vector<32x96xf32>
    %31 = tpu.matmul %28, %30, %cst_15 {dimension_numbers = #tpu.dot_dimension_numbers<[1], [0], [0], [1], [0, 0, 1, 1], [], []>} : vector<32x32xbf16>, vector<32x96xbf16>, vector<32x96xf32> -> vector<32x96xf32>
    %c0_16 = arith.constant 0 : index
    %c0_17 = arith.constant 0 : index
    %c0_18 = arith.constant 0 : index
    %32 = vector.load %arg4[%c0_16, %c0_17, %c0_18] : memref<1x1x96xf32, #tpu.memory_space<vmem>>, vector<1x1x96xf32>
    %33 = vector.shape_cast %32 : vector<1x1x96xf32> to vector<1x96xf32>
    %34 = vector.broadcast %33 : vector<1x96xf32> to vector<32x96xf32>
    %35 = arith.addf %31, %34 : vector<32x96xf32>
    %c0_19 = arith.constant 0 : index
    %c0_20 = arith.constant 0 : index
    %c0_21 = arith.constant 0 : index
    %c0_22 = arith.constant 0 : index
    %36 = vector.load %arg5[%c0_19, %c0_20, %c0_21, %c0_22] : memref<1x4x8x32xbf16, #tpu.memory_space<vmem>>, vector<1x4x8x32xbf16>
    %37 = vector.shape_cast %36 : vector<1x4x8x32xbf16> to vector<4x8x32xbf16>
    %c0_23 = arith.constant 0 : index
    %c0_24 = arith.constant 0 : index
    %c0_25 = arith.constant 0 : index
    %38 = vector.load %arg6[%c0_23, %c0_24, %c0_25] : memref<1x1x32xf32, #tpu.memory_space<vmem>>, vector<1x1x32xf32>
    %39 = vector.shape_cast %38 : vector<1x1x32xf32> to vector<1x32xf32>
    %cst_26 = arith.constant 0.000000e+00 : f32
    %40 = vector.broadcast %cst_26 : f32 to vector<32x32xf32>
    %41 = vector.extract_strided_slice %35 {offsets = [0, 0], sizes = [32, 8], strides = [1, 1]} : vector<32x96xf32> to vector<32x8xf32>
    %42 = vector.shape_cast %41 : vector<32x8xf32> to vector<2x16x8xf32>
    %43 = arith.truncf %42 : vector<2x16x8xf32> to vector<2x16x8xbf16>
    %44 = vector.extract_strided_slice %35 {offsets = [0, 32], sizes = [32, 8], strides = [1, 1]} : vector<32x96xf32> to vector<32x8xf32>
    %45 = vector.shape_cast %44 : vector<32x8xf32> to vector<2x16x8xf32>
    %46 = arith.truncf %45 : vector<2x16x8xf32> to vector<2x16x8xbf16>
    %47 = vector.extract_strided_slice %35 {offsets = [0, 64], sizes = [32, 8], strides = [1, 1]} : vector<32x96xf32> to vector<32x8xf32>
    %48 = vector.shape_cast %47 : vector<32x8xf32> to vector<2x16x8xf32>
    %49 = arith.truncf %48 : vector<2x16x8xf32> to vector<2x16x8xbf16>
    "tpu.trace_start"() <{level = 10 : i32, message = "btd,bsd->bts"}> : () -> ()
    %cst_27 = arith.constant dense<0.000000e+00> : vector<2x16x16xf32>
    %50 = tpu.matmul %43, %46, %cst_27 {dimension_numbers = #tpu.dot_dimension_numbers<[2], [2], [1], [1], [0, 0, 0, 1, 1, 1], [0], [0]>} : vector<2x16x8xbf16>, vector<2x16x8xbf16>, vector<2x16x16xf32> -> vector<2x16x16xf32>
    "tpu.trace_stop"() : () -> ()
    %cst_28 = arith.constant dense<0xFF800000> : vector<2x16xf32>
    %51 = vector.multi_reduction <maximumf>, %50, %cst_28 [2] : vector<2x16x16xf32> to vector<2x16xf32>
    %52 = vector.shape_cast %51 : vector<2x16xf32> to vector<2x16x1xf32>
    %53 = vector.broadcast %52 : vector<2x16x1xf32> to vector<2x16x16xf32>
    %54 = arith.subf %50, %53 : vector<2x16x16xf32>
    %55 = math.exp %54 : vector<2x16x16xf32>
    %cst_29 = arith.constant dense<0.000000e+00> : vector<2x16xf32>
    %56 = vector.multi_reduction <add>, %55, %cst_29 [2] : vector<2x16x16xf32> to vector<2x16xf32>
    %57 = vector.shape_cast %56 : vector<2x16xf32> to vector<2x16x1xf32>
    %58 = tpu.reciprocal %57 {approx = true} : vector<2x16x1xf32> -> vector<2x16x1xf32>
    %59 = vector.broadcast %58 : vector<2x16x1xf32> to vector<2x16x16xf32>
    %60 = arith.mulf %55, %59 : vector<2x16x16xf32>
    %61 = arith.truncf %60 : vector<2x16x16xf32> to vector<2x16x16xbf16>
    "tpu.trace_start"() <{level = 10 : i32, message = "bts,bsd->btd"}> : () -> ()
    %cst_30 = arith.constant dense<0.000000e+00> : vector<2x16x8xf32>
    %62 = tpu.matmul %61, %49, %cst_30 {dimension_numbers = #tpu.dot_dimension_numbers<[2], [1], [1], [2], [0, 0, 0, 1, 1, 2], [0], [0]>} : vector<2x16x16xbf16>, vector<2x16x8xbf16>, vector<2x16x8xf32> -> vector<2x16x8xf32>
    "tpu.trace_stop"() : () -> ()
    %63 = vector.shape_cast %62 : vector<2x16x8xf32> to vector<32x8xf32>
    %64 = arith.truncf %63 : vector<32x8xf32> to vector<32x8xbf16>
    %65 = vector.extract_strided_slice %37 {offsets = [0, 0, 0], sizes = [1, 8, 32], strides = [1, 1, 1]} : vector<4x8x32xbf16> to vector<1x8x32xbf16>
    %66 = vector.shape_cast %65 : vector<1x8x32xbf16> to vector<8x32xbf16>
    %cst_31 = arith.constant dense<0.000000e+00> : vector<32x32xf32>
    %67 = tpu.matmul %64, %66, %cst_31 {dimension_numbers = #tpu.dot_dimension_numbers<[1], [0], [0], [1], [0, 0, 1, 1], [], []>} : vector<32x8xbf16>, vector<8x32xbf16>, vector<32x32xf32> -> vector<32x32xf32>
    %68 = arith.addf %40, %67 : vector<32x32xf32>
    %69 = vector.extract_strided_slice %35 {offsets = [0, 8], sizes = [32, 8], strides = [1, 1]} : vector<32x96xf32> to vector<32x8xf32>
    %70 = vector.shape_cast %69 : vector<32x8xf32> to vector<2x16x8xf32>
    %71 = arith.truncf %70 : vector<2x16x8xf32> to vector<2x16x8xbf16>
    %72 = vector.extract_strided_slice %35 {offsets = [0, 40], sizes = [32, 8], strides = [1, 1]} : vector<32x96xf32> to vector<32x8xf32>
    %73 = vector.shape_cast %72 : vector<32x8xf32> to vector<2x16x8xf32>
    %74 = arith.truncf %73 : vector<2x16x8xf32> to vector<2x16x8xbf16>
    %75 = vector.extract_strided_slice %35 {offsets = [0, 72], sizes = [32, 8], strides = [1, 1]} : vector<32x96xf32> to vector<32x8xf32>
    %76 = vector.shape_cast %75 : vector<32x8xf32> to vector<2x16x8xf32>
    %77 = arith.truncf %76 : vector<2x16x8xf32> to vector<2x16x8xbf16>
    "tpu.trace_start"() <{level = 10 : i32, message = "btd,bsd->bts"}> : () -> ()
    %cst_32 = arith.constant dense<0.000000e+00> : vector<2x16x16xf32>
    %78 = tpu.matmul %71, %74, %cst_32 {dimension_numbers = #tpu.dot_dimension_numbers<[2], [2], [1], [1], [0, 0, 0, 1, 1, 1], [0], [0]>} : vector<2x16x8xbf16>, vector<2x16x8xbf16>, vector<2x16x16xf32> -> vector<2x16x16xf32>
    "tpu.trace_stop"() : () -> ()
    %cst_33 = arith.constant dense<0xFF800000> : vector<2x16xf32>
    %79 = vector.multi_reduction <maximumf>, %78, %cst_33 [2] : vector<2x16x16xf32> to vector<2x16xf32>
    %80 = vector.shape_cast %79 : vector<2x16xf32> to vector<2x16x1xf32>
    %81 = vector.broadcast %80 : vector<2x16x1xf32> to vector<2x16x16xf32>
    %82 = arith.subf %78, %81 : vector<2x16x16xf32>
    %83 = math.exp %82 : vector<2x16x16xf32>
    %cst_34 = arith.constant dense<0.000000e+00> : vector<2x16xf32>
    %84 = vector.multi_reduction <add>, %83, %cst_34 [2] : vector<2x16x16xf32> to vector<2x16xf32>
    %85 = vector.shape_cast %84 : vector<2x16xf32> to vector<2x16x1xf32>
    %86 = tpu.reciprocal %85 {approx = true} : vector<2x16x1xf32> -> vector<2x16x1xf32>
    %87 = vector.broadcast %86 : vector<2x16x1xf32> to vector<2x16x16xf32>
    %88 = arith.mulf %83, %87 : vector<2x16x16xf32>
    %89 = arith.truncf %88 : vector<2x16x16xf32> to vector<2x16x16xbf16>
    "tpu.trace_start"() <{level = 10 : i32, message = "bts,bsd->btd"}> : () -> ()
    %cst_35 = arith.constant dense<0.000000e+00> : vector<2x16x8xf32>
    %90 = tpu.matmul %89, %77, %cst_35 {dimension_numbers = #tpu.dot_dimension_numbers<[2], [1], [1], [2], [0, 0, 0, 1, 1, 2], [0], [0]>} : vector<2x16x16xbf16>, vector<2x16x8xbf16>, vector<2x16x8xf32> -> vector<2x16x8xf32>
    "tpu.trace_stop"() : () -> ()
    %91 = vector.shape_cast %90 : vector<2x16x8xf32> to vector<32x8xf32>
    %92 = arith.truncf %91 : vector<32x8xf32> to vector<32x8xbf16>
    %93 = vector.extract_strided_slice %37 {offsets = [1, 0, 0], sizes = [1, 8, 32], strides = [1, 1, 1]} : vector<4x8x32xbf16> to vector<1x8x32xbf16>
    %94 = vector.shape_cast %93 : vector<1x8x32xbf16> to vector<8x32xbf16>
    %cst_36 = arith.constant dense<0.000000e+00> : vector<32x32xf32>
    %95 = tpu.matmul %92, %94, %cst_36 {dimension_numbers = #tpu.dot_dimension_numbers<[1], [0], [0], [1], [0, 0, 1, 1], [], []>} : vector<32x8xbf16>, vector<8x32xbf16>, vector<32x32xf32> -> vector<32x32xf32>
    %96 = arith.addf %68, %95 : vector<32x32xf32>
    %97 = vector.extract_strided_slice %35 {offsets = [0, 16], sizes = [32, 8], strides = [1, 1]} : vector<32x96xf32> to vector<32x8xf32>
    %98 = vector.shape_cast %97 : vector<32x8xf32> to vector<2x16x8xf32>
    %99 = arith.truncf %98 : vector<2x16x8xf32> to vector<2x16x8xbf16>
    %100 = vector.extract_strided_slice %35 {offsets = [0, 48], sizes = [32, 8], strides = [1, 1]} : vector<32x96xf32> to vector<32x8xf32>
    %101 = vector.shape_cast %100 : vector<32x8xf32> to vector<2x16x8xf32>
    %102 = arith.truncf %101 : vector<2x16x8xf32> to vector<2x16x8xbf16>
    %103 = vector.extract_strided_slice %35 {offsets = [0, 80], sizes = [32, 8], strides = [1, 1]} : vector<32x96xf32> to vector<32x8xf32>
    %104 = vector.shape_cast %103 : vector<32x8xf32> to vector<2x16x8xf32>
    %105 = arith.truncf %104 : vector<2x16x8xf32> to vector<2x16x8xbf16>
    "tpu.trace_start"() <{level = 10 : i32, message = "btd,bsd->bts"}> : () -> ()
    %cst_37 = arith.constant dense<0.000000e+00> : vector<2x16x16xf32>
    %106 = tpu.matmul %99, %102, %cst_37 {dimension_numbers = #tpu.dot_dimension_numbers<[2], [2], [1], [1], [0, 0, 0, 1, 1, 1], [0], [0]>} : vector<2x16x8xbf16>, vector<2x16x8xbf16>, vector<2x16x16xf32> -> vector<2x16x16xf32>
    "tpu.trace_stop"() : () -> ()
    %cst_38 = arith.constant dense<0xFF800000> : vector<2x16xf32>
    %107 = vector.multi_reduction <maximumf>, %106, %cst_38 [2] : vector<2x16x16xf32> to vector<2x16xf32>
    %108 = vector.shape_cast %107 : vector<2x16xf32> to vector<2x16x1xf32>
    %109 = vector.broadcast %108 : vector<2x16x1xf32> to vector<2x16x16xf32>
    %110 = arith.subf %106, %109 : vector<2x16x16xf32>
    %111 = math.exp %110 : vector<2x16x16xf32>
    %cst_39 = arith.constant dense<0.000000e+00> : vector<2x16xf32>
    %112 = vector.multi_reduction <add>, %111, %cst_39 [2] : vector<2x16x16xf32> to vector<2x16xf32>
    %113 = vector.shape_cast %112 : vector<2x16xf32> to vector<2x16x1xf32>
    %114 = tpu.reciprocal %113 {approx = true} : vector<2x16x1xf32> -> vector<2x16x1xf32>
    %115 = vector.broadcast %114 : vector<2x16x1xf32> to vector<2x16x16xf32>
    %116 = arith.mulf %111, %115 : vector<2x16x16xf32>
    %117 = arith.truncf %116 : vector<2x16x16xf32> to vector<2x16x16xbf16>
    "tpu.trace_start"() <{level = 10 : i32, message = "bts,bsd->btd"}> : () -> ()
    %cst_40 = arith.constant dense<0.000000e+00> : vector<2x16x8xf32>
    %118 = tpu.matmul %117, %105, %cst_40 {dimension_numbers = #tpu.dot_dimension_numbers<[2], [1], [1], [2], [0, 0, 0, 1, 1, 2], [0], [0]>} : vector<2x16x16xbf16>, vector<2x16x8xbf16>, vector<2x16x8xf32> -> vector<2x16x8xf32>
    "tpu.trace_stop"() : () -> ()
    %119 = vector.shape_cast %118 : vector<2x16x8xf32> to vector<32x8xf32>
    %120 = arith.truncf %119 : vector<32x8xf32> to vector<32x8xbf16>
    %121 = vector.extract_strided_slice %37 {offsets = [2, 0, 0], sizes = [1, 8, 32], strides = [1, 1, 1]} : vector<4x8x32xbf16> to vector<1x8x32xbf16>
    %122 = vector.shape_cast %121 : vector<1x8x32xbf16> to vector<8x32xbf16>
    %cst_41 = arith.constant dense<0.000000e+00> : vector<32x32xf32>
    %123 = tpu.matmul %120, %122, %cst_41 {dimension_numbers = #tpu.dot_dimension_numbers<[1], [0], [0], [1], [0, 0, 1, 1], [], []>} : vector<32x8xbf16>, vector<8x32xbf16>, vector<32x32xf32> -> vector<32x32xf32>
    %124 = arith.addf %96, %123 : vector<32x32xf32>
    %125 = vector.extract_strided_slice %35 {offsets = [0, 24], sizes = [32, 8], strides = [1, 1]} : vector<32x96xf32> to vector<32x8xf32>
    %126 = vector.shape_cast %125 : vector<32x8xf32> to vector<2x16x8xf32>
    %127 = arith.truncf %126 : vector<2x16x8xf32> to vector<2x16x8xbf16>
    %128 = vector.extract_strided_slice %35 {offsets = [0, 56], sizes = [32, 8], strides = [1, 1]} : vector<32x96xf32> to vector<32x8xf32>
    %129 = vector.shape_cast %128 : vector<32x8xf32> to vector<2x16x8xf32>
    %130 = arith.truncf %129 : vector<2x16x8xf32> to vector<2x16x8xbf16>
    %131 = vector.extract_strided_slice %35 {offsets = [0, 88], sizes = [32, 8], strides = [1, 1]} : vector<32x96xf32> to vector<32x8xf32>
    %132 = vector.shape_cast %131 : vector<32x8xf32> to vector<2x16x8xf32>
    %133 = arith.truncf %132 : vector<2x16x8xf32> to vector<2x16x8xbf16>
    "tpu.trace_start"() <{level = 10 : i32, message = "btd,bsd->bts"}> : () -> ()
    %cst_42 = arith.constant dense<0.000000e+00> : vector<2x16x16xf32>
    %134 = tpu.matmul %127, %130, %cst_42 {dimension_numbers = #tpu.dot_dimension_numbers<[2], [2], [1], [1], [0, 0, 0, 1, 1, 1], [0], [0]>} : vector<2x16x8xbf16>, vector<2x16x8xbf16>, vector<2x16x16xf32> -> vector<2x16x16xf32>
    "tpu.trace_stop"() : () -> ()
    %cst_43 = arith.constant dense<0xFF800000> : vector<2x16xf32>
    %135 = vector.multi_reduction <maximumf>, %134, %cst_43 [2] : vector<2x16x16xf32> to vector<2x16xf32>
    %136 = vector.shape_cast %135 : vector<2x16xf32> to vector<2x16x1xf32>
    %137 = vector.broadcast %136 : vector<2x16x1xf32> to vector<2x16x16xf32>
    %138 = arith.subf %134, %137 : vector<2x16x16xf32>
    %139 = math.exp %138 : vector<2x16x16xf32>
    %cst_44 = arith.constant dense<0.000000e+00> : vector<2x16xf32>
    %140 = vector.multi_reduction <add>, %139, %cst_44 [2] : vector<2x16x16xf32> to vector<2x16xf32>
    %141 = vector.shape_cast %140 : vector<2x16xf32> to vector<2x16x1xf32>
    %142 = tpu.reciprocal %141 {approx = true} : vector<2x16x1xf32> -> vector<2x16x1xf32>
    %143 = vector.broadcast %142 : vector<2x16x1xf32> to vector<2x16x16xf32>
    %144 = arith.mulf %139, %143 : vector<2x16x16xf32>
    %145 = arith.truncf %144 : vector<2x16x16xf32> to vector<2x16x16xbf16>
    "tpu.trace_start"() <{level = 10 : i32, message = "bts,bsd->btd"}> : () -> ()
    %cst_45 = arith.constant dense<0.000000e+00> : vector<2x16x8xf32>
    %146 = tpu.matmul %145, %133, %cst_45 {dimension_numbers = #tpu.dot_dimension_numbers<[2], [1], [1], [2], [0, 0, 0, 1, 1, 2], [0], [0]>} : vector<2x16x16xbf16>, vector<2x16x8xbf16>, vector<2x16x8xf32> -> vector<2x16x8xf32>
    "tpu.trace_stop"() : () -> ()
    %147 = vector.shape_cast %146 : vector<2x16x8xf32> to vector<32x8xf32>
    %148 = arith.truncf %147 : vector<32x8xf32> to vector<32x8xbf16>
    %149 = vector.extract_strided_slice %37 {offsets = [3, 0, 0], sizes = [1, 8, 32], strides = [1, 1, 1]} : vector<4x8x32xbf16> to vector<1x8x32xbf16>
    %150 = vector.shape_cast %149 : vector<1x8x32xbf16> to vector<8x32xbf16>
    %cst_46 = arith.constant dense<0.000000e+00> : vector<32x32xf32>
    %151 = tpu.matmul %148, %150, %cst_46 {dimension_numbers = #tpu.dot_dimension_numbers<[1], [0], [0], [1], [0, 0, 1, 1], [], []>} : vector<32x8xbf16>, vector<8x32xbf16>, vector<32x32xf32> -> vector<32x32xf32>
    %152 = arith.addf %124, %151 : vector<32x32xf32>
    %153 = vector.broadcast %39 : vector<1x32xf32> to vector<32x32xf32>
    %154 = arith.addf %152, %153 : vector<32x32xf32>
    %155 = arith.addf %3, %154 : vector<32x32xf32>
    %c0_47 = arith.constant 0 : index
    %c0_48 = arith.constant 0 : index
    %c0_49 = arith.constant 0 : index
    %156 = vector.load %arg13[%c0_47, %c0_48, %c0_49] : memref<1x1x32xf32, #tpu.memory_space<vmem>>, vector<1x1x32xf32>
    %157 = vector.shape_cast %156 : vector<1x1x32xf32> to vector<1x32xf32>
    %c0_50 = arith.constant 0 : index
    %c0_51 = arith.constant 0 : index
    %c0_52 = arith.constant 0 : index
    %158 = vector.load %arg14[%c0_50, %c0_51, %c0_52] : memref<1x1x32xf32, #tpu.memory_space<vmem>>, vector<1x1x32xf32>
    %159 = vector.shape_cast %158 : vector<1x1x32xf32> to vector<1x32xf32>
    %cst_53 = arith.constant dense<0.000000e+00> : vector<32xf32>
    %160 = vector.multi_reduction <add>, %155, %cst_53 [1] : vector<32x32xf32> to vector<32xf32>
    %161 = vector.shape_cast %160 : vector<32xf32> to vector<32x1xf32>
    %cst_54 = arith.constant 3.200000e+01 : f32
    %162 = vector.broadcast %cst_54 : f32 to vector<32x1xf32>
    %163 = arith.divf %161, %162 : vector<32x1xf32>
    %164 = vector.broadcast %163 : vector<32x1xf32> to vector<32x32xf32>
    %165 = arith.subf %155, %164 : vector<32x32xf32>
    %166 = arith.mulf %165, %165 : vector<32x32xf32>
    %cst_55 = arith.constant dense<0.000000e+00> : vector<32xf32>
    %167 = vector.multi_reduction <add>, %166, %cst_55 [1] : vector<32x32xf32> to vector<32xf32>
    %168 = vector.shape_cast %167 : vector<32xf32> to vector<32x1xf32>
    %cst_56 = arith.constant 3.200000e+01 : f32
    %169 = vector.broadcast %cst_56 : f32 to vector<32x1xf32>
    %170 = arith.divf %168, %169 : vector<32x1xf32>
    %cst_57 = arith.constant 9.99999974E-6 : f32
    %171 = vector.broadcast %cst_57 : f32 to vector<32x1xf32>
    %172 = arith.addf %170, %171 : vector<32x1xf32>
    %173 = math.rsqrt %172 : vector<32x1xf32>
    %174 = vector.broadcast %173 : vector<32x1xf32> to vector<32x32xf32>
    %175 = arith.mulf %165, %174 : vector<32x32xf32>
    %176 = vector.broadcast %157 : vector<1x32xf32> to vector<32x32xf32>
    %177 = arith.mulf %175, %176 : vector<32x32xf32>
    %178 = vector.broadcast %159 : vector<1x32xf32> to vector<32x32xf32>
    %179 = arith.addf %177, %178 : vector<32x32xf32>
    %180 = arith.truncf %179 : vector<32x32xf32> to vector<32x32xbf16>
    %c0_58 = arith.constant 0 : index
    %c0_59 = arith.constant 0 : index
    %c0_60 = arith.constant 0 : index
    %181 = vector.load %arg7[%c0_58, %c0_59, %c0_60] : memref<1x32x64xbf16, #tpu.memory_space<vmem>>, vector<1x32x64xbf16>
    %182 = vector.shape_cast %181 : vector<1x32x64xbf16> to vector<32x64xbf16>
    %cst_61 = arith.constant dense<0.000000e+00> : vector<32x64xf32>
    %183 = tpu.matmul %180, %182, %cst_61 {dimension_numbers = #tpu.dot_dimension_numbers<[1], [0], [0], [1], [0, 0, 1, 1], [], []>} : vector<32x32xbf16>, vector<32x64xbf16>, vector<32x64xf32> -> vector<32x64xf32>
    %c0_62 = arith.constant 0 : index
    %c0_63 = arith.constant 0 : index
    %c0_64 = arith.constant 0 : index
    %184 = vector.load %arg8[%c0_62, %c0_63, %c0_64] : memref<1x1x64xf32, #tpu.memory_space<vmem>>, vector<1x1x64xf32>
    %185 = vector.shape_cast %184 : vector<1x1x64xf32> to vector<1x64xf32>
    %186 = vector.broadcast %185 : vector<1x64xf32> to vector<32x64xf32>
    %187 = arith.addf %183, %186 : vector<32x64xf32>
    %cst_65 = arith.constant 0.000000e+00 : f32
    %188 = vector.broadcast %cst_65 : f32 to vector<32x64xf32>
    %189 = arith.maximumf %187, %188 : vector<32x64xf32>
    %190 = arith.truncf %189 : vector<32x64xf32> to vector<32x64xbf16>
    %c0_66 = arith.constant 0 : index
    %c0_67 = arith.constant 0 : index
    %c0_68 = arith.constant 0 : index
    %191 = vector.load %arg9[%c0_66, %c0_67, %c0_68] : memref<1x64x32xbf16, #tpu.memory_space<vmem>>, vector<1x64x32xbf16>
    %192 = vector.shape_cast %191 : vector<1x64x32xbf16> to vector<64x32xbf16>
    %cst_69 = arith.constant dense<0.000000e+00> : vector<32x32xf32>
    %193 = tpu.matmul %190, %192, %cst_69 {dimension_numbers = #tpu.dot_dimension_numbers<[1], [0], [0], [1], [0, 0, 1, 1], [], []>} : vector<32x64xbf16>, vector<64x32xbf16>, vector<32x32xf32> -> vector<32x32xf32>
    %194 = arith.addf %155, %193 : vector<32x32xf32>
    %c0_70 = arith.constant 0 : index
    %c0_71 = arith.constant 0 : index
    %c0_72 = arith.constant 0 : index
    %195 = vector.load %arg10[%c0_70, %c0_71, %c0_72] : memref<1x1x32xf32, #tpu.memory_space<vmem>>, vector<1x1x32xf32>
    %196 = vector.shape_cast %195 : vector<1x1x32xf32> to vector<1x32xf32>
    %197 = vector.broadcast %196 : vector<1x32xf32> to vector<32x32xf32>
    %198 = arith.addf %194, %197 : vector<32x32xf32>
    %c0_73 = arith.constant 0 : index
    %c0_74 = arith.constant 0 : index
    %199 = vector.load %arg18[%c0_73, %c0_74] : memref<32x32xf32, #tpu.memory_space<vmem>>, vector<32x32xf32>
    tpu.vector_store %arg18[%c0_73, %c0_74], %198 {strides = array<i32>} : memref<32x32xf32, #tpu.memory_space<vmem>>, vector<32x32xf32>,
    %c1_i32 = arith.constant 1 : i32
    %200 = arith.cmpi eq, %arg1, %c1_i32 : i32
    %201 = arith.extui %200 : i1 to i32
    %c0_i32_75 = arith.constant 0 : i32
    %202 = arith.cmpi ne, %201, %c0_i32_75 : i32
    scf.if %202 {
      %c0_76 = arith.constant 0 : index
      %c0_77 = arith.constant 0 : index
      %203 = vector.load %arg15[%c0_76, %c0_77] : memref<1x32xf32, #tpu.memory_space<vmem>>, vector<1x32xf32>
      %c0_78 = arith.constant 0 : index
      %c0_79 = arith.constant 0 : index
      %204 = vector.load %arg16[%c0_78, %c0_79] : memref<1x32xf32, #tpu.memory_space<vmem>>, vector<1x32xf32>
      %cst_80 = arith.constant dense<0.000000e+00> : vector<32xf32>
      %205 = vector.multi_reduction <add>, %198, %cst_80 [1] : vector<32x32xf32> to vector<32xf32>
      %206 = vector.shape_cast %205 : vector<32xf32> to vector<32x1xf32>
      %cst_81 = arith.constant 3.200000e+01 : f32
      %207 = vector.broadcast %cst_81 : f32 to vector<32x1xf32>
      %208 = arith.divf %206, %207 : vector<32x1xf32>
      %209 = vector.broadcast %208 : vector<32x1xf32> to vector<32x32xf32>
      %210 = arith.subf %198, %209 : vector<32x32xf32>
      %211 = arith.mulf %210, %210 : vector<32x32xf32>
      %cst_82 = arith.constant dense<0.000000e+00> : vector<32xf32>
      %212 = vector.multi_reduction <add>, %211, %cst_82 [1] : vector<32x32xf32> to vector<32xf32>
      %213 = vector.shape_cast %212 : vector<32xf32> to vector<32x1xf32>
      %cst_83 = arith.constant 3.200000e+01 : f32
      %214 = vector.broadcast %cst_83 : f32 to vector<32x1xf32>
      %215 = arith.divf %213, %214 : vector<32x1xf32>
      %cst_84 = arith.constant 9.99999974E-6 : f32
      %216 = vector.broadcast %cst_84 : f32 to vector<32x1xf32>
      %217 = arith.addf %215, %216 : vector<32x1xf32>
      %218 = math.rsqrt %217 : vector<32x1xf32>
      %219 = vector.broadcast %218 : vector<32x1xf32> to vector<32x32xf32>
      %220 = arith.mulf %210, %219 : vector<32x32xf32>
      %221 = vector.broadcast %203 : vector<1x32xf32> to vector<32x32xf32>
      %222 = arith.mulf %220, %221 : vector<32x32xf32>
      %223 = vector.broadcast %204 : vector<1x32xf32> to vector<32x32xf32>
      %224 = arith.addf %222, %223 : vector<32x32xf32>
      %225 = vector.shape_cast %224 : vector<32x32xf32> to vector<2x16x32xf32>
      %c0_85 = arith.constant 0 : index
      %c0_86 = arith.constant 0 : index
      %c0_87 = arith.constant 0 : index
      %226 = vector.load %arg17[%c0_85, %c0_86, %c0_87] : memref<2x16x32xf32, #tpu.memory_space<vmem>>, vector<2x16x32xf32>
      tpu.vector_store %arg17[%c0_85, %c0_86, %c0_87], %225 {strides = array<i32>} : memref<2x16x32xf32, #tpu.memory_space<vmem>>, vector<2x16x32xf32>,
    } else {
    }
    return
  }
  func.func @transform_0(%arg0: i32, %arg1: i32) -> (i32, i32, i32) {
    %c0_i32 = arith.constant 0 : i32
    %c0_i32_0 = arith.constant 0 : i32
    %c0_i32_1 = arith.constant 0 : i32
    return %arg0, %c0_i32, %c0_i32_0 : i32, i32, i32
  }
  func.func @transform_1(%arg0: i32, %arg1: i32) -> (i32, i32, i32) {
    %c0_i32 = arith.constant 0 : i32
    %c0_i32_0 = arith.constant 0 : i32
    %c0_i32_1 = arith.constant 0 : i32
    return %arg1, %c0_i32, %c0_i32_0 : i32, i32, i32
  }
  func.func @transform_2(%arg0: i32, %arg1: i32) -> (i32, i32, i32) {
    %c0_i32 = arith.constant 0 : i32
    %c0_i32_0 = arith.constant 0 : i32
    %c0_i32_1 = arith.constant 0 : i32
    return %arg1, %c0_i32, %c0_i32_0 : i32, i32, i32
  }
  func.func @transform_3(%arg0: i32, %arg1: i32) -> (i32, i32, i32, i32) {
    %c0_i32 = arith.constant 0 : i32
    %c0_i32_0 = arith.constant 0 : i32
    %c0_i32_1 = arith.constant 0 : i32
    %c0_i32_2 = arith.constant 0 : i32
    return %arg1, %c0_i32, %c0_i32_0, %c0_i32_1 : i32, i32, i32, i32
  }
  func.func @transform_4(%arg0: i32, %arg1: i32) -> (i32, i32, i32) {
    %c0_i32 = arith.constant 0 : i32
    %c0_i32_0 = arith.constant 0 : i32
    %c0_i32_1 = arith.constant 0 : i32
    return %arg1, %c0_i32, %c0_i32_0 : i32, i32, i32
  }
  func.func @transform_5(%arg0: i32, %arg1: i32) -> (i32, i32, i32) {
    %c0_i32 = arith.constant 0 : i32
    %c0_i32_0 = arith.constant 0 : i32
    %c0_i32_1 = arith.constant 0 : i32
    return %arg1, %c0_i32, %c0_i32_0 : i32, i32, i32
  }
  func.func @transform_6(%arg0: i32, %arg1: i32) -> (i32, i32, i32) {
    %c0_i32 = arith.constant 0 : i32
    %c0_i32_0 = arith.constant 0 : i32
    %c0_i32_1 = arith.constant 0 : i32
    return %arg1, %c0_i32, %c0_i32_0 : i32, i32, i32
  }
  func.func @transform_7(%arg0: i32, %arg1: i32) -> (i32, i32, i32) {
    %c0_i32 = arith.constant 0 : i32
    %c0_i32_0 = arith.constant 0 : i32
    %c0_i32_1 = arith.constant 0 : i32
    return %arg1, %c0_i32, %c0_i32_0 : i32, i32, i32
  }
  func.func @transform_8(%arg0: i32, %arg1: i32) -> (i32, i32, i32) {
    %c0_i32 = arith.constant 0 : i32
    %c0_i32_0 = arith.constant 0 : i32
    %c0_i32_1 = arith.constant 0 : i32
    return %arg1, %c0_i32, %c0_i32_0 : i32, i32, i32
  }
  func.func @transform_9(%arg0: i32, %arg1: i32) -> (i32, i32, i32) {
    %c0_i32 = arith.constant 0 : i32
    %c0_i32_0 = arith.constant 0 : i32
    %c0_i32_1 = arith.constant 0 : i32
    return %arg1, %c0_i32, %c0_i32_0 : i32, i32, i32
  }
  func.func @transform_10(%arg0: i32, %arg1: i32) -> (i32, i32, i32) {
    %c0_i32 = arith.constant 0 : i32
    %c0_i32_0 = arith.constant 0 : i32
    %c0_i32_1 = arith.constant 0 : i32
    return %arg1, %c0_i32, %c0_i32_0 : i32, i32, i32
  }
  func.func @transform_11(%arg0: i32, %arg1: i32) -> (i32, i32, i32) {
    %c0_i32 = arith.constant 0 : i32
    %c0_i32_0 = arith.constant 0 : i32
    %c0_i32_1 = arith.constant 0 : i32
    return %arg1, %c0_i32, %c0_i32_0 : i32, i32, i32
  }
  func.func @transform_12(%arg0: i32, %arg1: i32) -> (i32, i32, i32) {
    %c0_i32 = arith.constant 0 : i32
    %c0_i32_0 = arith.constant 0 : i32
    %c0_i32_1 = arith.constant 0 : i32
    return %arg1, %c0_i32, %c0_i32_0 : i32, i32, i32
  }
  func.func @transform_13(%arg0: i32, %arg1: i32) -> (i32, i32) {
    %c0_i32 = arith.constant 0 : i32
    %c0_i32_0 = arith.constant 0 : i32
    %c0_i32_1 = arith.constant 0 : i32
    return %c0_i32, %c0_i32_0 : i32, i32
  }
  func.func @transform_14(%arg0: i32, %arg1: i32) -> (i32, i32) {
    %c0_i32 = arith.constant 0 : i32
    %c0_i32_0 = arith.constant 0 : i32
    %c0_i32_1 = arith.constant 0 : i32
    return %c0_i32, %c0_i32_0 : i32, i32
  }
  func.func @transform_15(%arg0: i32, %arg1: i32) -> (i32, i32, i32) {
    %c0_i32 = arith.constant 0 : i32
    %c0_i32_0 = arith.constant 0 : i32
    %c0_i32_1 = arith.constant 0 : i32
    return %arg0, %c0_i32, %c0_i32_0 : i32, i32, i32
  }
}

</mosaic_0001>

<llo_original>
// kernel: tpu_custom_call.1
$region0: #{tpu_custom_call.1}
  #allocation0 [shape = 'u32[]', space=smem, size = 0x4, offset = 0x4, fixed_abs, tag = 'smem constant byte address 0x4 - core index']
  #allocation1 [shape = 'u32[144,128]{1,0:T(1,128)}', space=vmem, size = 0x12000, scoped, tag = 'internal scratch']
  #allocation2 [shape = 'f32[32,32]{1,0:T(8,128)}', space=vmem, size = 0x4000, scoped, tag = 'scratch operand']
  %s0 = inlined_call_operand.vmem [shape: f32[2,16,32], index: 0, kind: input, shape index: {}]
  %s1 = inlined_call_operand.vmem [shape: bf16[2,32,96], index: 1, kind: input, shape index: {}]
  %s2 = inlined_call_operand.vmem [shape: f32[2,1,96], index: 2, kind: input, shape index: {}]
  %s3 = inlined_call_operand.vmem [shape: bf16[2,4,8,32], index: 3, kind: input, shape index: {}]
  %s4 = inlined_call_operand.vmem [shape: f32[2,1,32], index: 4, kind: input, shape index: {}]
  %s5 = inlined_call_operand.hbm [shape: bf16[2,32,64], index: 5, kind: input, shape index: {}]
  %s6 = inlined_call_operand.vmem [shape: f32[2,1,64], index: 6, kind: input, shape index: {}]
  %s7 = inlined_call_operand.vmem [shape: bf16[2,64,32], index: 7, kind: input, shape index: {}]
  %s8 = inlined_call_operand.vmem [shape: f32[2,1,32], index: 8, kind: input, shape index: {}]
  %s9 = inlined_call_operand.vmem [shape: f32[2,1,32], index: 9, kind: input, shape index: {}]
  %s10 = inlined_call_operand.vmem [shape: f32[2,1,32], index: 10, kind: input, shape index: {}]
  %s11 = inlined_call_operand.vmem [shape: f32[2,1,32], index: 11, kind: input, shape index: {}]
  %s12 = inlined_call_operand.vmem [shape: f32[2,1,32], index: 12, kind: input, shape index: {}]
  %s13 = inlined_call_operand.vmem [shape: f32[1,32], index: 13, kind: input, shape index: {}]
  %s14 = inlined_call_operand.vmem [shape: f32[1,32], index: 14, kind: input, shape index: {}]
  %s15 = inlined_call_operand.hbm [shape: f32[2,16,32], index: 15, kind: output, shape index: {}]
  %s16 = sld [smem:[#allocation0]]
  $region105: #{tpu_custom_call.1} parent=0
    _
  %s18 = ssub.s32 1, %s16
  %s19 = scalar_select 0, %s18, %s16
  $region1: #{tpu_custom_call.1} parent=0
    #allocation3 [shape = 'u8[16384]{0}', space=vmem, size = 0x4000, scoped, tag = 'input window, operand 5']
    #allocation4 [shape = 's32[2]{0}', space=sflag, size = 0x8, scoped, tag = 'scoped memory for tpu_custom_call.1']
    #allocation5 [shape = 's32[2]{0}', space=sflag, size = 0x8, scoped, tag = 'scoped memory for tpu_custom_call.1']
    #allocation6 [shape = 'u8[16384]{0}', space=vmem, size = 0x4000, scoped, tag = 'output window, operand 0, single buffered']
    %20 = vsyncpa [#allocation4], 0
    %s21 = scalar_lea.sflag [#allocation4], 1
    %22 = vsyncpa %s21, 0
    %23 = vsyncpa [#allocation5], 0
    loop: start=0, step=1, limit=4
    $region2: #{tpu_custom_call.1} parent=1 // loop_pre_header
      _
    $region3: #{tpu_custom_call.1} parent=1 // loop_header
      %s25 = sphi 0, %s29
      %p26 = scmp.ge.s32.totalorder %s25, 4
      %s32 = sphi 0, %s44
      %s33 = sphi 0, %s40
      %s34 = sphi 0, %s32
      %s35 = sphi 0, %s33
      %s36 = sphi 0, %s34
      %s37 = sphi 0, %s35
      %s47 = sphi 0, %s49
      %s50 = sphi 0, %s47
      %s51 = sphi 0, %s50
      %s67 = sphi 0, %s51
      %s73 = sphi 0, %s75
      %s76 = sphi 0, %s73
      %s77 = sphi 0, %s76
      %s93 = sphi 0, %s77
      %s99 = sphi 0, %s101
      %s102 = sphi 0, %s99
      %s103 = sphi 0, %s102
      %s119 = sphi 0, %s103
      %s125 = sphi 0, %s127
      %s128 = sphi 0, %s125
      %s129 = sphi 0, %s128
      %s145 = sphi 0, %s129
      %s151 = sphi 0, %s153
      %s154 = sphi 0, %s151
      %s155 = sphi 0, %s154
      %s171 = sphi 0, %s155
      %s177 = sphi 0, %s179
      %s180 = sphi 0, %s177
      %s181 = sphi 0, %s180
      %s197 = sphi 0, %s181
      %s203 = sphi 0, %s205
      %s206 = sphi 0, %s203
      %s207 = sphi 0, %s206
      %s223 = sphi 0, %s207
      %s229 = sphi 0, %s231
      %s232 = sphi 0, %s229
      %s233 = sphi 0, %s232
      %s249 = sphi 0, %s233
      %s255 = sphi 0, %s257
      %s258 = sphi 0, %s255
      %s259 = sphi 0, %s258
      %s275 = sphi 0, %s259
      %s281 = sphi 0, %s283
      %s284 = sphi 0, %s281
      %s285 = sphi 0, %s284
      %s301 = sphi 0, %s285
      %s307 = sphi 0, %s309
      %s310 = sphi 0, %s307
      %s311 = sphi 0, %s310
      %s327 = sphi 0, %s311
      %s333 = sphi 0, %s335
      %s336 = sphi 0, %s333
      %s337 = sphi 0, %s336
      %s353 = sphi 0, %s337
      %s359 = sphi 0, %s361
      %s362 = sphi 0, %s359
      %s363 = sphi 0, %s362
      %s379 = sphi 0, %s363
      %s383 = sphi 0, %s383
      %s385 = sphi 0, %s383
      %s386 = sphi 0, %s385
      %s400 = sphi 0, %s386
      %s404 = sphi 0, %s404
      %s406 = sphi 0, %s404
      %s407 = sphi 0, %s406
      %s421 = sphi 0, %s407
      %s427 = sphi 0, %s429
      %s430 = sphi 0, %s427
      %s431 = sphi 0, %s430
      %s447 = sphi 0, %s431
    $region4: #{tpu_custom_call.1} parent=1 // loop_header_branch
      %28 = sbr.rel (%p26) target = $region8
    $region5: #{tpu_custom_call.1} parent=1 // loop_body
      %s30 = ssub.s32 %s25, 1
      %s31 = ssub.s32 %s25, 2
      %s38 = sadd.s32 1, %s33
      %p39 = scmp.ge.s32.totalorder %s38, 2
      %s40 = scalar_select %p39, 0, %s38
      %s41 = sadd.s32 1, %s32
      %s42 = scalar_select %p39, %s41, %s32
      %p43 = scmp.ge.s32.totalorder %s42, 1
      %s44 = scalar_select %p43, 0, %s42
      %s45 = ssub.s32 %s32, %s44
      %p46 = scmp.eq.s32.totalorder %s45, 0
      %s48 = sadd.s32 %s47, 1
      %s49 = scalar_select %p46, %s47, %s48
      %p52 = pneg %p46
      %p53 = scmp.eq.s32.totalorder %s25, 1
      %p54 = por %p52, %p53
      %p55 = scmp.ne.s32.totalorder %s47, %s50
      %p56 = scmp.eq.s32.totalorder %s25, 0
      %p57 = por %p55, %p56
      %p58 = scmp.ne.s32.totalorder %s47, %s50
      %p59 = scmp.eq.s32.totalorder %s30, 1
      %p60 = por %p58, %p59
      %p61 = scmp.ne.s32.totalorder %s50, %s51
      %p62 = scmp.eq.s32.totalorder %s30, 0
      %p63 = por %p61, %p62
      %p64 = scmp.ne.s32.totalorder %s50, %s51
      %p65 = scmp.eq.s32.totalorder %s31, 1
      %p66 = por %p64, %p65
      %p68 = scmp.ne.s32.totalorder %s51, %s67
      %p69 = scmp.eq.s32.totalorder %s31, 0
      %p70 = por %p68, %p69
      %s71 = ssub.s32 %s33, %s40
      %p72 = scmp.eq.s32.totalorder %s71, 0
      %s74 = sadd.s32 %s73, 1
      %s75 = scalar_select %p72, %s73, %s74
      %p78 = pneg %p72
      %p79 = scmp.eq.s32.totalorder %s25, 1
      %p80 = por %p78, %p79
      %p81 = scmp.ne.s32.totalorder %s73, %s76
      %p82 = scmp.eq.s32.totalorder %s25, 0
      %p83 = por %p81, %p82
      %p84 = scmp.ne.s32.totalorder %s73, %s76
      %p85 = scmp.eq.s32.totalorder %s30, 1
      %p86 = por %p84, %p85
      %p87 = scmp.ne.s32.totalorder %s76, %s77
      %p88 = scmp.eq.s32.totalorder %s30, 0
      %p89 = por %p87, %p88
      %p90 = scmp.ne.s32.totalorder %s76, %s77
      %p91 = scmp.eq.s32.totalorder %s31, 1
      %p92 = por %p90, %p91
      %p94 = scmp.ne.s32.totalorder %s77, %s93
      %p95 = scmp.eq.s32.totalorder %s31, 0
      %p96 = por %p94, %p95
      %s97 = ssub.s32 %s33, %s40
      %p98 = scmp.eq.s32.totalorder %s97, 0
      %s100 = sadd.s32 %s99, 1
      %s101 = scalar_select %p98, %s99, %s100
      %p104 = pneg %p98
      %p105 = scmp.eq.s32.totalorder %s25, 1
      %p106 = por %p104, %p105
      %p107 = scmp.ne.s32.totalorder %s99, %s102
      %p108 = scmp.eq.s32.totalorder %s25, 0
      %p109 = por %p107, %p108
      %p110 = scmp.ne.s32.totalorder %s99, %s102
      %p111 = scmp.eq.s32.totalorder %s30, 1
      %p112 = por %p110, %p111
      %p113 = scmp.ne.s32.totalorder %s102, %s103
      %p114 = scmp.eq.s32.totalorder %s30, 0
      %p115 = por %p113, %p114
      %p116 = scmp.ne.s32.totalorder %s102, %s103
      %p117 = scmp.eq.s32.totalorder %s31, 1
      %p118 = por %p116, %p117
      %p120 = scmp.ne.s32.totalorder %s103, %s119
      %p121 = scmp.eq.s32.totalorder %s31, 0
      %p122 = por %p120, %p121
      %s123 = ssub.s32 %s33, %s40
      %p124 = scmp.eq.s32.totalorder %s123, 0
      %s126 = sadd.s32 %s125, 1
      %s127 = scalar_select %p124, %s125, %s126
      %p130 = pneg %p124
      %p131 = scmp.eq.s32.totalorder %s25, 1
      %p132 = por %p130, %p131
      %p133 = scmp.ne.s32.totalorder %s125, %s128
      %p134 = scmp.eq.s32.totalorder %s25, 0
      %p135 = por %p133, %p134
      %p136 = scmp.ne.s32.totalorder %s125, %s128
      %p137 = scmp.eq.s32.totalorder %s30, 1
      %p138 = por %p136, %p137
      %p139 = scmp.ne.s32.totalorder %s128, %s129
      %p140 = scmp.eq.s32.totalorder %s30, 0
      %p141 = por %p139, %p140
      %p142 = scmp.ne.s32.totalorder %s128, %s129
      %p143 = scmp.eq.s32.totalorder %s31, 1
      %p144 = por %p142, %p143
      %p146 = scmp.ne.s32.totalorder %s129, %s145
      %p147 = scmp.eq.s32.totalorder %s31, 0
      %p148 = por %p146, %p147
      %s149 = ssub.s32 %s33, %s40
      %p150 = scmp.eq.s32.totalorder %s149, 0
      %s152 = sadd.s32 %s151, 1
      %s153 = scalar_select %p150, %s151, %s152
      %p156 = pneg %p150
      %p157 = scmp.eq.s32.totalorder %s25, 1
      %p158 = por %p156, %p157
      %p159 = scmp.ne.s32.totalorder %s151, %s154
      %p160 = scmp.eq.s32.totalorder %s25, 0
      %p161 = por %p159, %p160
      %p162 = scmp.ne.s32.totalorder %s151, %s154
      %p163 = scmp.eq.s32.totalorder %s30, 1
      %p164 = por %p162, %p163
      %p165 = scmp.ne.s32.totalorder %s154, %s155
      %p166 = scmp.eq.s32.totalorder %s30, 0
      %p167 = por %p165, %p166
      %p168 = scmp.ne.s32.totalorder %s154, %s155
      %p169 = scmp.eq.s32.totalorder %s31, 1
      %p170 = por %p168, %p169
      %p172 = scmp.ne.s32.totalorder %s155, %s171
      %p173 = scmp.eq.s32.totalorder %s31, 0
      %p174 = por %p172, %p173
      %s175 = ssub.s32 %s33, %s40
      %p176 = scmp.eq.s32.totalorder %s175, 0
      %s178 = sadd.s32 %s177, 1
      %s179 = scalar_select %p176, %s177, %s178
      %p182 = pneg %p176
      %p183 = scmp.eq.s32.totalorder %s25, 1
      %p184 = por %p182, %p183
      %p185 = scmp.ne.s32.totalorder %s177, %s180
      %p186 = scmp.eq.s32.totalorder %s25, 0
      %p187 = por %p185, %p186
      %p188 = scmp.ne.s32.totalorder %s177, %s180
      %p189 = scmp.eq.s32.totalorder %s30, 1
      %p190 = por %p188, %p189
      %p191 = scmp.ne.s32.totalorder %s180, %s181
      %p192 = scmp.eq.s32.totalorder %s30, 0
      %p193 = por %p191, %p192
      %p194 = scmp.ne.s32.totalorder %s180, %s181
      %p195 = scmp.eq.s32.totalorder %s31, 1
      %p196 = por %p194, %p195
      %p198 = scmp.ne.s32.totalorder %s181, %s197
      %p199 = scmp.eq.s32.totalorder %s31, 0
      %p200 = por %p198, %p199
      %s201 = ssub.s32 %s33, %s40
      %p202 = scmp.eq.s32.totalorder %s201, 0
      %s204 = sadd.s32 %s203, 1
      %s205 = scalar_select %p202, %s203, %s204
      %p208 = pneg %p202
      %p209 = scmp.eq.s32.totalorder %s25, 1
      %p210 = por %p208, %p209
      %p211 = scmp.ne.s32.totalorder %s203, %s206
      %p212 = scmp.eq.s32.totalorder %s25, 0
      %p213 = por %p211, %p212
      %p214 = scmp.ne.s32.totalorder %s203, %s206
      %p215 = scmp.eq.s32.totalorder %s30, 1
      %p216 = por %p214, %p215
      %p217 = scmp.ne.s32.totalorder %s206, %s207
      %p218 = scmp.eq.s32.totalorder %s30, 0
      %p219 = por %p217, %p218
      %p220 = scmp.ne.s32.totalorder %s206, %s207
      %p221 = scmp.eq.s32.totalorder %s31, 1
      %p222 = por %p220, %p221
      %p224 = scmp.ne.s32.totalorder %s207, %s223
      %p225 = scmp.eq.s32.totalorder %s31, 0
      %p226 = por %p224, %p225
      %s227 = ssub.s32 %s33, %s40
      %p228 = scmp.eq.s32.totalorder %s227, 0
      %s230 = sadd.s32 %s229, 1
      %s231 = scalar_select %p228, %s229, %s230
      %p234 = pneg %p228
      %p235 = scmp.eq.s32.totalorder %s25, 1
      %p236 = por %p234, %p235
      %p237 = scmp.ne.s32.totalorder %s229, %s232
      %p238 = scmp.eq.s32.totalorder %s25, 0
      %p239 = por %p237, %p238
      %p240 = scmp.ne.s32.totalorder %s229, %s232
      %p241 = scmp.eq.s32.totalorder %s30, 1
      %p242 = por %p240, %p241
      %p243 = scmp.ne.s32.totalorder %s232, %s233
      %p244 = scmp.eq.s32.totalorder %s30, 0
      %p245 = por %p243, %p244
      %p246 = scmp.ne.s32.totalorder %s232, %s233
      %p247 = scmp.eq.s32.totalorder %s31, 1
      %p248 = por %p246, %p247
      %p250 = scmp.ne.s32.totalorder %s233, %s249
      %p251 = scmp.eq.s32.totalorder %s31, 0
      %p252 = por %p250, %p251
      %s253 = ssub.s32 %s33, %s40
      %p254 = scmp.eq.s32.totalorder %s253, 0
      %s256 = sadd.s32 %s255, 1
      %s257 = scalar_select %p254, %s255, %s256
      %p260 = pneg %p254
      %p261 = scmp.eq.s32.totalorder %s25, 1
      %p262 = por %p260, %p261
      %p263 = scmp.ne.s32.totalorder %s255, %s258
      %p264 = scmp.eq.s32.totalorder %s25, 0
      %p265 = por %p263, %p264
      %p266 = scmp.ne.s32.totalorder %s255, %s258
      %p267 = scmp.eq.s32.totalorder %s30, 1
      %p268 = por %p266, %p267
      %p269 = scmp.ne.s32.totalorder %s258, %s259
      %p270 = scmp.eq.s32.totalorder %s30, 0
      %p271 = por %p269, %p270
      %p272 = scmp.ne.s32.totalorder %s258, %s259
      %p273 = scmp.eq.s32.totalorder %s31, 1
      %p274 = por %p272, %p273
      %p276 = scmp.ne.s32.totalorder %s259, %s275
      %p277 = scmp.eq.s32.totalorder %s31, 0
      %p278 = por %p276, %p277
      %s279 = ssub.s32 %s33, %s40
      %p280 = scmp.eq.s32.totalorder %s279, 0
      %s282 = sadd.s32 %s281, 1
      %s283 = scalar_select %p280, %s281, %s282
      %p286 = pneg %p280
      %p287 = scmp.eq.s32.totalorder %s25, 1
      %p288 = por %p286, %p287
      %p289 = scmp.ne.s32.totalorder %s281, %s284
      %p290 = scmp.eq.s32.totalorder %s25, 0
      %p291 = por %p289, %p290
      %p292 = scmp.ne.s32.totalorder %s281, %s284
      %p293 = scmp.eq.s32.totalorder %s30, 1
      %p294 = por %p292, %p293
      %p295 = scmp.ne.s32.totalorder %s284, %s285
      %p296 = scmp.eq.s32.totalorder %s30, 0
      %p297 = por %p295, %p296
      %p298 = scmp.ne.s32.totalorder %s284, %s285
      %p299 = scmp.eq.s32.totalorder %s31, 1
      %p300 = por %p298, %p299
      %p302 = scmp.ne.s32.totalorder %s285, %s301
      %p303 = scmp.eq.s32.totalorder %s31, 0
      %p304 = por %p302, %p303
      %s305 = ssub.s32 %s33, %s40
      %p306 = scmp.eq.s32.totalorder %s305, 0
      %s308 = sadd.s32 %s307, 1
      %s309 = scalar_select %p306, %s307, %s308
      %p312 = pneg %p306
      %p313 = scmp.eq.s32.totalorder %s25, 1
      %p314 = por %p312, %p313
      %p315 = scmp.ne.s32.totalorder %s307, %s310
      %p316 = scmp.eq.s32.totalorder %s25, 0
      %p317 = por %p315, %p316
      %p318 = scmp.ne.s32.totalorder %s307, %s310
      %p319 = scmp.eq.s32.totalorder %s30, 1
      %p320 = por %p318, %p319
      %p321 = scmp.ne.s32.totalorder %s310, %s311
      %p322 = scmp.eq.s32.totalorder %s30, 0
      %p323 = por %p321, %p322
      %p324 = scmp.ne.s32.totalorder %s310, %s311
      %p325 = scmp.eq.s32.totalorder %s31, 1
      %p326 = por %p324, %p325
      %p328 = scmp.ne.s32.totalorder %s311, %s327
      %p329 = scmp.eq.s32.totalorder %s31, 0
      %p330 = por %p328, %p329
      %s331 = ssub.s32 %s33, %s40
      %p332 = scmp.eq.s32.totalorder %s331, 0
      %s334 = sadd.s32 %s333, 1
      %s335 = scalar_select %p332, %s333, %s334
      %p338 = pneg %p332
      %p339 = scmp.eq.s32.totalorder %s25, 1
      %p340 = por %p338, %p339
      %p341 = scmp.ne.s32.totalorder %s333, %s336
      %p342 = scmp.eq.s32.totalorder %s25, 0
      %p343 = por %p341, %p342
      %p344 = scmp.ne.s32.totalorder %s333, %s336
      %p345 = scmp.eq.s32.totalorder %s30, 1
      %p346 = por %p344, %p345
      %p347 = scmp.ne.s32.totalorder %s336, %s337
      %p348 = scmp.eq.s32.totalorder %s30, 0
      %p349 = por %p347, %p348
      %p350 = scmp.ne.s32.totalorder %s336, %s337
      %p351 = scmp.eq.s32.totalorder %s31, 1
      %p352 = por %p350, %p351
      %p354 = scmp.ne.s32.totalorder %s337, %s353
      %p355 = scmp.eq.s32.totalorder %s31, 0
      %p356 = por %p354, %p355
      %s357 = ssub.s32 %s33, %s40
      %p358 = scmp.eq.s32.totalorder %s357, 0
      %s360 = sadd.s32 %s359, 1
      %s361 = scalar_select %p358, %s359, %s360
      %p364 = pneg %p358
      %p365 = scmp.eq.s32.totalorder %s25, 1
      %p366 = por %p364, %p365
      %p367 = scmp.ne.s32.totalorder %s359, %s362
      %p368 = scmp.eq.s32.totalorder %s25, 0
      %p369 = por %p367, %p368
      %p370 = scmp.ne.s32.totalorder %s359, %s362
      %p371 = scmp.eq.s32.totalorder %s30, 1
      %p372 = por %p370, %p371
      %p373 = scmp.ne.s32.totalorder %s362, %s363
      %p374 = scmp.eq.s32.totalorder %s30, 0
      %p375 = por %p373, %p374
      %p376 = scmp.ne.s32.totalorder %s362, %s363
      %p377 = scmp.eq.s32.totalorder %s31, 1
      %p378 = por %p376, %p377
      %p380 = scmp.ne.s32.totalorder %s363, %s379
      %p381 = scmp.eq.s32.totalorder %s31, 0
      %p382 = por %p380, %p381
      %s384 = sadd.s32 %s383, 1
      %p387 = scmp.eq.s32.totalorder %s25, 1
      %p388 = scmp.ne.s32.totalorder %s383, %s385
      %p389 = scmp.eq.s32.totalorder %s25, 0
      %p390 = por %p388, %p389
      %p391 = scmp.ne.s32.totalorder %s383, %s385
      %p392 = scmp.eq.s32.totalorder %s30, 1
      %p393 = por %p391, %p392
      %p394 = scmp.ne.s32.totalorder %s385, %s386
      %p395 = scmp.eq.s32.totalorder %s30, 0
      %p396 = por %p394, %p395
      %p397 = scmp.ne.s32.totalorder %s385, %s386
      %p398 = scmp.eq.s32.totalorder %s31, 1
      %p399 = por %p397, %p398
      %p401 = scmp.ne.s32.totalorder %s386, %s400
      %p402 = scmp.eq.s32.totalorder %s31, 0
      %p403 = por %p401, %p402
      %s405 = sadd.s32 %s404, 1
      %p408 = scmp.eq.s32.totalorder %s25, 1
      %p409 = scmp.ne.s32.totalorder %s404, %s406
      %p410 = scmp.eq.s32.totalorder %s25, 0
      %p411 = por %p409, %p410
      %p412 = scmp.ne.s32.totalorder %s404, %s406
      %p413 = scmp.eq.s32.totalorder %s30, 1
      %p414 = por %p412, %p413
      %p415 = scmp.ne.s32.totalorder %s406, %s407
      %p416 = scmp.eq.s32.totalorder %s30, 0
      %p417 = por %p415, %p416
      %p418 = scmp.ne.s32.totalorder %s406, %s407
      %p419 = scmp.eq.s32.totalorder %s31, 1
      %p420 = por %p418, %p419
      %p422 = scmp.ne.s32.totalorder %s407, %s421
      %p423 = scmp.eq.s32.totalorder %s31, 0
      %p424 = por %p422, %p423
      %s425 = ssub.s32 %s32, %s44
      %p426 = scmp.eq.s32.totalorder %s425, 0
      %s428 = sadd.s32 %s427, 1
      %s429 = scalar_select %p426, %s427, %s428
      %p432 = pneg %p426
      %p433 = scmp.eq.s32.totalorder %s25, 1
      %p434 = por %p432, %p433
      %p435 = scmp.ne.s32.totalorder %s427, %s430
      %p436 = scmp.eq.s32.totalorder %s25, 0
      %p437 = por %p435, %p436
      %p438 = scmp.ne.s32.totalorder %s427, %s430
      %p439 = scmp.eq.s32.totalorder %s30, 1
      %p440 = por %p438, %p439
      %p441 = scmp.ne.s32.totalorder %s430, %s431
      %p442 = scmp.eq.s32.totalorder %s30, 0
      %p443 = por %p441, %p442
      %p444 = scmp.ne.s32.totalorder %s430, %s431
      %p445 = scmp.eq.s32.totalorder %s31, 1
      %p446 = por %p444, %p445
      %p448 = scmp.ne.s32.totalorder %s431, %s447
      %p449 = scmp.eq.s32.totalorder %s31, 0
      %p450 = por %p448, %p449
      %p451 = scmp.le.s32.totalorder 1, %s25
      %p452 = scmp.lt.s32.totalorder %s25, 3
      %p453 = pnand %p451, %p452
      %p454 = pneg %p453
      // Predicated region
      $region9: #{tpu_custom_call.1} parent=5 // pred_check
        _
      $region10: #{tpu_custom_call.1} parent=5 // pred_check_branch
        %456 = sbr.rel (%p453) target = $region12
      $region11: #{tpu_custom_call.1} parent=5 // pred_region
        %s457 = ssub.s32 %s25, 1
        // Predicated region
        $region13: #{tpu_custom_call.1} parent=11 // pred_check
          %p458 = pneg %p63
        $region14: #{tpu_custom_call.1} parent=11 // pred_check_branch
          %460 = sbr.rel (%p458) target = $region16
        $region15: #{tpu_custom_call.1} parent=11 // pred_region
          %s461 = smul.u32 2, %s34
          %p462 = scmp.lt.s32.totalorder %s461, 1
          %s463 = scalar_select %p462, %s461, 1
          %s464 = smul.addr %s463, 2
          %s465 = smul.addr %s464, 8
          %s466 = scalar_lea.vmem %s0, %s465
          %s467 = smul.u32 2, %s34
        $region16: #{tpu_custom_call.1} parent=11 // pred_fallthru
          _
        // Predicated region
        $region17: #{tpu_custom_call.1} parent=11 // pred_check
          %p468 = pneg %p396
        $region18: #{tpu_custom_call.1} parent=11 // pred_check_branch
          %470 = sbr.rel (%p468) target = $region20
        $region19: #{tpu_custom_call.1} parent=11 // pred_region
          _
        $region20: #{tpu_custom_call.1} parent=11 // pred_fallthru
          _
        // Predicated region
        $region21: #{tpu_custom_call.1} parent=11 // pred_check
          %p471 = pneg %p417
        $region22: #{tpu_custom_call.1} parent=11 // pred_check_branch
          %473 = sbr.rel (%p471) target = $region24
        $region23: #{tpu_custom_call.1} parent=11 // pred_region
          _
        $region24: #{tpu_custom_call.1} parent=11 // pred_fallthru
          _
      $region12: #{tpu_custom_call.1} parent=5 // pred_fallthru
        _
      %p474 = scmp.lt.s32.totalorder %s25, 2
      // Predicated region
      $region25: #{tpu_custom_call.1} parent=5 // pred_check
        %p475 = pneg %p474
      $region26: #{tpu_custom_call.1} parent=5 // pred_check_branch
        %477 = sbr.rel (%p475) target = $region28
      $region27: #{tpu_custom_call.1} parent=5 // pred_region
        // Predicated region
        $region29: #{tpu_custom_call.1} parent=27 // pred_check
          %p478 = pneg %p83
        $region30: #{tpu_custom_call.1} parent=27 // pred_check_branch
          %480 = sbr.rel (%p478) target = $region32
        $region31: #{tpu_custom_call.1} parent=27 // pred_region
          %p481 = scmp.lt.s32.totalorder %s33, 1
          %s482 = scalar_select %p481, %s33, 1
          %s483 = smul.addr %s482, 4
          %s484 = smul.addr %s483, 4
          %s485 = scalar_lea.vmem %s1, %s484
        $region32: #{tpu_custom_call.1} parent=27 // pred_fallthru
          _
        // Predicated region
        $region33: #{tpu_custom_call.1} parent=27 // pred_check
          %p486 = pneg %p109
        $region34: #{tpu_custom_call.1} parent=27 // pred_check_branch
          %488 = sbr.rel (%p486) target = $region36
        $region35: #{tpu_custom_call.1} parent=27 // pred_region
          %p489 = scmp.lt.s32.totalorder %s33, 1
          %s490 = scalar_select %p489, %s33, 1
          %s491 = scalar_lea.vmem %s2, %s490
        $region36: #{tpu_custom_call.1} parent=27 // pred_fallthru
          _
        // Predicated region
        $region37: #{tpu_custom_call.1} parent=27 // pred_check
          %p492 = pneg %p135
        $region38: #{tpu_custom_call.1} parent=27 // pred_check_branch
          %494 = sbr.rel (%p492) target = $region40
        $region39: #{tpu_custom_call.1} parent=27 // pred_region
          %p495 = scmp.lt.s32.totalorder %s33, 1
          %s496 = scalar_select %p495, %s33, 1
          %s497 = smul.addr %s496, 4
          %s498 = smul.addr %s497, 4
          %s499 = scalar_lea.vmem %s3, %s498
        $region40: #{tpu_custom_call.1} parent=27 // pred_fallthru
          _
        // Predicated region
        $region41: #{tpu_custom_call.1} parent=27 // pred_check
          %p500 = pneg %p161
        $region42: #{tpu_custom_call.1} parent=27 // pred_check_branch
          %502 = sbr.rel (%p500) target = $region44
        $region43: #{tpu_custom_call.1} parent=27 // pred_region
          %p503 = scmp.lt.s32.totalorder %s33, 1
          %s504 = scalar_select %p503, %s33, 1
          %s505 = scalar_lea.vmem %s4, %s504
        $region44: #{tpu_custom_call.1} parent=27 // pred_fallthru
          _
        // Predicated region
        $region45: #{tpu_custom_call.1} parent=27 // pred_check
          %p506 = pneg %p187
        $region46: #{tpu_custom_call.1} parent=27 // pred_check_branch
          %508 = sbr.rel (%p506) target = $region48
        $region47: #{tpu_custom_call.1} parent=27 // pred_region
          %s509 = sand.u32 %s177, 1
          %s510 = scalar_lea.sflag [#allocation4], %s509
          %s511 = sand.u32 %s177, 1
          %s512 = smul.addr %s511, 16
          %s513 = scalar_lea.vmem [#allocation3], %s512
          %s515 = ssub.s32 256, 256
          %516 = vsyncadd %s510, %s515
          %s517 = smul.addr %s33, 4
          %s518 = smul.addr %s517, 64
          %s519 = scalar_lea.hbm %s5, %s518
          %s520 = sshll.u32 %s513, 4
          %s521 = int_to_ptr.vmem [resolvable:$true] %s520
          %526 = dma.hbm_to_vmem [thread:$0]  %s519, 256, %s521, %s510, 64, 64, 4
        $region48: #{tpu_custom_call.1} parent=27 // pred_fallthru
          _
        // Predicated region
        $region49: #{tpu_custom_call.1} parent=27 // pred_check
          %p527 = pneg %p213
        $region50: #{tpu_custom_call.1} parent=27 // pred_check_branch
          %529 = sbr.rel (%p527) target = $region52
        $region51: #{tpu_custom_call.1} parent=27 // pred_region
          %p530 = scmp.lt.s32.totalorder %s33, 1
          %s531 = scalar_select %p530, %s33, 1
          %s532 = scalar_lea.vmem %s6, %s531
        $region52: #{tpu_custom_call.1} parent=27 // pred_fallthru
          _
        // Predicated region
        $region53: #{tpu_custom_call.1} parent=27 // pred_check
          %p533 = pneg %p239
        $region54: #{tpu_custom_call.1} parent=27 // pred_check_branch
          %535 = sbr.rel (%p533) target = $region56
        $region55: #{tpu_custom_call.1} parent=27 // pred_region
          %p536 = scmp.lt.s32.totalorder %s33, 1
          %s537 = scalar_select %p536, %s33, 1
          %s538 = smul.addr %s537, 8
          %s539 = smul.addr %s538, 4
          %s540 = scalar_lea.vmem %s7, %s539
        $region56: #{tpu_custom_call.1} parent=27 // pred_fallthru
          _
        // Predicated region
        $region57: #{tpu_custom_call.1} parent=27 // pred_check
          %p541 = pneg %p265
        $region58: #{tpu_custom_call.1} parent=27 // pred_check_branch
          %543 = sbr.rel (%p541) target = $region60
        $region59: #{tpu_custom_call.1} parent=27 // pred_region
          %p544 = scmp.lt.s32.totalorder %s33, 1
          %s545 = scalar_select %p544, %s33, 1
          %s546 = scalar_lea.vmem %s8, %s545
        $region60: #{tpu_custom_call.1} parent=27 // pred_fallthru
          _
        // Predicated region
        $region61: #{tpu_custom_call.1} parent=27 // pred_check
          %p547 = pneg %p291
        $region62: #{tpu_custom_call.1} parent=27 // pred_check_branch
          %549 = sbr.rel (%p547) target = $region64
        $region63: #{tpu_custom_call.1} parent=27 // pred_region
          %p550 = scmp.lt.s32.totalorder %s33, 1
          %s551 = scalar_select %p550, %s33, 1
          %s552 = scalar_lea.vmem %s9, %s551
        $region64: #{tpu_custom_call.1} parent=27 // pred_fallthru
          _
        // Predicated region
        $region65: #{tpu_custom_call.1} parent=27 // pred_check
          %p553 = pneg %p317
        $region66: #{tpu_custom_call.1} parent=27 // pred_check_branch
          %555 = sbr.rel (%p553) target = $region68
        $region67: #{tpu_custom_call.1} parent=27 // pred_region
          %p556 = scmp.lt.s32.totalorder %s33, 1
          %s557 = scalar_select %p556, %s33, 1
          %s558 = scalar_lea.vmem %s10, %s557
        $region68: #{tpu_custom_call.1} parent=27 // pred_fallthru
          _
        // Predicated region
        $region69: #{tpu_custom_call.1} parent=27 // pred_check
          %p559 = pneg %p343
        $region70: #{tpu_custom_call.1} parent=27 // pred_check_branch
          %561 = sbr.rel (%p559) target = $region72
        $region71: #{tpu_custom_call.1} parent=27 // pred_region
          %p562 = scmp.lt.s32.totalorder %s33, 1
          %s563 = scalar_select %p562, %s33, 1
          %s564 = scalar_lea.vmem %s11, %s563
        $region72: #{tpu_custom_call.1} parent=27 // pred_fallthru
          _
        // Predicated region
        $region73: #{tpu_custom_call.1} parent=27 // pred_check
          %p565 = pneg %p369
        $region74: #{tpu_custom_call.1} parent=27 // pred_check_branch
          %567 = sbr.rel (%p565) target = $region76
        $region75: #{tpu_custom_call.1} parent=27 // pred_region
          %p568 = scmp.lt.s32.totalorder %s33, 1
          %s569 = scalar_select %p568, %s33, 1
          %s570 = scalar_lea.vmem %s12, %s569
        $region76: #{tpu_custom_call.1} parent=27 // pred_fallthru
          _
      $region28: #{tpu_custom_call.1} parent=5 // pred_fallthru
        _
      %p571 = scmp.le.s32.totalorder 1, %s25
      %p572 = scmp.lt.s32.totalorder %s25, 3
      %p573 = pnand %p571, %p572
      %p574 = pneg %p573
      // Predicated region
      $region77: #{tpu_custom_call.1} parent=5 // pred_check
        _
      $region78: #{tpu_custom_call.1} parent=5 // pred_check_branch
        %576 = sbr.rel (%p573) target = $region80
      $region79: #{tpu_custom_call.1} parent=5 // pred_region
        %s577 = ssub.s32 %s25, 1
        %s578 = sand.u32 %s180, 1
        %s579 = scalar_lea.sflag [#allocation4], %s578
        %s580 = sand.u32 %s180, 1
        %s581 = smul.addr %s580, 16
        %s582 = scalar_lea.vmem [#allocation3], %s581
        // Predicated region
        $region81: #{tpu_custom_call.1} parent=79 // pred_check
          %p583 = pneg %p193
        $region82: #{tpu_custom_call.1} parent=79 // pred_check_branch
          %585 = sbr.rel (%p583) target = $region84
        $region83: #{tpu_custom_call.1} parent=79 // pred_region
          %586 = dma.done %s579, 256
        $region84: #{tpu_custom_call.1} parent=79 // pred_fallthru
          _
        %s587 = smul.u32 2, %s34
        %p588 = scmp.lt.s32.totalorder %s587, 1
        %s589 = scalar_select %p588, %s587, 1
        %s590 = smul.addr %s589, 2
        %s591 = smul.addr %s590, 8
        %s592 = scalar_lea.vmem %s0, %s591
        %p593 = pneg %p63
        %p594 = pneg %p60
        %p595 = scmp.lt.s32.totalorder %s35, 1
        %s596 = scalar_select %p595, %s35, 1
        %s597 = smul.addr %s596, 4
        %s598 = smul.addr %s597, 4
        %s599 = scalar_lea.vmem %s1, %s598
        %p600 = pneg %p89
        %p601 = pneg %p86
        %p602 = scmp.lt.s32.totalorder %s35, 1
        %s603 = scalar_select %p602, %s35, 1
        %s604 = scalar_lea.vmem %s2, %s603
        %p605 = pneg %p115
        %p606 = pneg %p112
        %p607 = scmp.lt.s32.totalorder %s35, 1
        %s608 = scalar_select %p607, %s35, 1
        %s609 = smul.addr %s608, 4
        %s610 = smul.addr %s609, 4
        %s611 = scalar_lea.vmem %s3, %s610
        %p612 = pneg %p141
        %p613 = pneg %p138
        %p614 = scmp.lt.s32.totalorder %s35, 1
        %s615 = scalar_select %p614, %s35, 1
        %s616 = scalar_lea.vmem %s4, %s615
        %p617 = pneg %p167
        %p618 = pneg %p164
        %s619 = sand.u32 %s180, 1
        %s620 = scalar_lea.sflag [#allocation4], %s619
        %s621 = sand.u32 %s180, 1
        %s622 = smul.addr %s621, 16
        %s623 = scalar_lea.vmem [#allocation3], %s622
        %p624 = pneg %p193
        %p625 = pneg %p190
        %p626 = scmp.lt.s32.totalorder %s35, 1
        %s627 = scalar_select %p626, %s35, 1
        %s628 = scalar_lea.vmem %s6, %s627
        %p629 = pneg %p219
        %p630 = pneg %p216
        %p631 = scmp.lt.s32.totalorder %s35, 1
        %s632 = scalar_select %p631, %s35, 1
        %s633 = smul.addr %s632, 8
        %s634 = smul.addr %s633, 4
        %s635 = scalar_lea.vmem %s7, %s634
        %p636 = pneg %p245
        %p637 = pneg %p242
        %p638 = scmp.lt.s32.totalorder %s35, 1
        %s639 = scalar_select %p638, %s35, 1
        %s640 = scalar_lea.vmem %s8, %s639
        %p641 = pneg %p271
        %p642 = pneg %p268
        %p643 = scmp.lt.s32.totalorder %s35, 1
        %s644 = scalar_select %p643, %s35, 1
        %s645 = scalar_lea.vmem %s9, %s644
        %p646 = pneg %p297
        %p647 = pneg %p294
        %p648 = scmp.lt.s32.totalorder %s35, 1
        %s649 = scalar_select %p648, %s35, 1
        %s650 = scalar_lea.vmem %s10, %s649
        %p651 = pneg %p323
        %p652 = pneg %p320
        %p653 = scmp.lt.s32.totalorder %s35, 1
        %s654 = scalar_select %p653, %s35, 1
        %s655 = scalar_lea.vmem %s11, %s654
        %p656 = pneg %p349
        %p657 = pneg %p346
        %p658 = scmp.lt.s32.totalorder %s35, 1
        %s659 = scalar_select %p658, %s35, 1
        %s660 = scalar_lea.vmem %s12, %s659
        %p661 = pneg %p375
        %p662 = pneg %p372
        %p663 = pneg %p396
        %p664 = pneg %p393
        %p665 = pneg %p417
        %p666 = pneg %p414
        %p667 = pneg %p443
        %p668 = pneg %p440
        %s669 = smul.u32 2, %s34
        %p670 = scmp.lt.s32.totalorder %s669, 1
        %s671 = scalar_select %p670, %s669, 1
        %s672 = smul.addr %s671, 2
        %s673 = smul.addr %s672, 8
        %s674 = scalar_lea.vmem %s0, %s673
        %s675 = smul.u32 2, %s34
        %p676 = scmp.lt.s32.totalorder %s35, 1
        %s677 = scalar_select %p676, %s35, 1
        %s678 = smul.addr %s677, 4
        %s679 = smul.addr %s678, 4
        %s680 = scalar_lea.vmem %s1, %s679
        %p681 = scmp.lt.s32.totalorder %s35, 1
        %s682 = scalar_select %p681, %s35, 1
        %s683 = scalar_lea.vmem %s2, %s682
        %p684 = scmp.lt.s32.totalorder %s35, 1
        %s685 = scalar_select %p684, %s35, 1
        %s686 = smul.addr %s685, 4
        %s687 = smul.addr %s686, 4
        %s688 = scalar_lea.vmem %s3, %s687
        %p689 = scmp.lt.s32.totalorder %s35, 1
        %s690 = scalar_select %p689, %s35, 1
        %s691 = scalar_lea.vmem %s4, %s690
        %p692 = scmp.lt.s32.totalorder %s35, 1
        %s693 = scalar_select %p692, %s35, 1
        %s694 = scalar_lea.vmem %s6, %s693
        %p695 = scmp.lt.s32.totalorder %s35, 1
        %s696 = scalar_select %p695, %s35, 1
        %s697 = smul.addr %s696, 8
        %s698 = smul.addr %s697, 4
        %s699 = scalar_lea.vmem %s7, %s698
        %p700 = scmp.lt.s32.totalorder %s35, 1
        %s701 = scalar_select %p700, %s35, 1
        %s702 = scalar_lea.vmem %s8, %s701
        %p703 = scmp.lt.s32.totalorder %s35, 1
        %s704 = scalar_select %p703, %s35, 1
        %s705 = scalar_lea.vmem %s9, %s704
        %p706 = scmp.lt.s32.totalorder %s35, 1
        %s707 = scalar_select %p706, %s35, 1
        %s708 = scalar_lea.vmem %s10, %s707
        %p709 = scmp.lt.s32.totalorder %s35, 1
        %s710 = scalar_select %p709, %s35, 1
        %s711 = scalar_lea.vmem %s11, %s710
        %p712 = scmp.lt.s32.totalorder %s35, 1
        %s713 = scalar_select %p712, %s35, 1
        %s714 = scalar_lea.vmem %s12, %s713
        %s715 = smul.u32 2, %s34
        %p717 = scmp.eq.s32.totalorder %s35, 0
        // Predicated region
        $region85: #{tpu_custom_call.1} parent=79 // pred_check
          %p718 = pneg %p717
        $region86: #{tpu_custom_call.1} parent=79 // pred_check_branch
          %720 = sbr.rel (%p718) target = $region88
        $region87: #{tpu_custom_call.1} parent=79 // pred_region
          %v721 = vld [vmem:[%s674] sm:$0xff]
          %v722 = vld [vmem:[%s674 + $0x8] sm:$0xff]
          %v723 = vld [vmem:[%s674 + $0x10] sm:$0xff]
          %v724 = vld [vmem:[%s674 + $0x18] sm:$0xff]
          %vm725 = vcmask 261120
          %726 = vst.msk [vmem:[#allocation2] sm:$0xff] %vm725, %v721
          %727 = vst.msk [vmem:[#allocation2 + $0x8] sm:$0xff] %vm725, %v722
          %728 = vst.msk [vmem:[#allocation2 + $0x10] sm:$0xff] %vm725, %v723
          %729 = vst.msk [vmem:[#allocation2 + $0x18] sm:$0xff] %vm725, %v724
        $region88: #{tpu_custom_call.1} parent=79 // pred_fallthru
          _
        %v730 = vld [vmem:[#allocation2] sm:$0xff]
        %v731 = vld [vmem:[#allocation2 + $0x8] sm:$0xff]
        %v732 = vld [vmem:[#allocation2 + $0x10] sm:$0xff]
        %v733 = vld [vmem:[#allocation2 + $0x18] sm:$0xff]
        %v734 = vld [vmem:[%s705] sm:$0x1]
        %v735 = vld [vmem:[%s708] sm:$0x1]
        %vm736 = vcmask 261120
        %v737 = vsel %vm736, %v730, 0.0
        %738 = vadd.xlane.f32.xlu0 %v737
        %v739 = vpop.xlane.xlu0 %738
        %v740 = vsel %vm736, %v731, 0.0
        %741 = vadd.xlane.f32.xlu0 %v740
        %v742 = vpop.xlane.xlu0 %741
        %v743 = vsel %vm736, %v732, 0.0
        %744 = vadd.xlane.f32.xlu0 %v743
        %v745 = vpop.xlane.xlu0 %744
        %v746 = vsel %vm736, %v733, 0.0
        %747 = vadd.xlane.f32.xlu0 %v746
        %v748 = vpop.xlane.xlu0 %747
        %v749 = vrcp.pop 32.0
        %v750 = vmul.f32 %v739, %v749
        %v751 = vmul.f32 %v742, %v749
        %v752 = vmul.f32 %v745, %v749
        %v753 = vmul.f32 %v748, %v749
        %v754 = vsub.f32 %v730, %v750
        %v755 = vsub.f32 %v731, %v751
        %v756 = vsub.f32 %v732, %v752
        %v757 = vsub.f32 %v733, %v753
        %v758 = vmul.f32 %v754, %v754
        %v759 = vmul.f32 %v755, %v755
        %v760 = vmul.f32 %v756, %v756
        %v761 = vmul.f32 %v757, %v757
        %v762 = vsel %vm736, %v758, 0.0
        %763 = vadd.xlane.f32.xlu0 %v762
        %v764 = vpop.xlane.xlu0 %763
        %v765 = vsel %vm736, %v759, 0.0
        %766 = vadd.xlane.f32.xlu0 %v765
        %v767 = vpop.xlane.xlu0 %766
        %v768 = vsel %vm736, %v760, 0.0
        %769 = vadd.xlane.f32.xlu0 %v768
        %v770 = vpop.xlane.xlu0 %769
        %v771 = vsel %vm736, %v761, 0.0
        %772 = vadd.xlane.f32.xlu0 %v771
        %v773 = vpop.xlane.xlu0 %772
        %v774 = vmul.f32 %v764, %v749
        %v775 = vmul.f32 %v767, %v749
        %v776 = vmul.f32 %v770, %v749
        %v777 = vmul.f32 %v773, %v749
        %v778 = vadd.f32 %v774, 1e-05
        %v779 = vadd.f32 %v775, 1e-05
        %v780 = vadd.f32 %v776, 1e-05
        %v781 = vadd.f32 %v777, 1e-05
        %v782 = vrsqrt.pop %v778
        %v783 = vrsqrt.pop %v779
        %v784 = vrsqrt.pop %v780
        %v785 = vrsqrt.pop %v781
        %v786 = vmul.f32 %v754, %v782
        %v787 = vmul.f32 %v755, %v783
        %v788 = vmul.f32 %v756, %v784
        %v789 = vmul.f32 %v757, %v785
        %v791 = vlaneseq
        %v792 = vshrl.u32 %v791, 7
        %v793 = vsub.s32 0, %v792
        %v794 = vrot.slane %v734, %v793
        %v796 = vmul.f32 %v786, %v794
        %v797 = vmul.f32 %v787, %v794
        %v798 = vmul.f32 %v788, %v794
        %v799 = vmul.f32 %v789, %v794
        %v801 = vlaneseq
        %v802 = vshrl.u32 %v801, 7
        %v803 = vsub.s32 0, %v802
        %v804 = vrot.slane %v735, %v803
        %v806 = vadd.f32 %v796, %v804
        %v807 = vadd.f32 %v797, %v804
        %v808 = vadd.f32 %v798, %v804
        %v809 = vadd.f32 %v799, %v804
        %v810 = vpack.c.bf16 %v807, %v806
        %v811 = vpack.c.bf16 %v809, %v808
        %v812 = vld [vmem:[%s680] sm:$0xf]
        %v813 = vld [vmem:[%s680 + $0x4] sm:$0xf]
        %v814 = vld [vmem:[%s680 + $0x8] sm:$0xf]
        %v815 = vld [vmem:[%s680 + $0xc] sm:$0xf]
        %v816 = vld [vmem:[%s683] sm:$0x1]
        %v818 = vlaneseq
        %v819 = vshrl.u32 %v818, 7
        %v820 = vsub.s32 0, %v819
        %v821 = vrot.slane %v816, %v820
        %v827 = vunpack.c.l.b16 %v812
        %v828 = vunpack.c.l.b16 %v813
        %v829 = vunpack.c.l.b16 %v814
        %v830 = vunpack.c.l.b16 %v815
        %v831 = vpack.c.b16 %v828, %v827
        %v832 = vpack.c.b16 %v830, %v829
        %v836 = vsel %vm736, %v810, 0
        %v839 = vsel %vm736, %v811, 0
        %841 = vmatprep.subr.bf16.mxu0 0
        %842 = vmatpush1.bf16.msra.mxu0 0
        %843 = vmatprep.subr.bf16.mxu0 0
        %844 = vmatpush1.bf16.msra.mxu0 0
        %845 = vmatprep.subr.bf16.mxu0 0
        %846 = vmatpush1.bf16.msra.mxu0 0
        %847 = vmatprep.subr.bf16.mxu0 0
        %848 = vmatpush1.bf16.msra.mxu0 0
        %849 = vmatprep.subr.bf16.mxu0 0
        %850 = vmatpush1.bf16.msra.mxu0 0
        %851 = vmatprep.subr.bf16.mxu0 0
        %852 = vmatpush1.bf16.msra.mxu0 0
        %853 = vmatprep.subr.bf16.mxu0 0
        %854 = vmatpush1.bf16.msra.mxu0 %v832
        %855 = vmatprep.subr.bf16.mxu0 0
        %856 = vmatpush1.bf16.msra.mxu0 %v831
        %857 = vmatprep.subr.bf16.mxu0 0
        %858 = vmatpush2.bf16.msra.mxu0 0
        %859 = vmatprep.subr.bf16.mxu0 0
        %860 = vmatpush2.bf16.msra.mxu0 0
        %861 = vmatprep.subr.bf16.mxu0 0
        %862 = vmatpush2.bf16.msra.mxu0 0
        %863 = vmatprep.subr.bf16.mxu0 0
        %864 = vmatpush2.bf16.msra.mxu0 0
        %865 = vmatprep.subr.bf16.mxu0 0
        %866 = vmatpush2.bf16.msra.mxu0 0
        %867 = vmatprep.subr.bf16.mxu0 0
        %868 = vmatpush2.bf16.msra.mxu0 0
        %869 = vmatprep.subr.bf16.mxu0 0
        %870 = vmatpush2.bf16.msra.mxu0 0
        %871 = vmatprep.subr.bf16.mxu0 0
        %872 = vmatpush2.bf16.msra.mxu0 0
        %873 = vmatprep.mubr.bf16.mxu0 0
        %874 = vmatmul.mubr.bf16.gmra.mxu0 %v836
        %v875 = vpop.f32.mrf.mxu0
        %v876 = vadd.f32 %v821, %v875
        %v877 = vpop.f32.mrf.mxu0
        %v878 = vpop.f32.mrf.mxu0
        %v879 = vadd.f32 %v821, %v878
        %v880 = vpop.f32.mrf.mxu0
        %881 = vmatprep.mubr.bf16.mxu0 0
        %882 = vmatmul.mubr.bf16.gmra.mxu0 %v839
        %v883 = vpop.f32.mrf.mxu0
        %v884 = vadd.f32 %v821, %v883
        %v885 = vpop.f32.mrf.mxu0
        %v886 = vpop.f32.mrf.mxu0
        %v887 = vadd.f32 %v821, %v886
        %v888 = vpop.f32.mrf.mxu0
        %889 = vdwg.mxu0
        %v890 = vld [vmem:[%s688] sm:$0xf]
        %v891 = vld [vmem:[%s688 + $0x4] sm:$0xf]
        %v892 = vld [vmem:[%s688 + $0x8] sm:$0xf]
        %v893 = vld [vmem:[%s688 + $0xc] sm:$0xf]
        %v894 = vld [vmem:[%s691] sm:$0x1]
        %v895 = vpack.c.bf16 %v879, %v876
        %v896 = vpack.c.bf16 %v887, %v884
        %898 = vrot.lane.b32.xlu0 %v895, 96
        %v899 = vpop.permute.xlu0 %898
        %vm900 = vcmask 64512
        %v902 = vsel %vm900, %v895, 0
        %v905 = vsel %vm900, %v899, 0
        %907 = vmatprep.subr.bf16.mxu0 0
        %908 = vmatpush1.bf16.xpose.msra.mxu0 0
        %909 = vmatprep.subr.bf16.mxu0 0
        %910 = vmatpush1.bf16.xpose.msra.mxu0 0
        %911 = vmatprep.subr.bf16.mxu0 0
        %912 = vmatpush1.bf16.xpose.msra.mxu0 0
        %913 = vmatprep.subr.bf16.mxu0 0
        %914 = vmatpush1.bf16.xpose.msra.mxu0 0
        %915 = vmatprep.subr.bf16.mxu0 0
        %916 = vmatpush1.bf16.xpose.msra.mxu0 0
        %917 = vmatprep.subr.bf16.mxu0 0
        %918 = vmatpush1.bf16.xpose.msra.mxu0 0
        %919 = vmatprep.subr.bf16.mxu0 0
        %920 = vmatpush1.bf16.xpose.msra.mxu0 0
        %921 = vmatprep.subr.bf16.mxu0 0
        %922 = vmatpush1.bf16.xpose.msra.mxu0 %v905
        %923 = vmatprep.subr.bf16.mxu0 0
        %924 = vmatpush2.bf16.xpose.msra.mxu0 0
        %925 = vmatprep.subr.bf16.mxu0 0
        %926 = vmatpush2.bf16.xpose.msra.mxu0 0
        %927 = vmatprep.subr.bf16.mxu0 0
        %928 = vmatpush2.bf16.xpose.msra.mxu0 0
        %929 = vmatprep.subr.bf16.mxu0 0
        %930 = vmatpush2.bf16.xpose.msra.mxu0 0
        %931 = vmatprep.subr.bf16.mxu0 0
        %932 = vmatpush2.bf16.xpose.msra.mxu0 0
        %933 = vmatprep.subr.bf16.mxu0 0
        %934 = vmatpush2.bf16.xpose.msra.mxu0 0
        %935 = vmatprep.subr.bf16.mxu0 0
        %936 = vmatpush2.bf16.xpose.msra.mxu0 0
        %937 = vmatprep.subr.bf16.mxu0 0
        %938 = vmatpush2.bf16.xpose.msra.mxu0 0
        %939 = vmatprep.mubr.bf16.mxu0 0
        %940 = vmatmul.mubr.bf16.gmra.mxu0 %v902
        %v941 = vpop.f32.mrf.mxu0
        %v942 = vadd.f32 0.0, %v941
        %v943 = vpop.f32.mrf.mxu0
        %v944 = vpop.f32.mrf.mxu0
        %v945 = vadd.f32 0.0, %v944
        %v946 = vpop.f32.mrf.mxu0
        %947 = vdwg.mxu0
        %949 = vrot.lane.b32.xlu0 %v896, 96
        %v950 = vpop.permute.xlu0 %949
        %v952 = vsel %vm900, %v896, 0
        %v955 = vsel %vm900, %v950, 0
        %957 = vmatprep.subr.bf16.mxu0 0
        %958 = vmatpush1.bf16.xpose.msra.mxu0 0
        %959 = vmatprep.subr.bf16.mxu0 0
        %960 = vmatpush1.bf16.xpose.msra.mxu0 0
        %961 = vmatprep.subr.bf16.mxu0 0
        %962 = vmatpush1.bf16.xpose.msra.mxu0 0
        %963 = vmatprep.subr.bf16.mxu0 0
        %964 = vmatpush1.bf16.xpose.msra.mxu0 0
        %965 = vmatprep.subr.bf16.mxu0 0
        %966 = vmatpush1.bf16.xpose.msra.mxu0 0
        %967 = vmatprep.subr.bf16.mxu0 0
        %968 = vmatpush1.bf16.xpose.msra.mxu0 0
        %969 = vmatprep.subr.bf16.mxu0 0
        %970 = vmatpush1.bf16.xpose.msra.mxu0 0
        %971 = vmatprep.subr.bf16.mxu0 0
        %972 = vmatpush1.bf16.xpose.msra.mxu0 %v955
        %973 = vmatprep.subr.bf16.mxu0 0
        %974 = vmatpush2.bf16.xpose.msra.mxu0 0
        %975 = vmatprep.subr.bf16.mxu0 0
        %976 = vmatpush2.bf16.xpose.msra.mxu0 0
        %977 = vmatprep.subr.bf16.mxu0 0
        %978 = vmatpush2.bf16.xpose.msra.mxu0 0
        %979 = vmatprep.subr.bf16.mxu0 0
        %980 = vmatpush2.bf16.xpose.msra.mxu0 0
        %981 = vmatprep.subr.bf16.mxu0 0
        %982 = vmatpush2.bf16.xpose.msra.mxu0 0
        %983 = vmatprep.subr.bf16.mxu0 0
        %984 = vmatpush2.bf16.xpose.msra.mxu0 0
        %985 = vmatprep.subr.bf16.mxu0 0
        %986 = vmatpush2.bf16.xpose.msra.mxu0 0
        %987 = vmatprep.subr.bf16.mxu0 0
        %988 = vmatpush2.bf16.xpose.msra.mxu0 0
        %989 = vmatprep.mubr.bf16.mxu0 0
        %990 = vmatmul.mubr.bf16.gmra.mxu0 %v952
        %v991 = vpop.f32.mrf.mxu0
        %v992 = vadd.f32 0.0, %v991
        %v993 = vpop.f32.mrf.mxu0
        %v994 = vpop.f32.mrf.mxu0
        %v995 = vadd.f32 0.0, %v994
        %v996 = vpop.f32.mrf.mxu0
        %997 = vdwg.mxu0
        %vm998 = vcmask 130048
        %v999 = vsel %vm998, %v942, -inf
        %1000 = vmax.xlane.f32.xlu0 %v999
        %v1001 = vpop.xlane.xlu0 %1000
        %v1002 = vsel %vm998, %v945, -inf
        %1003 = vmax.xlane.f32.xlu0 %v1002
        %v1004 = vpop.xlane.xlu0 %1003
        %v1005 = vsel %vm998, %v992, -inf
        %1006 = vmax.xlane.f32.xlu0 %v1005
        %v1007 = vpop.xlane.xlu0 %1006
        %v1008 = vsel %vm998, %v995, -inf
        %1009 = vmax.xlane.f32.xlu0 %v1008
        %v1010 = vpop.xlane.xlu0 %1009
        %v1011 = vsub.f32 %v942, %v1001
        %v1012 = vsub.f32 %v945, %v1004
        %v1013 = vsub.f32 %v992, %v1007
        %v1014 = vsub.f32 %v995, %v1010
        %v1015 = vmul.f32 %v1011, 1.442695
        %v1016 = vpow.pop %v1015
        %v1017 = vmul.f32 %v1012, 1.442695
        %v1018 = vpow.pop %v1017
        %v1019 = vmul.f32 %v1013, 1.442695
        %v1020 = vpow.pop %v1019
        %v1021 = vmul.f32 %v1014, 1.442695
        %v1022 = vpow.pop %v1021
        %v1023 = vsel %vm998, %v1016, 0.0
        %1024 = vadd.xlane.f32.xlu0 %v1023
        %v1025 = vpop.xlane.xlu0 %1024
        %v1026 = vsel %vm998, %v1018, 0.0
        %1027 = vadd.xlane.f32.xlu0 %v1026
        %v1028 = vpop.xlane.xlu0 %1027
        %v1029 = vsel %vm998, %v1020, 0.0
        %1030 = vadd.xlane.f32.xlu0 %v1029
        %v1031 = vpop.xlane.xlu0 %1030
        %v1032 = vsel %vm998, %v1022, 0.0
        %1033 = vadd.xlane.f32.xlu0 %v1032
        %v1034 = vpop.xlane.xlu0 %1033
        %v1035 = vrcp.pop %v1025
        %v1036 = vrcp.pop %v1028
        %v1037 = vrcp.pop %v1031
        %v1038 = vrcp.pop %v1034
        %v1039 = vmul.f32 %v1016, %v1035
        %v1040 = vmul.f32 %v1018, %v1036
        %v1041 = vmul.f32 %v1020, %v1037
        %v1042 = vmul.f32 %v1022, %v1038
        %v1043 = vpack.c.bf16 %v1040, %v1039
        %v1044 = vpack.c.bf16 %v1042, %v1041
        %1045 = vrot.lane.b32.xlu0 %v895, 64
        %v1046 = vpop.permute.xlu0 %1045
        %v1049 = vsel %vm998, %v1043, 0
        %1051 = vmatprep.subr.bf16.mxu0 0
        %1052 = vmatpush1.bf16.msra.mxu0 0
        %1053 = vmatprep.subr.bf16.mxu0 0
        %1054 = vmatpush1.bf16.msra.mxu0 0
        %1055 = vmatprep.subr.bf16.mxu0 0
        %1056 = vmatpush1.bf16.msra.mxu0 0
        %1057 = vmatprep.subr.bf16.mxu0 0
        %1058 = vmatpush1.bf16.msra.mxu0 0
        %1059 = vmatprep.subr.bf16.mxu0 0
        %1060 = vmatpush1.bf16.msra.mxu0 0
        %1061 = vmatprep.subr.bf16.mxu0 0
        %1062 = vmatpush1.bf16.msra.mxu0 0
        %1063 = vmatprep.subr.bf16.mxu0 0
        %1064 = vmatpush1.bf16.msra.mxu0 0
        %1065 = vmatprep.subr.bf16.mxu0 0
        %1066 = vmatpush1.bf16.msra.mxu0 %v1046
        %1067 = vmatprep.subr.bf16.mxu0 0
        %1068 = vmatpush2.bf16.msra.mxu0 0
        %1069 = vmatprep.subr.bf16.mxu0 0
        %1070 = vmatpush2.bf16.msra.mxu0 0
        %1071 = vmatprep.subr.bf16.mxu0 0
        %1072 = vmatpush2.bf16.msra.mxu0 0
        %1073 = vmatprep.subr.bf16.mxu0 0
        %1074 = vmatpush2.bf16.msra.mxu0 0
        %1075 = vmatprep.subr.bf16.mxu0 0
        %1076 = vmatpush2.bf16.msra.mxu0 0
        %1077 = vmatprep.subr.bf16.mxu0 0
        %1078 = vmatpush2.bf16.msra.mxu0 0
        %1079 = vmatprep.subr.bf16.mxu0 0
        %1080 = vmatpush2.bf16.msra.mxu0 0
        %1081 = vmatprep.subr.bf16.mxu0 0
        %1082 = vmatpush2.bf16.msra.mxu0 0
        %1083 = vmatprep.mubr.bf16.mxu0 0
        %1084 = vmatmul.mubr.bf16.gmra.mxu0 %v1049
        %v1085 = vpop.f32.mrf.mxu0
        %v1086 = vadd.f32 0.0, %v1085
        %v1087 = vpop.f32.mrf.mxu0
        %v1088 = vpop.f32.mrf.mxu0
        %v1089 = vadd.f32 0.0, %v1088
        %v1090 = vpop.f32.mrf.mxu0
        %1091 = vdwg.mxu0
        %1092 = vrot.lane.b32.xlu0 %v896, 64
        %v1093 = vpop.permute.xlu0 %1092
        %v1096 = vsel %vm998, %v1044, 0
        %1098 = vmatprep.subr.bf16.mxu0 0
        %1099 = vmatpush1.bf16.msra.mxu0 0
        %1100 = vmatprep.subr.bf16.mxu0 0
        %1101 = vmatpush1.bf16.msra.mxu0 0
        %1102 = vmatprep.subr.bf16.mxu0 0
        %1103 = vmatpush1.bf16.msra.mxu0 0
        %1104 = vmatprep.subr.bf16.mxu0 0
        %1105 = vmatpush1.bf16.msra.mxu0 0
        %1106 = vmatprep.subr.bf16.mxu0 0
        %1107 = vmatpush1.bf16.msra.mxu0 0
        %1108 = vmatprep.subr.bf16.mxu0 0
        %1109 = vmatpush1.bf16.msra.mxu0 0
        %1110 = vmatprep.subr.bf16.mxu0 0
        %1111 = vmatpush1.bf16.msra.mxu0 0
        %1112 = vmatprep.subr.bf16.mxu0 0
        %1113 = vmatpush1.bf16.msra.mxu0 %v1093
        %1114 = vmatprep.subr.bf16.mxu0 0
        %1115 = vmatpush2.bf16.msra.mxu0 0
        %1116 = vmatprep.subr.bf16.mxu0 0
        %1117 = vmatpush2.bf16.msra.mxu0 0
        %1118 = vmatprep.subr.bf16.mxu0 0
        %1119 = vmatpush2.bf16.msra.mxu0 0
        %1120 = vmatprep.subr.bf16.mxu0 0
        %1121 = vmatpush2.bf16.msra.mxu0 0
        %1122 = vmatprep.subr.bf16.mxu0 0
        %1123 = vmatpush2.bf16.msra.mxu0 0
        %1124 = vmatprep.subr.bf16.mxu0 0
        %1125 = vmatpush2.bf16.msra.mxu0 0
        %1126 = vmatprep.subr.bf16.mxu0 0
        %1127 = vmatpush2.bf16.msra.mxu0 0
        %1128 = vmatprep.subr.bf16.mxu0 0
        %1129 = vmatpush2.bf16.msra.mxu0 0
        %1130 = vmatprep.mubr.bf16.mxu0 0
        %1131 = vmatmul.mubr.bf16.gmra.mxu0 %v1096
        %v1132 = vpop.f32.mrf.mxu0
        %v1133 = vadd.f32 0.0, %v1132
        %v1134 = vpop.f32.mrf.mxu0
        %v1135 = vpop.f32.mrf.mxu0
        %v1136 = vadd.f32 0.0, %v1135
        %v1137 = vpop.f32.mrf.mxu0
        %1138 = vdwg.mxu0
        %v1139 = vpack.c.bf16 %v1089, %v1086
        %v1140 = vpack.c.bf16 %v1136, %v1133
        %1141 = vrot.lane.b32.xlu0 %v895, 120
        %v1142 = vpop.permute.xlu0 %1141
        %1143 = vrot.lane.b32.xlu0 %v895, 88
        %v1144 = vpop.permute.xlu0 %1143
        %v1146 = vsel %vm900, %v1142, 0
        %v1149 = vsel %vm900, %v1144, 0
        %1151 = vmatprep.subr.bf16.mxu0 0
        %1152 = vmatpush1.bf16.xpose.msra.mxu0 0
        %1153 = vmatprep.subr.bf16.mxu0 0
        %1154 = vmatpush1.bf16.xpose.msra.mxu0 0
        %1155 = vmatprep.subr.bf16.mxu0 0
        %1156 = vmatpush1.bf16.xpose.msra.mxu0 0
        %1157 = vmatprep.subr.bf16.mxu0 0
        %1158 = vmatpush1.bf16.xpose.msra.mxu0 0
        %1159 = vmatprep.subr.bf16.mxu0 0
        %1160 = vmatpush1.bf16.xpose.msra.mxu0 0
        %1161 = vmatprep.subr.bf16.mxu0 0
        %1162 = vmatpush1.bf16.xpose.msra.mxu0 0
        %1163 = vmatprep.subr.bf16.mxu0 0
        %1164 = vmatpush1.bf16.xpose.msra.mxu0 0
        %1165 = vmatprep.subr.bf16.mxu0 0
        %1166 = vmatpush1.bf16.xpose.msra.mxu0 %v1149
        %1167 = vmatprep.subr.bf16.mxu0 0
        %1168 = vmatpush2.bf16.xpose.msra.mxu0 0
        %1169 = vmatprep.subr.bf16.mxu0 0
        %1170 = vmatpush2.bf16.xpose.msra.mxu0 0
        %1171 = vmatprep.subr.bf16.mxu0 0
        %1172 = vmatpush2.bf16.xpose.msra.mxu0 0
        %1173 = vmatprep.subr.bf16.mxu0 0
        %1174 = vmatpush2.bf16.xpose.msra.mxu0 0
        %1175 = vmatprep.subr.bf16.mxu0 0
        %1176 = vmatpush2.bf16.xpose.msra.mxu0 0
        %1177 = vmatprep.subr.bf16.mxu0 0
        %1178 = vmatpush2.bf16.xpose.msra.mxu0 0
        %1179 = vmatprep.subr.bf16.mxu0 0
        %1180 = vmatpush2.bf16.xpose.msra.mxu0 0
        %1181 = vmatprep.subr.bf16.mxu0 0
        %1182 = vmatpush2.bf16.xpose.msra.mxu0 0
        %1183 = vmatprep.mubr.bf16.mxu0 0
        %1184 = vmatmul.mubr.bf16.gmra.mxu0 %v1146
        %v1185 = vpop.f32.mrf.mxu0
        %v1186 = vadd.f32 0.0, %v1185
        %v1187 = vpop.f32.mrf.mxu0
        %v1188 = vpop.f32.mrf.mxu0
        %v1189 = vadd.f32 0.0, %v1188
        %v1190 = vpop.f32.mrf.mxu0
        %1191 = vdwg.mxu0
        %1192 = vrot.lane.b32.xlu0 %v896, 120
        %v1193 = vpop.permute.xlu0 %1192
        %1194 = vrot.lane.b32.xlu0 %v896, 88
        %v1195 = vpop.permute.xlu0 %1194
        %v1197 = vsel %vm900, %v1193, 0
        %v1200 = vsel %vm900, %v1195, 0
        %1202 = vmatprep.subr.bf16.mxu0 0
        %1203 = vmatpush1.bf16.xpose.msra.mxu0 0
        %1204 = vmatprep.subr.bf16.mxu0 0
        %1205 = vmatpush1.bf16.xpose.msra.mxu0 0
        %1206 = vmatprep.subr.bf16.mxu0 0
        %1207 = vmatpush1.bf16.xpose.msra.mxu0 0
        %1208 = vmatprep.subr.bf16.mxu0 0
        %1209 = vmatpush1.bf16.xpose.msra.mxu0 0
        %1210 = vmatprep.subr.bf16.mxu0 0
        %1211 = vmatpush1.bf16.xpose.msra.mxu0 0
        %1212 = vmatprep.subr.bf16.mxu0 0
        %1213 = vmatpush1.bf16.xpose.msra.mxu0 0
        %1214 = vmatprep.subr.bf16.mxu0 0
        %1215 = vmatpush1.bf16.xpose.msra.mxu0 0
        %1216 = vmatprep.subr.bf16.mxu0 0
        %1217 = vmatpush1.bf16.xpose.msra.mxu0 %v1200
        %1218 = vmatprep.subr.bf16.mxu0 0
        %1219 = vmatpush2.bf16.xpose.msra.mxu0 0
        %1220 = vmatprep.subr.bf16.mxu0 0
        %1221 = vmatpush2.bf16.xpose.msra.mxu0 0
        %1222 = vmatprep.subr.bf16.mxu0 0
        %1223 = vmatpush2.bf16.xpose.msra.mxu0 0
        %1224 = vmatprep.subr.bf16.mxu0 0
        %1225 = vmatpush2.bf16.xpose.msra.mxu0 0
        %1226 = vmatprep.subr.bf16.mxu0 0
        %1227 = vmatpush2.bf16.xpose.msra.mxu0 0
        %1228 = vmatprep.subr.bf16.mxu0 0
        %1229 = vmatpush2.bf16.xpose.msra.mxu0 0
        %1230 = vmatprep.subr.bf16.mxu0 0
        %1231 = vmatpush2.bf16.xpose.msra.mxu0 0
        %1232 = vmatprep.subr.bf16.mxu0 0
        %1233 = vmatpush2.bf16.xpose.msra.mxu0 0
        %1234 = vmatprep.mubr.bf16.mxu0 0
        %1235 = vmatmul.mubr.bf16.gmra.mxu0 %v1197
        %v1236 = vpop.f32.mrf.mxu0
        %v1237 = vadd.f32 0.0, %v1236
        %v1238 = vpop.f32.mrf.mxu0
        %v1239 = vpop.f32.mrf.mxu0
        %v1240 = vadd.f32 0.0, %v1239
        %v1241 = vpop.f32.mrf.mxu0
        %1242 = vdwg.mxu0
        %v1243 = vsel %vm998, %v1186, -inf
        %1244 = vmax.xlane.f32.xlu0 %v1243
        %v1245 = vpop.xlane.xlu0 %1244
        %v1246 = vsel %vm998, %v1189, -inf
        %1247 = vmax.xlane.f32.xlu0 %v1246
        %v1248 = vpop.xlane.xlu0 %1247
        %v1249 = vsel %vm998, %v1237, -inf
        %1250 = vmax.xlane.f32.xlu0 %v1249
        %v1251 = vpop.xlane.xlu0 %1250
        %v1252 = vsel %vm998, %v1240, -inf
        %1253 = vmax.xlane.f32.xlu0 %v1252
        %v1254 = vpop.xlane.xlu0 %1253
        %v1255 = vsub.f32 %v1186, %v1245
        %v1256 = vsub.f32 %v1189, %v1248
        %v1257 = vsub.f32 %v1237, %v1251
        %v1258 = vsub.f32 %v1240, %v1254
        %v1259 = vmul.f32 %v1255, 1.442695
        %v1260 = vpow.pop %v1259
        %v1261 = vmul.f32 %v1256, 1.442695
        %v1262 = vpow.pop %v1261
        %v1263 = vmul.f32 %v1257, 1.442695
        %v1264 = vpow.pop %v1263
        %v1265 = vmul.f32 %v1258, 1.442695
        %v1266 = vpow.pop %v1265
        %v1267 = vsel %vm998, %v1260, 0.0
        %1268 = vadd.xlane.f32.xlu0 %v1267
        %v1269 = vpop.xlane.xlu0 %1268
        %v1270 = vsel %vm998, %v1262, 0.0
        %1271 = vadd.xlane.f32.xlu0 %v1270
        %v1272 = vpop.xlane.xlu0 %1271
        %v1273 = vsel %vm998, %v1264, 0.0
        %1274 = vadd.xlane.f32.xlu0 %v1273
        %v1275 = vpop.xlane.xlu0 %1274
        %v1276 = vsel %vm998, %v1266, 0.0
        %1277 = vadd.xlane.f32.xlu0 %v1276
        %v1278 = vpop.xlane.xlu0 %1277
        %v1279 = vrcp.pop %v1269
        %v1280 = vrcp.pop %v1272
        %v1281 = vrcp.pop %v1275
        %v1282 = vrcp.pop %v1278
        %v1283 = vmul.f32 %v1260, %v1279
        %v1284 = vmul.f32 %v1262, %v1280
        %v1285 = vmul.f32 %v1264, %v1281
        %v1286 = vmul.f32 %v1266, %v1282
        %v1287 = vpack.c.bf16 %v1284, %v1283
        %v1288 = vpack.c.bf16 %v1286, %v1285
        %1289 = vrot.lane.b32.xlu0 %v895, 56
        %v1290 = vpop.permute.xlu0 %1289
        %v1293 = vsel %vm998, %v1287, 0
        %1295 = vmatprep.subr.bf16.mxu0 0
        %1296 = vmatpush1.bf16.msra.mxu0 0
        %1297 = vmatprep.subr.bf16.mxu0 0
        %1298 = vmatpush1.bf16.msra.mxu0 0
        %1299 = vmatprep.subr.bf16.mxu0 0
        %1300 = vmatpush1.bf16.msra.mxu0 0
        %1301 = vmatprep.subr.bf16.mxu0 0
        %1302 = vmatpush1.bf16.msra.mxu0 0
        %1303 = vmatprep.subr.bf16.mxu0 0
        %1304 = vmatpush1.bf16.msra.mxu0 0
        %1305 = vmatprep.subr.bf16.mxu0 0
        %1306 = vmatpush1.bf16.msra.mxu0 0
        %1307 = vmatprep.subr.bf16.mxu0 0
        %1308 = vmatpush1.bf16.msra.mxu0 0
        %1309 = vmatprep.subr.bf16.mxu0 0
        %1310 = vmatpush1.bf16.msra.mxu0 %v1290
        %1311 = vmatprep.subr.bf16.mxu0 0
        %1312 = vmatpush2.bf16.msra.mxu0 0
        %1313 = vmatprep.subr.bf16.mxu0 0
        %1314 = vmatpush2.bf16.msra.mxu0 0
        %1315 = vmatprep.subr.bf16.mxu0 0
        %1316 = vmatpush2.bf16.msra.mxu0 0
        %1317 = vmatprep.subr.bf16.mxu0 0
        %1318 = vmatpush2.bf16.msra.mxu0 0
        %1319 = vmatprep.subr.bf16.mxu0 0
        %1320 = vmatpush2.bf16.msra.mxu0 0
        %1321 = vmatprep.subr.bf16.mxu0 0
        %1322 = vmatpush2.bf16.msra.mxu0 0
        %1323 = vmatprep.subr.bf16.mxu0 0
        %1324 = vmatpush2.bf16.msra.mxu0 0
        %1325 = vmatprep.subr.bf16.mxu0 0
        %1326 = vmatpush2.bf16.msra.mxu0 0
        %1327 = vmatprep.mubr.bf16.mxu0 0
        %1328 = vmatmul.mubr.bf16.gmra.mxu0 %v1293
        %v1329 = vpop.f32.mrf.mxu0
        %v1330 = vadd.f32 0.0, %v1329
        %v1331 = vpop.f32.mrf.mxu0
        %v1332 = vpop.f32.mrf.mxu0
        %v1333 = vadd.f32 0.0, %v1332
        %v1334 = vpop.f32.mrf.mxu0
        %1335 = vdwg.mxu0
        %1336 = vrot.lane.b32.xlu0 %v896, 56
        %v1337 = vpop.permute.xlu0 %1336
        %v1340 = vsel %vm998, %v1288, 0
        %1342 = vmatprep.subr.bf16.mxu0 0
        %1343 = vmatpush1.bf16.msra.mxu0 0
        %1344 = vmatprep.subr.bf16.mxu0 0
        %1345 = vmatpush1.bf16.msra.mxu0 0
        %1346 = vmatprep.subr.bf16.mxu0 0
        %1347 = vmatpush1.bf16.msra.mxu0 0
        %1348 = vmatprep.subr.bf16.mxu0 0
        %1349 = vmatpush1.bf16.msra.mxu0 0
        %1350 = vmatprep.subr.bf16.mxu0 0
        %1351 = vmatpush1.bf16.msra.mxu0 0
        %1352 = vmatprep.subr.bf16.mxu0 0
        %1353 = vmatpush1.bf16.msra.mxu0 0
        %1354 = vmatprep.subr.bf16.mxu0 0
        %1355 = vmatpush1.bf16.msra.mxu0 0
        %1356 = vmatprep.subr.bf16.mxu0 0
        %1357 = vmatpush1.bf16.msra.mxu0 %v1337
        %1358 = vmatprep.subr.bf16.mxu0 0
        %1359 = vmatpush2.bf16.msra.mxu0 0
        %1360 = vmatprep.subr.bf16.mxu0 0
        %1361 = vmatpush2.bf16.msra.mxu0 0
        %1362 = vmatprep.subr.bf16.mxu0 0
        %1363 = vmatpush2.bf16.msra.mxu0 0
        %1364 = vmatprep.subr.bf16.mxu0 0
        %1365 = vmatpush2.bf16.msra.mxu0 0
        %1366 = vmatprep.subr.bf16.mxu0 0
        %1367 = vmatpush2.bf16.msra.mxu0 0
        %1368 = vmatprep.subr.bf16.mxu0 0
        %1369 = vmatpush2.bf16.msra.mxu0 0
        %1370 = vmatprep.subr.bf16.mxu0 0
        %1371 = vmatpush2.bf16.msra.mxu0 0
        %1372 = vmatprep.subr.bf16.mxu0 0
        %1373 = vmatpush2.bf16.msra.mxu0 0
        %1374 = vmatprep.mubr.bf16.mxu0 0
        %1375 = vmatmul.mubr.bf16.gmra.mxu0 %v1340
        %v1376 = vpop.f32.mrf.mxu0
        %v1377 = vadd.f32 0.0, %v1376
        %v1378 = vpop.f32.mrf.mxu0
        %v1379 = vpop.f32.mrf.mxu0
        %v1380 = vadd.f32 0.0, %v1379
        %v1381 = vpop.f32.mrf.mxu0
        %1382 = vdwg.mxu0
        %v1383 = vpack.c.bf16 %v1333, %v1330
        %v1384 = vpack.c.bf16 %v1380, %v1377
        %v1386 = vsel %vm900, %v1383, 0
        %v1389 = vsel %vm900, %v1384, 0
        %vm1391 = vcmask 1043456
        %v1393 = vsel %vm1391, %v891, 0
        %1395 = vmatprep.subr.bf16.mxu0 0
        %1396 = vmatpush1.bf16.msra.mxu0 0
        %1397 = vmatprep.subr.bf16.mxu0 0
        %1398 = vmatpush1.bf16.msra.mxu0 0
        %1399 = vmatprep.subr.bf16.mxu0 0
        %1400 = vmatpush1.bf16.msra.mxu0 0
        %1401 = vmatprep.subr.bf16.mxu0 0
        %1402 = vmatpush1.bf16.msra.mxu0 0
        %1403 = vmatprep.subr.bf16.mxu0 0
        %1404 = vmatpush1.bf16.msra.mxu0 0
        %1405 = vmatprep.subr.bf16.mxu0 0
        %1406 = vmatpush1.bf16.msra.mxu0 0
        %1407 = vmatprep.subr.bf16.mxu0 0
        %1408 = vmatpush1.bf16.msra.mxu0 0
        %1409 = vmatprep.subr.bf16.mxu0 0
        %1410 = vmatpush1.bf16.msra.mxu0 %v1393
        %1411 = vmatprep.subr.bf16.mxu0 0
        %1412 = vmatpush2.bf16.msra.mxu0 0
        %1413 = vmatprep.subr.bf16.mxu0 0
        %1414 = vmatpush2.bf16.msra.mxu0 0
        %1415 = vmatprep.subr.bf16.mxu0 0
        %1416 = vmatpush2.bf16.msra.mxu0 0
        %1417 = vmatprep.subr.bf16.mxu0 0
        %1418 = vmatpush2.bf16.msra.mxu0 0
        %1419 = vmatprep.subr.bf16.mxu0 0
        %1420 = vmatpush2.bf16.msra.mxu0 0
        %1421 = vmatprep.subr.bf16.mxu0 0
        %1422 = vmatpush2.bf16.msra.mxu0 0
        %1423 = vmatprep.subr.bf16.mxu0 0
        %1424 = vmatpush2.bf16.msra.mxu0 0
        %1425 = vmatprep.subr.bf16.mxu0 0
        %1426 = vmatpush2.bf16.msra.mxu0 0
        %1427 = vmatprep.mubr.bf16.mxu0 0
        %1428 = vmatmul.mubr.bf16.gmra.mxu0 %v1386
        %v1429 = vpop.f32.mrf.mxu0
        %v1430 = vadd.f32 0.0, %v1429
        %v1431 = vpop.f32.mrf.mxu0
        %v1432 = vpop.f32.mrf.mxu0
        %v1433 = vadd.f32 0.0, %v1432
        %v1434 = vpop.f32.mrf.mxu0
        %1435 = vmatprep.mubr.bf16.mxu0 0
        %1436 = vmatmul.mubr.bf16.gmra.mxu0 %v1389
        %v1437 = vpop.f32.mrf.mxu0
        %v1438 = vadd.f32 0.0, %v1437
        %v1439 = vpop.f32.mrf.mxu0
        %v1440 = vpop.f32.mrf.mxu0
        %v1441 = vadd.f32 0.0, %v1440
        %v1442 = vpop.f32.mrf.mxu0
        %1443 = vdwg.mxu0
        %v1445 = vsel %vm900, %v1139, 0
        %v1448 = vsel %vm900, %v1140, 0
        %v1451 = vsel %vm1391, %v890, 0
        %1453 = vmatprep.subr.bf16.mxu0 0
        %1454 = vmatpush1.bf16.msra.mxu0 0
        %1455 = vmatprep.subr.bf16.mxu0 0
        %1456 = vmatpush1.bf16.msra.mxu0 0
        %1457 = vmatprep.subr.bf16.mxu0 0
        %1458 = vmatpush1.bf16.msra.mxu0 0
        %1459 = vmatprep.subr.bf16.mxu0 0
        %1460 = vmatpush1.bf16.msra.mxu0 0
        %1461 = vmatprep.subr.bf16.mxu0 0
        %1462 = vmatpush1.bf16.msra.mxu0 0
        %1463 = vmatprep.subr.bf16.mxu0 0
        %1464 = vmatpush1.bf16.msra.mxu0 0
        %1465 = vmatprep.subr.bf16.mxu0 0
        %1466 = vmatpush1.bf16.msra.mxu0 0
        %1467 = vmatprep.subr.bf16.mxu0 0
        %1468 = vmatpush1.bf16.msra.mxu0 %v1451
        %1469 = vmatprep.subr.bf16.mxu0 0
        %1470 = vmatpush2.bf16.msra.mxu0 0
        %1471 = vmatprep.subr.bf16.mxu0 0
        %1472 = vmatpush2.bf16.msra.mxu0 0
        %1473 = vmatprep.subr.bf16.mxu0 0
        %1474 = vmatpush2.bf16.msra.mxu0 0
        %1475 = vmatprep.subr.bf16.mxu0 0
        %1476 = vmatpush2.bf16.msra.mxu0 0
        %1477 = vmatprep.subr.bf16.mxu0 0
        %1478 = vmatpush2.bf16.msra.mxu0 0
        %1479 = vmatprep.subr.bf16.mxu0 0
        %1480 = vmatpush2.bf16.msra.mxu0 0
        %1481 = vmatprep.subr.bf16.mxu0 0
        %1482 = vmatpush2.bf16.msra.mxu0 0
        %1483 = vmatprep.subr.bf16.mxu0 0
        %1484 = vmatpush2.bf16.msra.mxu0 0
        %1485 = vmatprep.mubr.bf16.mxu0 0
        %1486 = vmatmul.mubr.bf16.gmra.mxu0 %v1445
        %v1487 = vpop.f32.mrf.mxu0
        %v1488 = vadd.f32 %v1430, %v1487
        %v1489 = vpop.f32.mrf.mxu0
        %v1490 = vpop.f32.mrf.mxu0
        %v1491 = vadd.f32 %v1433, %v1490
        %v1492 = vpop.f32.mrf.mxu0
        %1493 = vmatprep.mubr.bf16.mxu0 0
        %1494 = vmatmul.mubr.bf16.gmra.mxu0 %v1448
        %v1495 = vpop.f32.mrf.mxu0
        %v1496 = vadd.f32 %v1438, %v1495
        %v1497 = vpop.f32.mrf.mxu0
        %v1498 = vpop.f32.mrf.mxu0
        %v1499 = vadd.f32 %v1441, %v1498
        %v1500 = vpop.f32.mrf.mxu0
        %1501 = vdwg.mxu0
        %1502 = vrot.lane.b32.xlu0 %v895, 112
        %v1503 = vpop.permute.xlu0 %1502
        %1504 = vrot.lane.b32.xlu0 %v895, 80
        %v1505 = vpop.permute.xlu0 %1504
        %v1507 = vsel %vm900, %v1503, 0
        %v1510 = vsel %vm900, %v1505, 0
        %1512 = vmatprep.subr.bf16.mxu0 0
        %1513 = vmatpush1.bf16.xpose.msra.mxu0 0
        %1514 = vmatprep.subr.bf16.mxu0 0
        %1515 = vmatpush1.bf16.xpose.msra.mxu0 0
        %1516 = vmatprep.subr.bf16.mxu0 0
        %1517 = vmatpush1.bf16.xpose.msra.mxu0 0
        %1518 = vmatprep.subr.bf16.mxu0 0
        %1519 = vmatpush1.bf16.xpose.msra.mxu0 0
        %1520 = vmatprep.subr.bf16.mxu0 0
        %1521 = vmatpush1.bf16.xpose.msra.mxu0 0
        %1522 = vmatprep.subr.bf16.mxu0 0
        %1523 = vmatpush1.bf16.xpose.msra.mxu0 0
        %1524 = vmatprep.subr.bf16.mxu0 0
        %1525 = vmatpush1.bf16.xpose.msra.mxu0 0
        %1526 = vmatprep.subr.bf16.mxu0 0
        %1527 = vmatpush1.bf16.xpose.msra.mxu0 %v1510
        %1528 = vmatprep.subr.bf16.mxu0 0
        %1529 = vmatpush2.bf16.xpose.msra.mxu0 0
        %1530 = vmatprep.subr.bf16.mxu0 0
        %1531 = vmatpush2.bf16.xpose.msra.mxu0 0
        %1532 = vmatprep.subr.bf16.mxu0 0
        %1533 = vmatpush2.bf16.xpose.msra.mxu0 0
        %1534 = vmatprep.subr.bf16.mxu0 0
        %1535 = vmatpush2.bf16.xpose.msra.mxu0 0
        %1536 = vmatprep.subr.bf16.mxu0 0
        %1537 = vmatpush2.bf16.xpose.msra.mxu0 0
        %1538 = vmatprep.subr.bf16.mxu0 0
        %1539 = vmatpush2.bf16.xpose.msra.mxu0 0
        %1540 = vmatprep.subr.bf16.mxu0 0
        %1541 = vmatpush2.bf16.xpose.msra.mxu0 0
        %1542 = vmatprep.subr.bf16.mxu0 0
        %1543 = vmatpush2.bf16.xpose.msra.mxu0 0
        %1544 = vmatprep.mubr.bf16.mxu0 0
        %1545 = vmatmul.mubr.bf16.gmra.mxu0 %v1507
        %v1546 = vpop.f32.mrf.mxu0
        %v1547 = vadd.f32 0.0, %v1546
        %v1548 = vpop.f32.mrf.mxu0
        %v1549 = vpop.f32.mrf.mxu0
        %v1550 = vadd.f32 0.0, %v1549
        %v1551 = vpop.f32.mrf.mxu0
        %1552 = vdwg.mxu0
        %1553 = vrot.lane.b32.xlu0 %v896, 112
        %v1554 = vpop.permute.xlu0 %1553
        %1555 = vrot.lane.b32.xlu0 %v896, 80
        %v1556 = vpop.permute.xlu0 %1555
        %v1558 = vsel %vm900, %v1554, 0
        %v1561 = vsel %vm900, %v1556, 0
        %1563 = vmatprep.subr.bf16.mxu0 0
        %1564 = vmatpush1.bf16.xpose.msra.mxu0 0
        %1565 = vmatprep.subr.bf16.mxu0 0
        %1566 = vmatpush1.bf16.xpose.msra.mxu0 0
        %1567 = vmatprep.subr.bf16.mxu0 0
        %1568 = vmatpush1.bf16.xpose.msra.mxu0 0
        %1569 = vmatprep.subr.bf16.mxu0 0
        %1570 = vmatpush1.bf16.xpose.msra.mxu0 0
        %1571 = vmatprep.subr.bf16.mxu0 0
        %1572 = vmatpush1.bf16.xpose.msra.mxu0 0
        %1573 = vmatprep.subr.bf16.mxu0 0
        %1574 = vmatpush1.bf16.xpose.msra.mxu0 0
        %1575 = vmatprep.subr.bf16.mxu0 0
        %1576 = vmatpush1.bf16.xpose.msra.mxu0 0
        %1577 = vmatprep.subr.bf16.mxu0 0
        %1578 = vmatpush1.bf16.xpose.msra.mxu0 %v1561
        %1579 = vmatprep.subr.bf16.mxu0 0
        %1580 = vmatpush2.bf16.xpose.msra.mxu0 0
        %1581 = vmatprep.subr.bf16.mxu0 0
        %1582 = vmatpush2.bf16.xpose.msra.mxu0 0
        %1583 = vmatprep.subr.bf16.mxu0 0
        %1584 = vmatpush2.bf16.xpose.msra.mxu0 0
        %1585 = vmatprep.subr.bf16.mxu0 0
        %1586 = vmatpush2.bf16.xpose.msra.mxu0 0
        %1587 = vmatprep.subr.bf16.mxu0 0
        %1588 = vmatpush2.bf16.xpose.msra.mxu0 0
        %1589 = vmatprep.subr.bf16.mxu0 0
        %1590 = vmatpush2.bf16.xpose.msra.mxu0 0
        %1591 = vmatprep.subr.bf16.mxu0 0
        %1592 = vmatpush2.bf16.xpose.msra.mxu0 0
        %1593 = vmatprep.subr.bf16.mxu0 0
        %1594 = vmatpush2.bf16.xpose.msra.mxu0 0
        %1595 = vmatprep.mubr.bf16.mxu0 0
        %1596 = vmatmul.mubr.bf16.gmra.mxu0 %v1558
        %v1597 = vpop.f32.mrf.mxu0
        %v1598 = vadd.f32 0.0, %v1597
        %v1599 = vpop.f32.mrf.mxu0
        %v1600 = vpop.f32.mrf.mxu0
        %v1601 = vadd.f32 0.0, %v1600
        %v1602 = vpop.f32.mrf.mxu0
        %1603 = vdwg.mxu0
        %v1604 = vsel %vm998, %v1547, -inf
        %1605 = vmax.xlane.f32.xlu0 %v1604
        %v1606 = vpop.xlane.xlu0 %1605
        %v1607 = vsel %vm998, %v1550, -inf
        %1608 = vmax.xlane.f32.xlu0 %v1607
        %v1609 = vpop.xlane.xlu0 %1608
        %v1610 = vsel %vm998, %v1598, -inf
        %1611 = vmax.xlane.f32.xlu0 %v1610
        %v1612 = vpop.xlane.xlu0 %1611
        %v1613 = vsel %vm998, %v1601, -inf
        %1614 = vmax.xlane.f32.xlu0 %v1613
        %v1615 = vpop.xlane.xlu0 %1614
        %v1616 = vsub.f32 %v1547, %v1606
        %v1617 = vsub.f32 %v1550, %v1609
        %v1618 = vsub.f32 %v1598, %v1612
        %v1619 = vsub.f32 %v1601, %v1615
        %v1620 = vmul.f32 %v1616, 1.442695
        %v1621 = vpow.pop %v1620
        %v1622 = vmul.f32 %v1617, 1.442695
        %v1623 = vpow.pop %v1622
        %v1624 = vmul.f32 %v1618, 1.442695
        %v1625 = vpow.pop %v1624
        %v1626 = vmul.f32 %v1619, 1.442695
        %v1627 = vpow.pop %v1626
        %v1628 = vsel %vm998, %v1621, 0.0
        %1629 = vadd.xlane.f32.xlu0 %v1628
        %v1630 = vpop.xlane.xlu0 %1629
        %v1631 = vsel %vm998, %v1623, 0.0
        %1632 = vadd.xlane.f32.xlu0 %v1631
        %v1633 = vpop.xlane.xlu0 %1632
        %v1634 = vsel %vm998, %v1625, 0.0
        %1635 = vadd.xlane.f32.xlu0 %v1634
        %v1636 = vpop.xlane.xlu0 %1635
        %v1637 = vsel %vm998, %v1627, 0.0
        %1638 = vadd.xlane.f32.xlu0 %v1637
        %v1639 = vpop.xlane.xlu0 %1638
        %v1640 = vrcp.pop %v1630
        %v1641 = vrcp.pop %v1633
        %v1642 = vrcp.pop %v1636
        %v1643 = vrcp.pop %v1639
        %v1644 = vmul.f32 %v1621, %v1640
        %v1645 = vmul.f32 %v1623, %v1641
        %v1646 = vmul.f32 %v1625, %v1642
        %v1647 = vmul.f32 %v1627, %v1643
        %v1648 = vpack.c.bf16 %v1645, %v1644
        %v1649 = vpack.c.bf16 %v1647, %v1646
        %1650 = vrot.lane.b32.xlu0 %v895, 48
        %v1651 = vpop.permute.xlu0 %1650
        %v1654 = vsel %vm998, %v1648, 0
        %1656 = vmatprep.subr.bf16.mxu0 0
        %1657 = vmatpush1.bf16.msra.mxu0 0
        %1658 = vmatprep.subr.bf16.mxu0 0
        %1659 = vmatpush1.bf16.msra.mxu0 0
        %1660 = vmatprep.subr.bf16.mxu0 0
        %1661 = vmatpush1.bf16.msra.mxu0 0
        %1662 = vmatprep.subr.bf16.mxu0 0
        %1663 = vmatpush1.bf16.msra.mxu0 0
        %1664 = vmatprep.subr.bf16.mxu0 0
        %1665 = vmatpush1.bf16.msra.mxu0 0
        %1666 = vmatprep.subr.bf16.mxu0 0
        %1667 = vmatpush1.bf16.msra.mxu0 0
        %1668 = vmatprep.subr.bf16.mxu0 0
        %1669 = vmatpush1.bf16.msra.mxu0 0
        %1670 = vmatprep.subr.bf16.mxu0 0
        %1671 = vmatpush1.bf16.msra.mxu0 %v1651
        %1672 = vmatprep.subr.bf16.mxu0 0
        %1673 = vmatpush2.bf16.msra.mxu0 0
        %1674 = vmatprep.subr.bf16.mxu0 0
        %1675 = vmatpush2.bf16.msra.mxu0 0
        %1676 = vmatprep.subr.bf16.mxu0 0
        %1677 = vmatpush2.bf16.msra.mxu0 0
        %1678 = vmatprep.subr.bf16.mxu0 0
        %1679 = vmatpush2.bf16.msra.mxu0 0
        %1680 = vmatprep.subr.bf16.mxu0 0
        %1681 = vmatpush2.bf16.msra.mxu0 0
        %1682 = vmatprep.subr.bf16.mxu0 0
        %1683 = vmatpush2.bf16.msra.mxu0 0
        %1684 = vmatprep.subr.bf16.mxu0 0
        %1685 = vmatpush2.bf16.msra.mxu0 0
        %1686 = vmatprep.subr.bf16.mxu0 0
        %1687 = vmatpush2.bf16.msra.mxu0 0
        %1688 = vmatprep.mubr.bf16.mxu0 0
        %1689 = vmatmul.mubr.bf16.gmra.mxu0 %v1654
        %v1690 = vpop.f32.mrf.mxu0
        %v1691 = vadd.f32 0.0, %v1690
        %v1692 = vpop.f32.mrf.mxu0
        %v1693 = vpop.f32.mrf.mxu0
        %v1694 = vadd.f32 0.0, %v1693
        %v1695 = vpop.f32.mrf.mxu0
        %1696 = vdwg.mxu0
        %1697 = vrot.lane.b32.xlu0 %v896, 48
        %v1698 = vpop.permute.xlu0 %1697
        %v1701 = vsel %vm998, %v1649, 0
        %1703 = vmatprep.subr.bf16.mxu0 0
        %1704 = vmatpush1.bf16.msra.mxu0 0
        %1705 = vmatprep.subr.bf16.mxu0 0
        %1706 = vmatpush1.bf16.msra.mxu0 0
        %1707 = vmatprep.subr.bf16.mxu0 0
        %1708 = vmatpush1.bf16.msra.mxu0 0
        %1709 = vmatprep.subr.bf16.mxu0 0
        %1710 = vmatpush1.bf16.msra.mxu0 0
        %1711 = vmatprep.subr.bf16.mxu0 0
        %1712 = vmatpush1.bf16.msra.mxu0 0
        %1713 = vmatprep.subr.bf16.mxu0 0
        %1714 = vmatpush1.bf16.msra.mxu0 0
        %1715 = vmatprep.subr.bf16.mxu0 0
        %1716 = vmatpush1.bf16.msra.mxu0 0
        %1717 = vmatprep.subr.bf16.mxu0 0
        %1718 = vmatpush1.bf16.msra.mxu0 %v1698
        %1719 = vmatprep.subr.bf16.mxu0 0
        %1720 = vmatpush2.bf16.msra.mxu0 0
        %1721 = vmatprep.subr.bf16.mxu0 0
        %1722 = vmatpush2.bf16.msra.mxu0 0
        %1723 = vmatprep.subr.bf16.mxu0 0
        %1724 = vmatpush2.bf16.msra.mxu0 0
        %1725 = vmatprep.subr.bf16.mxu0 0
        %1726 = vmatpush2.bf16.msra.mxu0 0
        %1727 = vmatprep.subr.bf16.mxu0 0
        %1728 = vmatpush2.bf16.msra.mxu0 0
        %1729 = vmatprep.subr.bf16.mxu0 0
        %1730 = vmatpush2.bf16.msra.mxu0 0
        %1731 = vmatprep.subr.bf16.mxu0 0
        %1732 = vmatpush2.bf16.msra.mxu0 0
        %1733 = vmatprep.subr.bf16.mxu0 0
        %1734 = vmatpush2.bf16.msra.mxu0 0
        %1735 = vmatprep.mubr.bf16.mxu0 0
        %1736 = vmatmul.mubr.bf16.gmra.mxu0 %v1701
        %v1737 = vpop.f32.mrf.mxu0
        %v1738 = vadd.f32 0.0, %v1737
        %v1739 = vpop.f32.mrf.mxu0
        %v1740 = vpop.f32.mrf.mxu0
        %v1741 = vadd.f32 0.0, %v1740
        %v1742 = vpop.f32.mrf.mxu0
        %1743 = vdwg.mxu0
        %v1744 = vpack.c.bf16 %v1694, %v1691
        %v1745 = vpack.c.bf16 %v1741, %v1738
        %v1747 = vsel %vm900, %v1744, 0
        %v1750 = vsel %vm900, %v1745, 0
        %v1753 = vsel %vm1391, %v892, 0
        %1755 = vmatprep.subr.bf16.mxu0 0
        %1756 = vmatpush1.bf16.msra.mxu0 0
        %1757 = vmatprep.subr.bf16.mxu0 0
        %1758 = vmatpush1.bf16.msra.mxu0 0
        %1759 = vmatprep.subr.bf16.mxu0 0
        %1760 = vmatpush1.bf16.msra.mxu0 0
        %1761 = vmatprep.subr.bf16.mxu0 0
        %1762 = vmatpush1.bf16.msra.mxu0 0
        %1763 = vmatprep.subr.bf16.mxu0 0
        %1764 = vmatpush1.bf16.msra.mxu0 0
        %1765 = vmatprep.subr.bf16.mxu0 0
        %1766 = vmatpush1.bf16.msra.mxu0 0
        %1767 = vmatprep.subr.bf16.mxu0 0
        %1768 = vmatpush1.bf16.msra.mxu0 0
        %1769 = vmatprep.subr.bf16.mxu0 0
        %1770 = vmatpush1.bf16.msra.mxu0 %v1753
        %1771 = vmatprep.subr.bf16.mxu0 0
        %1772 = vmatpush2.bf16.msra.mxu0 0
        %1773 = vmatprep.subr.bf16.mxu0 0
        %1774 = vmatpush2.bf16.msra.mxu0 0
        %1775 = vmatprep.subr.bf16.mxu0 0
        %1776 = vmatpush2.bf16.msra.mxu0 0
        %1777 = vmatprep.subr.bf16.mxu0 0
        %1778 = vmatpush2.bf16.msra.mxu0 0
        %1779 = vmatprep.subr.bf16.mxu0 0
        %1780 = vmatpush2.bf16.msra.mxu0 0
        %1781 = vmatprep.subr.bf16.mxu0 0
        %1782 = vmatpush2.bf16.msra.mxu0 0
        %1783 = vmatprep.subr.bf16.mxu0 0
        %1784 = vmatpush2.bf16.msra.mxu0 0
        %1785 = vmatprep.subr.bf16.mxu0 0
        %1786 = vmatpush2.bf16.msra.mxu0 0
        %1787 = vmatprep.mubr.bf16.mxu0 0
        %1788 = vmatmul.mubr.bf16.gmra.mxu0 %v1747
        %v1789 = vpop.f32.mrf.mxu0
        %v1790 = vadd.f32 0.0, %v1789
        %v1791 = vpop.f32.mrf.mxu0
        %v1792 = vpop.f32.mrf.mxu0
        %v1793 = vadd.f32 0.0, %v1792
        %v1794 = vpop.f32.mrf.mxu0
        %1795 = vmatprep.mubr.bf16.mxu0 0
        %1796 = vmatmul.mubr.bf16.gmra.mxu0 %v1750
        %v1797 = vpop.f32.mrf.mxu0
        %v1798 = vadd.f32 0.0, %v1797
        %v1799 = vpop.f32.mrf.mxu0
        %v1800 = vpop.f32.mrf.mxu0
        %v1801 = vadd.f32 0.0, %v1800
        %v1802 = vpop.f32.mrf.mxu0
        %1803 = vdwg.mxu0
        %v1804 = vadd.f32 %v1488, %v1790
        %v1805 = vadd.f32 %v1491, %v1793
        %v1806 = vadd.f32 %v1496, %v1798
        %v1807 = vadd.f32 %v1499, %v1801
        %1808 = vrot.lane.b32.xlu0 %v895, 104
        %v1809 = vpop.permute.xlu0 %1808
        %1810 = vrot.lane.b32.xlu0 %v895, 72
        %v1811 = vpop.permute.xlu0 %1810
        %v1813 = vsel %vm900, %v1809, 0
        %v1816 = vsel %vm900, %v1811, 0
        %1818 = vmatprep.subr.bf16.mxu0 0
        %1819 = vmatpush1.bf16.xpose.msra.mxu0 0
        %1820 = vmatprep.subr.bf16.mxu0 0
        %1821 = vmatpush1.bf16.xpose.msra.mxu0 0
        %1822 = vmatprep.subr.bf16.mxu0 0
        %1823 = vmatpush1.bf16.xpose.msra.mxu0 0
        %1824 = vmatprep.subr.bf16.mxu0 0
        %1825 = vmatpush1.bf16.xpose.msra.mxu0 0
        %1826 = vmatprep.subr.bf16.mxu0 0
        %1827 = vmatpush1.bf16.xpose.msra.mxu0 0
        %1828 = vmatprep.subr.bf16.mxu0 0
        %1829 = vmatpush1.bf16.xpose.msra.mxu0 0
        %1830 = vmatprep.subr.bf16.mxu0 0
        %1831 = vmatpush1.bf16.xpose.msra.mxu0 0
        %1832 = vmatprep.subr.bf16.mxu0 0
        %1833 = vmatpush1.bf16.xpose.msra.mxu0 %v1816
        %1834 = vmatprep.subr.bf16.mxu0 0
        %1835 = vmatpush2.bf16.xpose.msra.mxu0 0
        %1836 = vmatprep.subr.bf16.mxu0 0
        %1837 = vmatpush2.bf16.xpose.msra.mxu0 0
        %1838 = vmatprep.subr.bf16.mxu0 0
        %1839 = vmatpush2.bf16.xpose.msra.mxu0 0
        %1840 = vmatprep.subr.bf16.mxu0 0
        %1841 = vmatpush2.bf16.xpose.msra.mxu0 0
        %1842 = vmatprep.subr.bf16.mxu0 0
        %1843 = vmatpush2.bf16.xpose.msra.mxu0 0
        %1844 = vmatprep.subr.bf16.mxu0 0
        %1845 = vmatpush2.bf16.xpose.msra.mxu0 0
        %1846 = vmatprep.subr.bf16.mxu0 0
        %1847 = vmatpush2.bf16.xpose.msra.mxu0 0
        %1848 = vmatprep.subr.bf16.mxu0 0
        %1849 = vmatpush2.bf16.xpose.msra.mxu0 0
        %1850 = vmatprep.mubr.bf16.mxu0 0
        %1851 = vmatmul.mubr.bf16.gmra.mxu0 %v1813
        %v1852 = vpop.f32.mrf.mxu0
        %v1853 = vadd.f32 0.0, %v1852
        %v1854 = vpop.f32.mrf.mxu0
        %v1855 = vpop.f32.mrf.mxu0
        %v1856 = vadd.f32 0.0, %v1855
        %v1857 = vpop.f32.mrf.mxu0
        %1858 = vdwg.mxu0
        %1859 = vrot.lane.b32.xlu0 %v896, 104
        %v1860 = vpop.permute.xlu0 %1859
        %1861 = vrot.lane.b32.xlu0 %v896, 72
        %v1862 = vpop.permute.xlu0 %1861
        %v1864 = vsel %vm900, %v1860, 0
        %v1867 = vsel %vm900, %v1862, 0
        %1869 = vmatprep.subr.bf16.mxu0 0
        %1870 = vmatpush1.bf16.xpose.msra.mxu0 0
        %1871 = vmatprep.subr.bf16.mxu0 0
        %1872 = vmatpush1.bf16.xpose.msra.mxu0 0
        %1873 = vmatprep.subr.bf16.mxu0 0
        %1874 = vmatpush1.bf16.xpose.msra.mxu0 0
        %1875 = vmatprep.subr.bf16.mxu0 0
        %1876 = vmatpush1.bf16.xpose.msra.mxu0 0
        %1877 = vmatprep.subr.bf16.mxu0 0
        %1878 = vmatpush1.bf16.xpose.msra.mxu0 0
        %1879 = vmatprep.subr.bf16.mxu0 0
        %1880 = vmatpush1.bf16.xpose.msra.mxu0 0
        %1881 = vmatprep.subr.bf16.mxu0 0
        %1882 = vmatpush1.bf16.xpose.msra.mxu0 0
        %1883 = vmatprep.subr.bf16.mxu0 0
        %1884 = vmatpush1.bf16.xpose.msra.mxu0 %v1867
        %1885 = vmatprep.subr.bf16.mxu0 0
        %1886 = vmatpush2.bf16.xpose.msra.mxu0 0
        %1887 = vmatprep.subr.bf16.mxu0 0
        %1888 = vmatpush2.bf16.xpose.msra.mxu0 0
        %1889 = vmatprep.subr.bf16.mxu0 0
        %1890 = vmatpush2.bf16.xpose.msra.mxu0 0
        %1891 = vmatprep.subr.bf16.mxu0 0
        %1892 = vmatpush2.bf16.xpose.msra.mxu0 0
        %1893 = vmatprep.subr.bf16.mxu0 0
        %1894 = vmatpush2.bf16.xpose.msra.mxu0 0
        %1895 = vmatprep.subr.bf16.mxu0 0
        %1896 = vmatpush2.bf16.xpose.msra.mxu0 0
        %1897 = vmatprep.subr.bf16.mxu0 0
        %1898 = vmatpush2.bf16.xpose.msra.mxu0 0
        %1899 = vmatprep.subr.bf16.mxu0 0
        %1900 = vmatpush2.bf16.xpose.msra.mxu0 0
        %1901 = vmatprep.mubr.bf16.mxu0 0
        %1902 = vmatmul.mubr.bf16.gmra.mxu0 %v1864
        %v1903 = vpop.f32.mrf.mxu0
        %v1904 = vadd.f32 0.0, %v1903
        %v1905 = vpop.f32.mrf.mxu0
        %v1906 = vpop.f32.mrf.mxu0
        %v1907 = vadd.f32 0.0, %v1906
        %v1908 = vpop.f32.mrf.mxu0
        %1909 = vdwg.mxu0
        %v1910 = vsel %vm998, %v1853, -inf
        %1911 = vmax.xlane.f32.xlu0 %v1910
        %v1912 = vpop.xlane.xlu0 %1911
        %v1913 = vsel %vm998, %v1856, -inf
        %1914 = vmax.xlane.f32.xlu0 %v1913
        %v1915 = vpop.xlane.xlu0 %1914
        %v1916 = vsel %vm998, %v1904, -inf
        %1917 = vmax.xlane.f32.xlu0 %v1916
        %v1918 = vpop.xlane.xlu0 %1917
        %v1919 = vsel %vm998, %v1907, -inf
        %1920 = vmax.xlane.f32.xlu0 %v1919
        %v1921 = vpop.xlane.xlu0 %1920
        %v1922 = vsub.f32 %v1853, %v1912
        %v1923 = vsub.f32 %v1856, %v1915
        %v1924 = vsub.f32 %v1904, %v1918
        %v1925 = vsub.f32 %v1907, %v1921
        %v1926 = vmul.f32 %v1922, 1.442695
        %v1927 = vpow.pop %v1926
        %v1928 = vmul.f32 %v1923, 1.442695
        %v1929 = vpow.pop %v1928
        %v1930 = vmul.f32 %v1924, 1.442695
        %v1931 = vpow.pop %v1930
        %v1932 = vmul.f32 %v1925, 1.442695
        %v1933 = vpow.pop %v1932
        %v1934 = vsel %vm998, %v1927, 0.0
        %1935 = vadd.xlane.f32.xlu0 %v1934
        %v1936 = vpop.xlane.xlu0 %1935
        %v1937 = vsel %vm998, %v1929, 0.0
        %1938 = vadd.xlane.f32.xlu0 %v1937
        %v1939 = vpop.xlane.xlu0 %1938
        %v1940 = vsel %vm998, %v1931, 0.0
        %1941 = vadd.xlane.f32.xlu0 %v1940
        %v1942 = vpop.xlane.xlu0 %1941
        %v1943 = vsel %vm998, %v1933, 0.0
        %1944 = vadd.xlane.f32.xlu0 %v1943
        %v1945 = vpop.xlane.xlu0 %1944
        %v1946 = vrcp.pop %v1936
        %v1947 = vrcp.pop %v1939
        %v1948 = vrcp.pop %v1942
        %v1949 = vrcp.pop %v1945
        %v1950 = vmul.f32 %v1927, %v1946
        %v1951 = vmul.f32 %v1929, %v1947
        %v1952 = vmul.f32 %v1931, %v1948
        %v1953 = vmul.f32 %v1933, %v1949
        %v1954 = vpack.c.bf16 %v1951, %v1950
        %v1955 = vpack.c.bf16 %v1953, %v1952
        %1956 = vrot.lane.b32.xlu0 %v895, 40
        %v1957 = vpop.permute.xlu0 %1956
        %v1960 = vsel %vm998, %v1954, 0
        %1962 = vmatprep.subr.bf16.mxu0 0
        %1963 = vmatpush1.bf16.msra.mxu0 0
        %1964 = vmatprep.subr.bf16.mxu0 0
        %1965 = vmatpush1.bf16.msra.mxu0 0
        %1966 = vmatprep.subr.bf16.mxu0 0
        %1967 = vmatpush1.bf16.msra.mxu0 0
        %1968 = vmatprep.subr.bf16.mxu0 0
        %1969 = vmatpush1.bf16.msra.mxu0 0
        %1970 = vmatprep.subr.bf16.mxu0 0
        %1971 = vmatpush1.bf16.msra.mxu0 0
        %1972 = vmatprep.subr.bf16.mxu0 0
        %1973 = vmatpush1.bf16.msra.mxu0 0
        %1974 = vmatprep.subr.bf16.mxu0 0
        %1975 = vmatpush1.bf16.msra.mxu0 0
        %1976 = vmatprep.subr.bf16.mxu0 0
        %1977 = vmatpush1.bf16.msra.mxu0 %v1957
        %1978 = vmatprep.subr.bf16.mxu0 0
        %1979 = vmatpush2.bf16.msra.mxu0 0
        %1980 = vmatprep.subr.bf16.mxu0 0
        %1981 = vmatpush2.bf16.msra.mxu0 0
        %1982 = vmatprep.subr.bf16.mxu0 0
        %1983 = vmatpush2.bf16.msra.mxu0 0
        %1984 = vmatprep.subr.bf16.mxu0 0
        %1985 = vmatpush2.bf16.msra.mxu0 0
        %1986 = vmatprep.subr.bf16.mxu0 0
        %1987 = vmatpush2.bf16.msra.mxu0 0
        %1988 = vmatprep.subr.bf16.mxu0 0
        %1989 = vmatpush2.bf16.msra.mxu0 0
        %1990 = vmatprep.subr.bf16.mxu0 0
        %1991 = vmatpush2.bf16.msra.mxu0 0
        %1992 = vmatprep.subr.bf16.mxu0 0
        %1993 = vmatpush2.bf16.msra.mxu0 0
        %1994 = vmatprep.mubr.bf16.mxu0 0
        %1995 = vmatmul.mubr.bf16.gmra.mxu0 %v1960
        %v1996 = vpop.f32.mrf.mxu0
        %v1997 = vadd.f32 0.0, %v1996
        %v1998 = vpop.f32.mrf.mxu0
        %v1999 = vpop.f32.mrf.mxu0
        %v2000 = vadd.f32 0.0, %v1999
        %v2001 = vpop.f32.mrf.mxu0
        %2002 = vdwg.mxu0
        %2003 = vrot.lane.b32.xlu0 %v896, 40
        %v2004 = vpop.permute.xlu0 %2003
        %v2007 = vsel %vm998, %v1955, 0
        %2009 = vmatprep.subr.bf16.mxu0 0
        %2010 = vmatpush1.bf16.msra.mxu0 0
        %2011 = vmatprep.subr.bf16.mxu0 0
        %2012 = vmatpush1.bf16.msra.mxu0 0
        %2013 = vmatprep.subr.bf16.mxu0 0
        %2014 = vmatpush1.bf16.msra.mxu0 0
        %2015 = vmatprep.subr.bf16.mxu0 0
        %2016 = vmatpush1.bf16.msra.mxu0 0
        %2017 = vmatprep.subr.bf16.mxu0 0
        %2018 = vmatpush1.bf16.msra.mxu0 0
        %2019 = vmatprep.subr.bf16.mxu0 0
        %2020 = vmatpush1.bf16.msra.mxu0 0
        %2021 = vmatprep.subr.bf16.mxu0 0
        %2022 = vmatpush1.bf16.msra.mxu0 0
        %2023 = vmatprep.subr.bf16.mxu0 0
        %2024 = vmatpush1.bf16.msra.mxu0 %v2004
        %2025 = vmatprep.subr.bf16.mxu0 0
        %2026 = vmatpush2.bf16.msra.mxu0 0
        %2027 = vmatprep.subr.bf16.mxu0 0
        %2028 = vmatpush2.bf16.msra.mxu0 0
        %2029 = vmatprep.subr.bf16.mxu0 0
        %2030 = vmatpush2.bf16.msra.mxu0 0
        %2031 = vmatprep.subr.bf16.mxu0 0
        %2032 = vmatpush2.bf16.msra.mxu0 0
        %2033 = vmatprep.subr.bf16.mxu0 0
        %2034 = vmatpush2.bf16.msra.mxu0 0
        %2035 = vmatprep.subr.bf16.mxu0 0
        %2036 = vmatpush2.bf16.msra.mxu0 0
        %2037 = vmatprep.subr.bf16.mxu0 0
        %2038 = vmatpush2.bf16.msra.mxu0 0
        %2039 = vmatprep.subr.bf16.mxu0 0
        %2040 = vmatpush2.bf16.msra.mxu0 0
        %2041 = vmatprep.mubr.bf16.mxu0 0
        %2042 = vmatmul.mubr.bf16.gmra.mxu0 %v2007
        %v2043 = vpop.f32.mrf.mxu0
        %v2044 = vadd.f32 0.0, %v2043
        %v2045 = vpop.f32.mrf.mxu0
        %v2046 = vpop.f32.mrf.mxu0
        %v2047 = vadd.f32 0.0, %v2046
        %v2048 = vpop.f32.mrf.mxu0
        %2049 = vdwg.mxu0
        %v2050 = vpack.c.bf16 %v2000, %v1997
        %v2051 = vpack.c.bf16 %v2047, %v2044
        %v2053 = vsel %vm900, %v2050, 0
        %v2056 = vsel %vm900, %v2051, 0
        %v2059 = vsel %vm1391, %v893, 0
        %2061 = vmatprep.subr.bf16.mxu0 0
        %2062 = vmatpush1.bf16.msra.mxu0 0
        %2063 = vmatprep.subr.bf16.mxu0 0
        %2064 = vmatpush1.bf16.msra.mxu0 0
        %2065 = vmatprep.subr.bf16.mxu0 0
        %2066 = vmatpush1.bf16.msra.mxu0 0
        %2067 = vmatprep.subr.bf16.mxu0 0
        %2068 = vmatpush1.bf16.msra.mxu0 0
        %2069 = vmatprep.subr.bf16.mxu0 0
        %2070 = vmatpush1.bf16.msra.mxu0 0
        %2071 = vmatprep.subr.bf16.mxu0 0
        %2072 = vmatpush1.bf16.msra.mxu0 0
        %2073 = vmatprep.subr.bf16.mxu0 0
        %2074 = vmatpush1.bf16.msra.mxu0 0
        %2075 = vmatprep.subr.bf16.mxu0 0
        %2076 = vmatpush1.bf16.msra.mxu0 %v2059
        %2077 = vmatprep.subr.bf16.mxu0 0
        %2078 = vmatpush2.bf16.msra.mxu0 0
        %2079 = vmatprep.subr.bf16.mxu0 0
        %2080 = vmatpush2.bf16.msra.mxu0 0
        %2081 = vmatprep.subr.bf16.mxu0 0
        %2082 = vmatpush2.bf16.msra.mxu0 0
        %2083 = vmatprep.subr.bf16.mxu0 0
        %2084 = vmatpush2.bf16.msra.mxu0 0
        %2085 = vmatprep.subr.bf16.mxu0 0
        %2086 = vmatpush2.bf16.msra.mxu0 0
        %2087 = vmatprep.subr.bf16.mxu0 0
        %2088 = vmatpush2.bf16.msra.mxu0 0
        %2089 = vmatprep.subr.bf16.mxu0 0
        %2090 = vmatpush2.bf16.msra.mxu0 0
        %2091 = vmatprep.subr.bf16.mxu0 0
        %2092 = vmatpush2.bf16.msra.mxu0 0
        %2093 = vmatprep.mubr.bf16.mxu0 0
        %2094 = vmatmul.mubr.bf16.gmra.mxu0 %v2053
        %v2095 = vpop.f32.mrf.mxu0
        %v2096 = vadd.f32 0.0, %v2095
        %v2097 = vpop.f32.mrf.mxu0
        %v2098 = vpop.f32.mrf.mxu0
        %v2099 = vadd.f32 0.0, %v2098
        %v2100 = vpop.f32.mrf.mxu0
        %2101 = vmatprep.mubr.bf16.mxu0 0
        %2102 = vmatmul.mubr.bf16.gmra.mxu0 %v2056
        %v2103 = vpop.f32.mrf.mxu0
        %v2104 = vadd.f32 0.0, %v2103
        %v2105 = vpop.f32.mrf.mxu0
        %v2106 = vpop.f32.mrf.mxu0
        %v2107 = vadd.f32 0.0, %v2106
        %v2108 = vpop.f32.mrf.mxu0
        %2109 = vdwg.mxu0
        %v2110 = vadd.f32 %v1804, %v2096
        %v2111 = vadd.f32 %v1805, %v2099
        %v2112 = vadd.f32 %v1806, %v2104
        %v2113 = vadd.f32 %v1807, %v2107
        %v2115 = vlaneseq
        %v2116 = vshrl.u32 %v2115, 7
        %v2117 = vsub.s32 0, %v2116
        %v2118 = vrot.slane %v894, %v2117
        %v2120 = vadd.f32 %v2110, %v2118
        %v2121 = vadd.f32 %v2111, %v2118
        %v2122 = vadd.f32 %v2112, %v2118
        %v2123 = vadd.f32 %v2113, %v2118
        %v2124 = vadd.f32 %v730, %v2120
        %v2125 = vadd.f32 %v731, %v2121
        %v2126 = vadd.f32 %v732, %v2122
        %v2127 = vadd.f32 %v733, %v2123
        %v2128 = vld [vmem:[%s711] sm:$0x1]
        %v2129 = vld [vmem:[%s714] sm:$0x1]
        %v2130 = vsel %vm736, %v2124, 0.0
        %2131 = vadd.xlane.f32.xlu0 %v2130
        %v2132 = vpop.xlane.xlu0 %2131
        %v2133 = vsel %vm736, %v2125, 0.0
        %2134 = vadd.xlane.f32.xlu0 %v2133
        %v2135 = vpop.xlane.xlu0 %2134
        %v2136 = vsel %vm736, %v2126, 0.0
        %2137 = vadd.xlane.f32.xlu0 %v2136
        %v2138 = vpop.xlane.xlu0 %2137
        %v2139 = vsel %vm736, %v2127, 0.0
        %2140 = vadd.xlane.f32.xlu0 %v2139
        %v2141 = vpop.xlane.xlu0 %2140
        %v2142 = vmul.f32 %v2132, %v749
        %v2143 = vmul.f32 %v2135, %v749
        %v2144 = vmul.f32 %v2138, %v749
        %v2145 = vmul.f32 %v2141, %v749
        %v2146 = vsub.f32 %v2124, %v2142
        %v2147 = vsub.f32 %v2125, %v2143
        %v2148 = vsub.f32 %v2126, %v2144
        %v2149 = vsub.f32 %v2127, %v2145
        %v2150 = vmul.f32 %v2146, %v2146
        %v2151 = vmul.f32 %v2147, %v2147
        %v2152 = vmul.f32 %v2148, %v2148
        %v2153 = vmul.f32 %v2149, %v2149
        %v2154 = vsel %vm736, %v2150, 0.0
        %2155 = vadd.xlane.f32.xlu0 %v2154
        %v2156 = vpop.xlane.xlu0 %2155
        %v2157 = vsel %vm736, %v2151, 0.0
        %2158 = vadd.xlane.f32.xlu0 %v2157
        %v2159 = vpop.xlane.xlu0 %2158
        %v2160 = vsel %vm736, %v2152, 0.0
        %2161 = vadd.xlane.f32.xlu0 %v2160
        %v2162 = vpop.xlane.xlu0 %2161
        %v2163 = vsel %vm736, %v2153, 0.0
        %2164 = vadd.xlane.f32.xlu0 %v2163
        %v2165 = vpop.xlane.xlu0 %2164
        %v2166 = vmul.f32 %v2156, %v749
        %v2167 = vmul.f32 %v2159, %v749
        %v2168 = vmul.f32 %v2162, %v749
        %v2169 = vmul.f32 %v2165, %v749
        %v2170 = vadd.f32 %v2166, 1e-05
        %v2171 = vadd.f32 %v2167, 1e-05
        %v2172 = vadd.f32 %v2168, 1e-05
        %v2173 = vadd.f32 %v2169, 1e-05
        %v2174 = vrsqrt.pop %v2170
        %v2175 = vrsqrt.pop %v2171
        %v2176 = vrsqrt.pop %v2172
        %v2177 = vrsqrt.pop %v2173
        %v2178 = vmul.f32 %v2146, %v2174
        %v2179 = vmul.f32 %v2147, %v2175
        %v2180 = vmul.f32 %v2148, %v2176
        %v2181 = vmul.f32 %v2149, %v2177
        %v2183 = vlaneseq
        %v2184 = vshrl.u32 %v2183, 7
        %v2185 = vsub.s32 0, %v2184
        %v2186 = vrot.slane %v2128, %v2185
        %v2188 = vmul.f32 %v2178, %v2186
        %v2189 = vmul.f32 %v2179, %v2186
        %v2190 = vmul.f32 %v2180, %v2186
        %v2191 = vmul.f32 %v2181, %v2186
        %v2193 = vlaneseq
        %v2194 = vshrl.u32 %v2193, 7
        %v2195 = vsub.s32 0, %v2194
        %v2196 = vrot.slane %v2129, %v2195
        %v2198 = vadd.f32 %v2188, %v2196
        %v2199 = vadd.f32 %v2189, %v2196
        %v2200 = vadd.f32 %v2190, %v2196
        %v2201 = vadd.f32 %v2191, %v2196
        %v2202 = vpack.c.bf16 %v2199, %v2198
        %v2203 = vpack.c.bf16 %v2201, %v2200
        %v2204 = vld [vmem:[%s582] sm:$0xf]
        %v2205 = vld [vmem:[%s582 + $0x4] sm:$0xf]
        %v2206 = vld [vmem:[%s582 + $0x8] sm:$0xf]
        %v2207 = vld [vmem:[%s582 + $0xc] sm:$0xf]
        %v2208 = vld [vmem:[%s694] sm:$0x1]
        %v2210 = vlaneseq
        %v2211 = vshrl.u32 %v2210, 7
        %v2212 = vsub.s32 0, %v2211
        %v2213 = vrot.slane %v2208, %v2212
        %v2219 = vunpack.c.l.b16 %v2204
        %v2220 = vunpack.c.l.b16 %v2205
        %v2221 = vunpack.c.l.b16 %v2206
        %v2222 = vunpack.c.l.b16 %v2207
        %v2223 = vpack.c.b16 %v2220, %v2219
        %v2224 = vpack.c.b16 %v2222, %v2221
        %v2228 = vsel %vm736, %v2202, 0
        %v2231 = vsel %vm736, %v2203, 0
        %2233 = vmatprep.subr.bf16.mxu0 0
        %2234 = vmatpush1.bf16.msra.mxu0 0
        %2235 = vmatprep.subr.bf16.mxu0 0
        %2236 = vmatpush1.bf16.msra.mxu0 0
        %2237 = vmatprep.subr.bf16.mxu0 0
        %2238 = vmatpush1.bf16.msra.mxu0 0
        %2239 = vmatprep.subr.bf16.mxu0 0
        %2240 = vmatpush1.bf16.msra.mxu0 0
        %2241 = vmatprep.subr.bf16.mxu0 0
        %2242 = vmatpush1.bf16.msra.mxu0 0
        %2243 = vmatprep.subr.bf16.mxu0 0
        %2244 = vmatpush1.bf16.msra.mxu0 0
        %2245 = vmatprep.subr.bf16.mxu0 0
        %2246 = vmatpush1.bf16.msra.mxu0 %v2224
        %2247 = vmatprep.subr.bf16.mxu0 0
        %2248 = vmatpush1.bf16.msra.mxu0 %v2223
        %2249 = vmatprep.subr.bf16.mxu0 0
        %2250 = vmatpush2.bf16.msra.mxu0 0
        %2251 = vmatprep.subr.bf16.mxu0 0
        %2252 = vmatpush2.bf16.msra.mxu0 0
        %2253 = vmatprep.subr.bf16.mxu0 0
        %2254 = vmatpush2.bf16.msra.mxu0 0
        %2255 = vmatprep.subr.bf16.mxu0 0
        %2256 = vmatpush2.bf16.msra.mxu0 0
        %2257 = vmatprep.subr.bf16.mxu0 0
        %2258 = vmatpush2.bf16.msra.mxu0 0
        %2259 = vmatprep.subr.bf16.mxu0 0
        %2260 = vmatpush2.bf16.msra.mxu0 0
        %2261 = vmatprep.subr.bf16.mxu0 0
        %2262 = vmatpush2.bf16.msra.mxu0 0
        %2263 = vmatprep.subr.bf16.mxu0 0
        %2264 = vmatpush2.bf16.msra.mxu0 0
        %2265 = vmatprep.mubr.bf16.mxu0 0
        %2266 = vmatmul.mubr.bf16.gmra.mxu0 %v2228
        %v2267 = vpop.f32.mrf.mxu0
        %v2268 = vadd.f32 %v2213, %v2267
        %v2269 = vpop.f32.mrf.mxu0
        %v2270 = vpop.f32.mrf.mxu0
        %v2271 = vadd.f32 %v2213, %v2270
        %v2272 = vpop.f32.mrf.mxu0
        %2273 = vmatprep.mubr.bf16.mxu0 0
        %2274 = vmatmul.mubr.bf16.gmra.mxu0 %v2231
        %v2275 = vpop.f32.mrf.mxu0
        %v2276 = vadd.f32 %v2213, %v2275
        %v2277 = vpop.f32.mrf.mxu0
        %v2278 = vpop.f32.mrf.mxu0
        %v2279 = vadd.f32 %v2213, %v2278
        %v2280 = vpop.f32.mrf.mxu0
        %2281 = vdwg.mxu0
        %v2282 = vmax.f32 %v2268, 0.0
        %v2283 = vmax.f32 %v2271, 0.0
        %v2284 = vmax.f32 %v2276, 0.0
        %v2285 = vmax.f32 %v2279, 0.0
        %v2286 = vpack.c.bf16 %v2283, %v2282
        %v2287 = vpack.c.bf16 %v2285, %v2284
        %v2288 = vld [vmem:[%s699] sm:$0xf]
        %v2289 = vld [vmem:[%s699 + $0x4] sm:$0xf]
        %v2290 = vld [vmem:[%s699 + $0x8] sm:$0xf]
        %v2291 = vld [vmem:[%s699 + $0xc] sm:$0xf]
        %v2292 = vld [vmem:[%s699 + $0x10] sm:$0xf]
        %v2293 = vld [vmem:[%s699 + $0x14] sm:$0xf]
        %v2294 = vld [vmem:[%s699 + $0x18] sm:$0xf]
        %v2295 = vld [vmem:[%s699 + $0x1c] sm:$0xf]
        %v2304 = vunpack.c.l.b16 %v2288
        %v2305 = vunpack.c.l.b16 %v2289
        %v2306 = vunpack.c.l.b16 %v2290
        %v2307 = vunpack.c.l.b16 %v2291
        %v2308 = vunpack.c.l.b16 %v2292
        %v2309 = vunpack.c.l.b16 %v2293
        %v2310 = vunpack.c.l.b16 %v2294
        %v2311 = vunpack.c.l.b16 %v2295
        %v2312 = vpack.c.b16 %v2305, %v2304
        %v2313 = vpack.c.b16 %v2307, %v2306
        %v2314 = vpack.c.b16 %v2309, %v2308
        %v2315 = vpack.c.b16 %v2311, %v2310
        %vm2320 = vcmask 523264
        %v2322 = vsel %vm2320, %v2286, 0
        %v2325 = vsel %vm2320, %v2287, 0
        %2327 = vmatprep.subr.bf16.mxu0 0
        %2328 = vmatpush1.bf16.msra.mxu0 0
        %2329 = vmatprep.subr.bf16.mxu0 0
        %2330 = vmatpush1.bf16.msra.mxu0 0
        %2331 = vmatprep.subr.bf16.mxu0 0
        %2332 = vmatpush1.bf16.msra.mxu0 0
        %2333 = vmatprep.subr.bf16.mxu0 0
        %2334 = vmatpush1.bf16.msra.mxu0 0
        %2335 = vmatprep.subr.bf16.mxu0 0
        %2336 = vmatpush1.bf16.msra.mxu0 %v2315
        %2337 = vmatprep.subr.bf16.mxu0 0
        %2338 = vmatpush1.bf16.msra.mxu0 %v2314
        %2339 = vmatprep.subr.bf16.mxu0 0
        %2340 = vmatpush1.bf16.msra.mxu0 %v2313
        %2341 = vmatprep.subr.bf16.mxu0 0
        %2342 = vmatpush1.bf16.msra.mxu0 %v2312
        %2343 = vmatprep.subr.bf16.mxu0 0
        %2344 = vmatpush2.bf16.msra.mxu0 0
        %2345 = vmatprep.subr.bf16.mxu0 0
        %2346 = vmatpush2.bf16.msra.mxu0 0
        %2347 = vmatprep.subr.bf16.mxu0 0
        %2348 = vmatpush2.bf16.msra.mxu0 0
        %2349 = vmatprep.subr.bf16.mxu0 0
        %2350 = vmatpush2.bf16.msra.mxu0 0
        %2351 = vmatprep.subr.bf16.mxu0 0
        %2352 = vmatpush2.bf16.msra.mxu0 0
        %2353 = vmatprep.subr.bf16.mxu0 0
        %2354 = vmatpush2.bf16.msra.mxu0 0
        %2355 = vmatprep.subr.bf16.mxu0 0
        %2356 = vmatpush2.bf16.msra.mxu0 0
        %2357 = vmatprep.subr.bf16.mxu0 0
        %2358 = vmatpush2.bf16.msra.mxu0 0
        %2359 = vmatprep.mubr.bf16.mxu0 0
        %2360 = vmatmul.mubr.bf16.gmra.mxu0 %v2322
        %v2361 = vpop.f32.mrf.mxu0
        %v2362 = vadd.f32 0.0, %v2361
        %v2363 = vpop.f32.mrf.mxu0
        %v2364 = vpop.f32.mrf.mxu0
        %v2365 = vadd.f32 0.0, %v2364
        %v2366 = vpop.f32.mrf.mxu0
        %2367 = vmatprep.mubr.bf16.mxu0 0
        %2368 = vmatmul.mubr.bf16.gmra.mxu0 %v2325
        %v2369 = vpop.f32.mrf.mxu0
        %v2370 = vadd.f32 0.0, %v2369
        %v2371 = vpop.f32.mrf.mxu0
        %v2372 = vpop.f32.mrf.mxu0
        %v2373 = vadd.f32 0.0, %v2372
        %v2374 = vpop.f32.mrf.mxu0
        %2375 = vdwg.mxu0
        %v2376 = vadd.f32 %v2124, %v2362
        %v2377 = vadd.f32 %v2125, %v2365
        %v2378 = vadd.f32 %v2126, %v2370
        %v2379 = vadd.f32 %v2127, %v2373
        %v2380 = vld [vmem:[%s702] sm:$0x1]
        %v2382 = vlaneseq
        %v2383 = vshrl.u32 %v2382, 7
        %v2384 = vsub.s32 0, %v2383
        %v2385 = vrot.slane %v2380, %v2384
        %v2387 = vadd.f32 %v2376, %v2385
        %v2388 = vadd.f32 %v2377, %v2385
        %v2389 = vadd.f32 %v2378, %v2385
        %v2390 = vadd.f32 %v2379, %v2385
        %2391 = vst.msk [vmem:[#allocation2] sm:$0xff] %vm736, %v2387
        %2392 = vst.msk [vmem:[#allocation2 + $0x8] sm:$0xff] %vm736, %v2388
        %2393 = vst.msk [vmem:[#allocation2 + $0x10] sm:$0xff] %vm736, %v2389
        %2394 = vst.msk [vmem:[#allocation2 + $0x18] sm:$0xff] %vm736, %v2390
        %p2395 = scmp.eq.s32.totalorder %s35, 1
        // Predicated region
        $region89: #{tpu_custom_call.1} parent=79 // pred_check
          %p2396 = pneg %p2395
        $region90: #{tpu_custom_call.1} parent=79 // pred_check_branch
          %2398 = sbr.rel (%p2396) target = $region92
        $region91: #{tpu_custom_call.1} parent=79 // pred_region
          %v2399 = vld [vmem:[%s13] sm:$0x1]
          %v2400 = vld [vmem:[%s14] sm:$0x1]
          %v2401 = vsel %vm736, %v2387, 0.0
          %2402 = vadd.xlane.f32.xlu0 %v2401
          %v2403 = vpop.xlane.xlu0 %2402
          %v2404 = vsel %vm736, %v2388, 0.0
          %2405 = vadd.xlane.f32.xlu0 %v2404
          %v2406 = vpop.xlane.xlu0 %2405
          %v2407 = vsel %vm736, %v2389, 0.0
          %2408 = vadd.xlane.f32.xlu0 %v2407
          %v2409 = vpop.xlane.xlu0 %2408
          %v2410 = vsel %vm736, %v2390, 0.0
          %2411 = vadd.xlane.f32.xlu0 %v2410
          %v2412 = vpop.xlane.xlu0 %2411
          %v2413 = vmul.f32 %v2403, %v749
          %v2414 = vmul.f32 %v2406, %v749
          %v2415 = vmul.f32 %v2409, %v749
          %v2416 = vmul.f32 %v2412, %v749
          %v2417 = vsub.f32 %v2387, %v2413
          %v2418 = vsub.f32 %v2388, %v2414
          %v2419 = vsub.f32 %v2389, %v2415
          %v2420 = vsub.f32 %v2390, %v2416
          %v2421 = vmul.f32 %v2417, %v2417
          %v2422 = vmul.f32 %v2418, %v2418
          %v2423 = vmul.f32 %v2419, %v2419
          %v2424 = vmul.f32 %v2420, %v2420
          %v2425 = vsel %vm736, %v2421, 0.0
          %2426 = vadd.xlane.f32.xlu0 %v2425
          %v2427 = vpop.xlane.xlu0 %2426
          %v2428 = vsel %vm736, %v2422, 0.0
          %2429 = vadd.xlane.f32.xlu0 %v2428
          %v2430 = vpop.xlane.xlu0 %2429
          %v2431 = vsel %vm736, %v2423, 0.0
          %2432 = vadd.xlane.f32.xlu0 %v2431
          %v2433 = vpop.xlane.xlu0 %2432
          %v2434 = vsel %vm736, %v2424, 0.0
          %2435 = vadd.xlane.f32.xlu0 %v2434
          %v2436 = vpop.xlane.xlu0 %2435
          %v2437 = vmul.f32 %v2427, %v749
          %v2438 = vmul.f32 %v2430, %v749
          %v2439 = vmul.f32 %v2433, %v749
          %v2440 = vmul.f32 %v2436, %v749
          %v2441 = vadd.f32 %v2437, 1e-05
          %v2442 = vadd.f32 %v2438, 1e-05
          %v2443 = vadd.f32 %v2439, 1e-05
          %v2444 = vadd.f32 %v2440, 1e-05
          %v2445 = vrsqrt.pop %v2441
          %v2446 = vrsqrt.pop %v2442
          %v2447 = vrsqrt.pop %v2443
          %v2448 = vrsqrt.pop %v2444
          %v2449 = vmul.f32 %v2417, %v2445
          %v2450 = vmul.f32 %v2418, %v2446
          %v2451 = vmul.f32 %v2419, %v2447
          %v2452 = vmul.f32 %v2420, %v2448
          %v2454 = vlaneseq
          %v2455 = vshrl.u32 %v2454, 7
          %v2456 = vsub.s32 0, %v2455
          %v2457 = vrot.slane %v2399, %v2456
          %v2459 = vmul.f32 %v2449, %v2457
          %v2460 = vmul.f32 %v2450, %v2457
          %v2461 = vmul.f32 %v2451, %v2457
          %v2462 = vmul.f32 %v2452, %v2457
          %v2464 = vlaneseq
          %v2465 = vshrl.u32 %v2464, 7
          %v2466 = vsub.s32 0, %v2465
          %v2467 = vrot.slane %v2400, %v2466
          %v2469 = vadd.f32 %v2459, %v2467
          %v2470 = vadd.f32 %v2460, %v2467
          %v2471 = vadd.f32 %v2461, %v2467
          %v2472 = vadd.f32 %v2462, %v2467
          %2473 = vst.msk [vmem:[#allocation6] sm:$0xff] %vm736, %v2469
          %2474 = vst.msk [vmem:[#allocation6 + $0x8] sm:$0xff] %vm736, %v2470
          %2475 = vst.msk [vmem:[#allocation6 + $0x10] sm:$0xff] %vm736, %v2471
          %2476 = vst.msk [vmem:[#allocation6 + $0x18] sm:$0xff] %vm736, %v2472
        $region92: #{tpu_custom_call.1} parent=79 // pred_fallthru
          _
        // Predicated region
        $region93: #{tpu_custom_call.1} parent=79 // pred_check
          %p2477 = pneg %p440
        $region94: #{tpu_custom_call.1} parent=79 // pred_check_branch
          %2479 = sbr.rel (%p2477) target = $region96
        $region95: #{tpu_custom_call.1} parent=79 // pred_region
          %s2480 = smul.u32 2, %s34
          %s2482 = ssub.s32 512, 512
          %2483 = vsyncadd [#allocation5], %s2482
          %s2484 = smul.addr %s2480, 2
          %s2485 = smul.addr %s2484, 128
          %s2486 = scalar_lea.hbm %s15, %s2485
          %s2487 = sshll.u32 [#allocation6], 4
          %s2488 = int_to_ptr.vmem [resolvable:$true] %s2487
          %2493 = dma.vmem_to_hbm [thread:$0]  %s2488, 512, %s2486, [#allocation5], 128, 128, 8
        $region96: #{tpu_custom_call.1} parent=79 // pred_fallthru
          _
        // Predicated region
        $region97: #{tpu_custom_call.1} parent=79 // pred_check
          %p2494 = pneg %p440
        $region98: #{tpu_custom_call.1} parent=79 // pred_check_branch
          %2496 = sbr.rel (%p2494) target = $region100
        $region99: #{tpu_custom_call.1} parent=79 // pred_region
          %2497 = dma.done [#allocation5], 512
        $region100: #{tpu_custom_call.1} parent=79 // pred_fallthru
          _
      $region80: #{tpu_custom_call.1} parent=5 // pred_fallthru
        _
      %p2498 = scmp.le.s32.totalorder 2, %s25
      // Predicated region
      $region101: #{tpu_custom_call.1} parent=5 // pred_check
        %p2499 = pneg %p2498
      $region102: #{tpu_custom_call.1} parent=5 // pred_check_branch
        %2501 = sbr.rel (%p2499) target = $region104
      $region103: #{tpu_custom_call.1} parent=5 // pred_region
        %s2502 = ssub.s32 %s25, 2
      $region104: #{tpu_custom_call.1} parent=5 // pred_fallthru
        _
    $region6: #{tpu_custom_call.1} parent=1 // loop_footer
      %s29 = sadd.s32 1, %s25
    $region7: #{tpu_custom_call.1} parent=1 // loop_footer_branch
      %24 = sbr.rel target = $region3
    $region8: #{tpu_custom_call.1} parent=1 // loop_exit
      _
    %2503 = vsyncpa [#allocation4], 1
    %s2504 = scalar_lea.sflag [#allocation4], 1
    %2505 = vsyncpa %s2504, 1
    %2506 = vsyncpa [#allocation5], 1
    %s2507 = scalar_lea.sflag [#allocation5], 1
    %2508 = vsyncpa %s2507, 1

</llo_original>
